<compile_context>
chip_gen: v7x
topology: tpu7x:2x2x1
jax: 0.10.0
libtpu: 0.0.40
codegen_flags: <defaults>
</compile_context>

<pallas_src>
import jax
import jax.numpy as jnp
from jax.experimental import pallas as pl
from jax.experimental.pallas import tpu as pltpu

HIDDEN_DIM = 256      # hidden_dim from the spec
MLP_N_LAYERS = 2      # this kernel implements the 2-layer case fixed by the spec
MLP_ACT = "relu"


def _act(h):
    a = MLP_ACT.lower()
    if a == "relu":
        return jnp.maximum(h, 0.0)
    if a == "gelu":
        return jax.nn.gelu(h)
    if a == "leakyrelu":
        return jnp.where(h > 0, h, 0.1 * h)
    if a == "sigmoid":
        return jax.nn.sigmoid(h)
    if a == "tanh":
        return jnp.tanh(h)
    return h


def _round_up(n, m):
    return ((n + m - 1) // m) * m


def _padded_bytes(shape, dtype):
    """VMEM footprint of a block: last dim padded to 128 lanes, second-to-last to the
    dtype's sublane packing (8 for 32-bit, 16 for 16-bit, 32 for 8-bit)."""
    itemsize = jnp.dtype(dtype).itemsize
    sub = {4: 8, 2: 16, 1: 32}.get(itemsize, 8)
    dims = list(shape)
    dims[-1] = _round_up(dims[-1], 128)
    if len(dims) >= 2:
        dims[-2] = _round_up(dims[-2], sub)
    n = 1
    for d in dims:
        n *= d
    return n * itemsize


# ----------------------------- kernels ---------------------------------------

def _make_vec_head_kernel(tile_b, chunk, cdt):
    """out_features == 1: fc0 on the MXU per sub-chunk; fc1 as VPU broadcast-multiply
    + XLU lane reduce; result written LANE-DENSE as a [1, tile_b] row."""
    cdt = jnp.dtype(cdt)

    def kernel(x_ref, w0_ref, b0_ref, w1_ref, b1_ref, o_ref):
        w0 = w0_ref[...]                              # [in_f, hid], resident
        b0 = b0_ref[...]                              # [1, hid] f32
        w1 = w1_ref[...].astype(jnp.float32)          # [1, hid]
        b1 = b1_ref[0]                                # SMEM scalar (f32)
        # Static sub-chunk loop: keeps the [chunk, hid] f32 working set small while
        # tile_b (DMA tile / grid-step amortization) stays large.
        row = 0
        while row < tile_b:
            c = min(chunk, tile_b - row)
            xc = x_ref[row:row + c, :]
            if xc.dtype != cdt:
                xc = xc.astype(cdt)                   # per-chunk cast (no HBM pass)
            h = jnp.dot(xc, w0, preferred_element_type=jnp.float32)
            h = _act(h + b0)                          # [c, hid] f32
            r = jnp.sum(h * w1, axis=-1) + b1         # [c] f32, fc1 on VPU/XLU
            o_ref[:, row:row + c] = r.reshape(1, c).astype(o_ref.dtype)
            row += c

    return kernel


def _make_mat_head_kernel(tile_b, chunk, cdt):
    """General out_features > 1: both layers on the MXU.
    Note: for 1 < out_f < 128 the (tile_b, out_f) output block is lane-sparse; a
    transposed (out_f, B) output layout would make the stores lane-dense as well."""
    cdt = jnp.dtype(cdt)

    def kernel(x_ref, w0_ref, b0_ref, w1_ref, b1_ref, o_ref):
        w0 = w0_ref[...]
        b0 = b0_ref[...]
        w1 = w1_ref[...]
        b1 = b1_ref[...]                              # [1, out_f] f32
        row = 0
        while row < tile_b:
            c = min(chunk, tile_b - row)
            xc = x_ref[row:row + c, :]
            if xc.dtype != cdt:
                xc = xc.astype(cdt)
            h = jnp.dot(xc, w0, preferred_element_type=jnp.float32)
            h = _act(h + b0)
            # Precision note: h is re-quantized to the weight dtype before fc1 (f32
            # accumulation kept); keep h/w1 in f32 here if extra accuracy is needed.
            o = jnp.dot(h.astype(w1.dtype), w1,
                        preferred_element_type=jnp.float32) + b1
            o_ref[row:row + c, :] = o.astype(o_ref.dtype)
            row += c

    return kernel


# ----------------------------- wrapper ----------------------------------------

def mlp_forward(x, w0, b0, w1, b1, *, tile_b=None, chunk_b=512, compute_dtype=None):
    """Fused 2-layer MLP forward (PyTorch nn.Linear parameter layout).

    x : [B, in_features]
    w0: [hidden, in_features],  b0: [hidden]
    w1: [out_features, hidden], b1: [out_features]
    Returns [B, out_features] in x.dtype.
    """
    B, in_f = x.shape
    hid, in_f2 = w0.shape
    out_f, hid2 = w1.shape
    assert in_f == in_f2 and hid == hid2
    assert b0.shape == (hid,) and b1.shape == (out_f,)

    out_dtype = x.dtype
    cdt = jnp.dtype(compute_dtype) if compute_dtype is not None else jnp.dtype(x.dtype)

    # ---- batch tile selection ------------------------------------------------
    grain = 128  # lane-dense out row + MXU alignment; also covers bf16's 16-sublane x
    if tile_b is None:
        tile_b = 4096                        # amortize ~0.35 us/step grid overhead
    tile_b = int(tile_b)
    if B > grain:
        # >= 2 grid steps so the "parallel" axis can shard across v7x's 2 TensorCores.
        tile_b = min(tile_b, _round_up(pl.cdiv(B, 2), grain))
    else:
        tile_b = min(tile_b, grain)
    tile_b = max(grain, _round_up(tile_b, grain))

    chunk = max(grain, min(int(chunk_b), tile_b))
    chunk = _round_up(chunk, grain)

    # ---- VMEM budget (lane/sublane-padded) and per-generation cap -------------
    try:
        vmem_phys = int(pltpu.get_tpu_info().vmem_capacity_bytes)
    except Exception:
        vmem_phys = 64 << 20                 # conservative (v7x) fallback
    vmem_cap = min(vmem_phys * 3 // 4, 96 << 20)   # <=48 MiB v7x, <=96 MiB v5e/v6e

    def budget(tb):
        bts = 2 * _padded_bytes((tb, in_f), x.dtype)              # x tile, dbl-buffered
        if out_f == 1:
            bts += 2 * _padded_bytes((1, tb), out_dtype)          # lane-dense out row
            bts += 2 * _padded_bytes((1, hid), cdt)               # w1 row
        else:
            bts += 2 * _padded_bytes((tb, out_f), out_dtype)
            bts += 2 * _padded_bytes((hid, out_f), cdt)
            bts += 2 * _padded_bytes((1, out_f), jnp.float32)
        bts += 2 * _padded_bytes((in_f, hid), cdt)                 # w0
        bts += 2 * _padded_bytes((1, hid), jnp.float32)            # b0
        # per-chunk compute intermediates (cast x, h, act, head temporaries)
        bts += _padded_bytes((chunk, in_f), cdt)
        bts += 4 * _padded_bytes((chunk, hid), jnp.float32)
        return bts

    while budget(tile_b) > vmem_cap and tile_b > grain:
        tile_b = max(grain, _round_up(tile_b // 2, grain))
    chunk = min(chunk, tile_b)
    vmem_bytes = int(min(vmem_cap, max(2 * budget(tile_b), 16 << 20)))

    n_tiles = pl.cdiv(B, tile_b)
    B_pad = n_tiles * tile_b

    # Ragged tail handled by boundary-block clipping on the cdiv grid; the only pad
    # needed is the tiny B < tile_b case (block rows must not exceed array rows).
    x_in = x
    if B < tile_b:
        x_in = jnp.pad(x, ((0, tile_b - B), (0, 0)))

    w0t = jnp.asarray(w0, cdt).T                              # [in_f, hid], loaded once
    b0r = jnp.asarray(b0, jnp.float32).reshape(1, hid)

    x_spec = pl.BlockSpec((tile_b, in_f), lambda i: (i, 0))   # streamed batch tile
    w0_spec = pl.BlockSpec((in_f, hid), lambda i: (0, 0))     # resident
    b0_spec = pl.BlockSpec((1, hid), lambda i: (0, 0))        # resident

    if out_f == 1:
        kernel = _make_vec_head_kernel(tile_b, chunk, cdt)
        w1_in = jnp.asarray(w1, cdt)                          # [1, hid] row layout
        b1_in = jnp.asarray(b1, jnp.float32).reshape(1)       # scalar -> SMEM
        w1_spec = pl.BlockSpec((1, hid), lambda i: (0, 0))
        b1_spec = pl.BlockSpec(memory_space=pltpu.MemorySpace.SMEM)
        out_shape = jax.ShapeDtypeStruct((1, B_pad), out_dtype)       # lane-dense
        out_spec = pl.BlockSpec((1, tile_b), lambda i: (0, i))
    else:
        kernel = _make_mat_head_kernel(tile_b, chunk, cdt)
        w1_in = jnp.asarray(w1, cdt).T                        # [hid, out_f]
        b1_in = jnp.asarray(b1, jnp.float32).reshape(1, out_f)
        w1_spec = pl.BlockSpec((hid, out_f), lambda i: (0, 0))
        b1_spec = pl.BlockSpec((1, out_f), lambda i: (0, 0))
        out_shape = jax.ShapeDtypeStruct((B_pad, out_f), out_dtype)
        out_spec = pl.BlockSpec((tile_b, out_f), lambda i: (i, 0))

    out = pl.pallas_call(
        kernel,
        out_shape=out_shape,
        grid_spec=pltpu.PrefetchScalarGridSpec(
            num_scalar_prefetch=0,
            grid=(n_tiles,),
            in_specs=[x_spec, w0_spec, b0_spec, w1_spec, b1_spec],
            out_specs=out_spec,
        ),
        compiler_params=pltpu.CompilerParams(
            dimension_semantics=("parallel",),   # batch tiles shard across TCs (v7x)
            vmem_limit_bytes=vmem_bytes,
        ),
    )(x_in, w0t, b0r, w1_in, b1_in)

    if out_f == 1:
        return out[0, :B].reshape(B, 1)          # back to (B, 1); tail rows dropped
    return out[:B] if B_pad != B else out


# ----------------------------- reference / init --------------------------------

def init_params(key, in_features, hidden_features, out_features, dtype=jnp.float32):
    """nn.Linear-style init, PyTorch layout (w: [out, in], b: [out])."""
    ks = jax.random.split(key, 4)
    lim0 = 1.0 / (in_features ** 0.5)
    lim1 = 1.0 / (hidden_features ** 0.5)
    w0 = jax.random.uniform(ks[0], (hidden_features, in_features), dtype, -lim0, lim0)
    b0 = jax.random.uniform(ks[1], (hidden_features,), dtype, -lim0, lim0)
    w1 = jax.random.uniform(ks[2], (out_features, hidden_features), dtype, -lim1, lim1)
    b1 = jax.random.uniform(ks[3], (out_features,), dtype, -lim1, lim1)
    return w0, b0, w1, b1


def mlp_reference(x, w0, b0, w1, b1):
    h = jnp.dot(x, w0.T, precision="highest") + b0
    h = _act(h)
    return jnp.dot(h, w1.T, precision="highest") + b1


if __name__ == "__main__":
    key = jax.random.PRNGKey(0)
    kx, kp, kp2 = jax.random.split(key, 3)

    in_features, hidden_features, out_features = 32, HIDDEN_DIM, 1
    B = 384   # not a multiple of the auto tile (256) -> exercises the ragged tail

    x = jax.random.normal(kx, (B, in_features), jnp.float32)
    w0, b0, w1, b1 = init_params(kp, in_features, hidden_features, out_features)
    ref = mlp_reference(x, w0, b0, w1, b1)

    # 1) f32, lane-dense VPU head (out_features == 1), auto-tiled (2 tiles of 256).
    out = jax.block_until_ready(mlp_forward(x, w0, b0, w1, b1))
    assert out.shape == (B, out_features)
    assert jnp.allclose(out, ref, atol=1e-4, rtol=1e-4)

    # 2) bf16 compute (x stays f32 in HBM, per-chunk cast in-kernel), f32 accumulation.
    q = lambda a: a.astype(jnp.bfloat16).astype(jnp.float32)
    ref_bf16 = mlp_reference(q(x), q(w0), b0, q(w1), b1)
    out_bf16 = jax.block_until_ready(
        mlp_forward(x, w0, b0, w1, b1, compute_dtype=jnp.bfloat16))
    assert out_bf16.shape == (B, out_features)
    assert jnp.allclose(out_bf16.astype(jnp.float32), ref_bf16, atol=5e-3, rtol=5e-3)

    # 3) out_features > 1 path (second layer on the MXU), f32, explicit small tile.
    out_features2 = 8
    w0b, b0b, w1b, b1b = init_params(kp2, in_features, hidden_features, out_features2)
    ref2 = mlp_reference(x, w0b, b0b, w1b, b1b)
    out2 = jax.block_until_ready(mlp_forward(x, w0b, b0b, w1b, b1b, tile_b=128))
    assert out2.shape == (B, out_features2)
    assert jnp.allclose(out2, ref2, atol=1e-4, rtol=1e-4)

    print("KERNEL_OK")
</pallas_src>

<mosaic_0001>
module attributes {stable_mosaic.version = 11 : i64} {
  func.func @kernel(%arg0: i32, %arg1: memref<256x32xf32, #tpu.memory_space<vmem>>, %arg2: memref<32x256xf32, #tpu.memory_space<vmem>>, %arg3: memref<1x256xf32, #tpu.memory_space<vmem>>, %arg4: memref<1x256xf32, #tpu.memory_space<vmem>>, %arg5: memref<1xf32, #tpu.memory_space<smem>>, %arg6: memref<1x256xf32, #tpu.memory_space<vmem>>) attributes {dimension_semantics = [#tpu.dimension_semantics<parallel>], iteration_bounds = array<i64: 2>, scalar_prefetch = 0 : i64, scratch_operands = 0 : i64, tpu.core_type = #tpu.core_type<tc>, window_params = [{transform_indices = @transform_0, window_bounds = array<i64: 256, 32>}, {pipeline_mode = #tpu.pipeline_mode<synchronous>, transform_indices = @transform_1, window_bounds = array<i64: 32, 256>}, {pipeline_mode = #tpu.pipeline_mode<synchronous>, transform_indices = @transform_2, window_bounds = array<i64: 1, 256>}, {pipeline_mode = #tpu.pipeline_mode<synchronous>, transform_indices = @transform_3, window_bounds = array<i64: 1, 256>}, {transform_indices = @transform_4, window_bounds = array<i64: 1>}, {transform_indices = @transform_5, window_bounds = array<i64: 1, 256>}]} {
    %c0 = arith.constant 0 : index
    %c0_0 = arith.constant 0 : index
    %0 = vector.load %arg2[%c0, %c0_0] : memref<32x256xf32, #tpu.memory_space<vmem>>, vector<32x256xf32>
    %c0_1 = arith.constant 0 : index
    %c0_2 = arith.constant 0 : index
    %1 = vector.load %arg3[%c0_1, %c0_2] : memref<1x256xf32, #tpu.memory_space<vmem>>, vector<1x256xf32>
    %c0_3 = arith.constant 0 : index
    %c0_4 = arith.constant 0 : index
    %2 = vector.load %arg4[%c0_3, %c0_4] : memref<1x256xf32, #tpu.memory_space<vmem>>, vector<1x256xf32>
    %c0_5 = arith.constant 0 : index
    %3 = memref.load %arg5[%c0_5] : memref<1xf32, #tpu.memory_space<smem>>
    %c0_6 = arith.constant 0 : index
    %c0_7 = arith.constant 0 : index
    %4 = vector.load %arg1[%c0_6, %c0_7] : memref<256x32xf32, #tpu.memory_space<vmem>>, vector<256x32xf32>
    %cst = arith.constant dense<0.000000e+00> : vector<256x256xf32>
    %5 = tpu.matmul %4, %0, %cst {dimension_numbers = #tpu.dot_dimension_numbers<[1], [0], [0], [1], [0, 0, 1, 1], [], []>} : vector<256x32xf32>, vector<32x256xf32>, vector<256x256xf32> -> vector<256x256xf32>
    %6 = vector.broadcast %1 : vector<1x256xf32> to vector<256x256xf32>
    %7 = arith.addf %5, %6 : vector<256x256xf32>
    %cst_8 = arith.constant 0.000000e+00 : f32
    %8 = vector.broadcast %cst_8 : f32 to vector<256x256xf32>
    %9 = arith.maximumf %7, %8 : vector<256x256xf32>
    %10 = vector.broadcast %2 : vector<1x256xf32> to vector<256x256xf32>
    %11 = arith.mulf %9, %10 : vector<256x256xf32>
    %cst_9 = arith.constant dense<0.000000e+00> : vector<256xf32>
    %12 = vector.multi_reduction <add>, %11, %cst_9 [1] : vector<256x256xf32> to vector<256xf32>
    %13 = vector.broadcast %3 : f32 to vector<256xf32>
    %14 = arith.addf %12, %13 : vector<256xf32>
    %15 = vector.shape_cast %14 : vector<256xf32> to vector<1x256xf32>
    %c0_10 = arith.constant 0 : index
    %c0_11 = arith.constant 0 : index
    %16 = vector.load %arg6[%c0_10, %c0_11] : memref<1x256xf32, #tpu.memory_space<vmem>>, vector<1x256xf32>
    tpu.vector_store %arg6[%c0_10, %c0_11], %15 {strides = array<i32>} : memref<1x256xf32, #tpu.memory_space<vmem>>, vector<1x256xf32>,
    return
  }
  func.func @transform_0(%arg0: i32) -> (i32, i32) {
    %c0_i32 = arith.constant 0 : i32
    %c0_i32_0 = arith.constant 0 : i32
    return %arg0, %c0_i32 : i32, i32
  }
  func.func @transform_1(%arg0: i32) -> (i32, i32) {
    %c0_i32 = arith.constant 0 : i32
    %c0_i32_0 = arith.constant 0 : i32
    %c0_i32_1 = arith.constant 0 : i32
    return %c0_i32, %c0_i32_0 : i32, i32
  }
  func.func @transform_2(%arg0: i32) -> (i32, i32) {
    %c0_i32 = arith.constant 0 : i32
    %c0_i32_0 = arith.constant 0 : i32
    %c0_i32_1 = arith.constant 0 : i32
    return %c0_i32, %c0_i32_0 : i32, i32
  }
  func.func @transform_3(%arg0: i32) -> (i32, i32) {
    %c0_i32 = arith.constant 0 : i32
    %c0_i32_0 = arith.constant 0 : i32
    %c0_i32_1 = arith.constant 0 : i32
    return %c0_i32, %c0_i32_0 : i32, i32
  }
  func.func @transform_4(%arg0: i32) -> i32 {
    %c0_i32 = arith.constant 0 : i32
    %c0_i32_0 = arith.constant 0 : i32
    return %c0_i32 : i32
  }
  func.func @transform_5(%arg0: i32) -> (i32, i32) {
    %c0_i32 = arith.constant 0 : i32
    %c0_i32_0 = arith.constant 0 : i32
    return %c0_i32, %arg0 : i32, i32
  }
}

</mosaic_0001>

<llo_original>
// kernel: tpu_custom_call.1
$region0: #{tpu_custom_call.1}
  #allocation0 [shape = 'u32[]', space=smem, size = 0x4, offset = 0x4, fixed_abs, tag = 'smem constant byte address 0x4 - core index']
  #allocation1 [shape = 'u32[144,128]{1,0:T(1,128)}', space=vmem, size = 0x12000, scoped, tag = 'internal scratch']
  #allocation2 [shape = 'f32[1]{0:T(128)S(6)}', space=smem, size = 0x200, scoped, tag = 'scoped memory for tpu_custom_call.1']
  %s0 = inlined_call_operand.vmem [shape: f32[384,32], index: 0, kind: input, shape index: {}]
  %s1 = inlined_call_operand.vmem [shape: f32[32,256], index: 1, kind: input, shape index: {}]
  %s2 = inlined_call_operand.vmem [shape: f32[1,256], index: 2, kind: input, shape index: {}]
  %s3 = inlined_call_operand.vmem [shape: f32[1,256], index: 3, kind: input, shape index: {}]
  %s4 = inlined_call_operand.<no memory space> [shape: f32[1], index: 4, kind: input, shape index: {}]
  %s5 = inlined_call_operand.hbm [shape: f32[1,512], index: 5, kind: output, shape index: {}]
  %s6 = sld [smem:[#allocation0]]
  $region53: #{tpu_custom_call.1} parent=0
    _
  %s8 = ssub.s32 1, %s6
  %s9 = scalar_select 0, %s8, %s6
  %10 = sst [smem:[#allocation2]] %s4
  $region1: #{tpu_custom_call.1} parent=0
    #allocation3 [shape = 'u8[2048]{0}', space=vmem, size = 0x800, scoped, tag = 'output window, operand 0']
    #allocation4 [shape = 's32[2]{0}', space=sflag, size = 0x8, scoped, tag = 'scoped memory for tpu_custom_call.1']
    %11 = vsyncpa [#allocation4], 0
    %s12 = scalar_lea.sflag [#allocation4], 1
    %13 = vsyncpa %s12, 0
    loop: start=0, step=1, limit=4
    $region2: #{tpu_custom_call.1} parent=1 // loop_pre_header
      _
    $region3: #{tpu_custom_call.1} parent=1 // loop_header
      %s15 = sphi 0, %s19
      %p16 = scmp.ge.s32.totalorder %s15, 4
      %s25 = sphi 0, %s27
      %s28 = sphi 0, %s25
      %s29 = sphi 0, %s28
      %s45 = sphi 0, %s29
      %s49 = sphi 0, %s49
      %s51 = sphi 0, %s49
      %s52 = sphi 0, %s51
      %s66 = sphi 0, %s52
      %s70 = sphi 0, %s70
      %s72 = sphi 0, %s70
      %s73 = sphi 0, %s72
      %s87 = sphi 0, %s73
      %s91 = sphi 0, %s91
      %s93 = sphi 0, %s91
      %s94 = sphi 0, %s93
      %s108 = sphi 0, %s94
      %s112 = sphi 0, %s112
      %s114 = sphi 0, %s112
      %s115 = sphi 0, %s114
      %s129 = sphi 0, %s115
      %s135 = sphi 0, %s137
      %s138 = sphi 0, %s135
      %s139 = sphi 0, %s138
      %s155 = sphi 0, %s139
    $region4: #{tpu_custom_call.1} parent=1 // loop_header_branch
      %18 = sbr.rel (%p16) target = $region8
    $region5: #{tpu_custom_call.1} parent=1 // loop_body
      %s20 = ssub.s32 %s15, 1
      %s21 = ssub.s32 %s15, 2
      %s22 = sadd.s32 %s15, 1
      %s23 = ssub.s32 %s15, %s22
      %p24 = scmp.eq.s32.totalorder %s23, 0
      %s26 = sadd.s32 %s25, 1
      %s27 = scalar_select %p24, %s25, %s26
      %p30 = pneg %p24
      %p31 = scmp.eq.s32.totalorder %s15, 1
      %p32 = por %p30, %p31
      %p33 = scmp.ne.s32.totalorder %s25, %s28
      %p34 = scmp.eq.s32.totalorder %s15, 0
      %p35 = por %p33, %p34
      %p36 = scmp.ne.s32.totalorder %s25, %s28
      %p37 = scmp.eq.s32.totalorder %s20, 1
      %p38 = por %p36, %p37
      %p39 = scmp.ne.s32.totalorder %s28, %s29
      %p40 = scmp.eq.s32.totalorder %s20, 0
      %p41 = por %p39, %p40
      %p42 = scmp.ne.s32.totalorder %s28, %s29
      %p43 = scmp.eq.s32.totalorder %s21, 1
      %p44 = por %p42, %p43
      %p46 = scmp.ne.s32.totalorder %s29, %s45
      %p47 = scmp.eq.s32.totalorder %s21, 0
      %p48 = por %p46, %p47
      %s50 = sadd.s32 %s49, 1
      %p53 = scmp.eq.s32.totalorder %s15, 1
      %p54 = scmp.ne.s32.totalorder %s49, %s51
      %p55 = scmp.eq.s32.totalorder %s15, 0
      %p56 = por %p54, %p55
      %p57 = scmp.ne.s32.totalorder %s49, %s51
      %p58 = scmp.eq.s32.totalorder %s20, 1
      %p59 = por %p57, %p58
      %p60 = scmp.ne.s32.totalorder %s51, %s52
      %p61 = scmp.eq.s32.totalorder %s20, 0
      %p62 = por %p60, %p61
      %p63 = scmp.ne.s32.totalorder %s51, %s52
      %p64 = scmp.eq.s32.totalorder %s21, 1
      %p65 = por %p63, %p64
      %p67 = scmp.ne.s32.totalorder %s52, %s66
      %p68 = scmp.eq.s32.totalorder %s21, 0
      %p69 = por %p67, %p68
      %s71 = sadd.s32 %s70, 1
      %p74 = scmp.eq.s32.totalorder %s15, 1
      %p75 = scmp.ne.s32.totalorder %s70, %s72
      %p76 = scmp.eq.s32.totalorder %s15, 0
      %p77 = por %p75, %p76
      %p78 = scmp.ne.s32.totalorder %s70, %s72
      %p79 = scmp.eq.s32.totalorder %s20, 1
      %p80 = por %p78, %p79
      %p81 = scmp.ne.s32.totalorder %s72, %s73
      %p82 = scmp.eq.s32.totalorder %s20, 0
      %p83 = por %p81, %p82
      %p84 = scmp.ne.s32.totalorder %s72, %s73
      %p85 = scmp.eq.s32.totalorder %s21, 1
      %p86 = por %p84, %p85
      %p88 = scmp.ne.s32.totalorder %s73, %s87
      %p89 = scmp.eq.s32.totalorder %s21, 0
      %p90 = por %p88, %p89
      %s92 = sadd.s32 %s91, 1
      %p95 = scmp.eq.s32.totalorder %s15, 1
      %p96 = scmp.ne.s32.totalorder %s91, %s93
      %p97 = scmp.eq.s32.totalorder %s15, 0
      %p98 = por %p96, %p97
      %p99 = scmp.ne.s32.totalorder %s91, %s93
      %p100 = scmp.eq.s32.totalorder %s20, 1
      %p101 = por %p99, %p100
      %p102 = scmp.ne.s32.totalorder %s93, %s94
      %p103 = scmp.eq.s32.totalorder %s20, 0
      %p104 = por %p102, %p103
      %p105 = scmp.ne.s32.totalorder %s93, %s94
      %p106 = scmp.eq.s32.totalorder %s21, 1
      %p107 = por %p105, %p106
      %p109 = scmp.ne.s32.totalorder %s94, %s108
      %p110 = scmp.eq.s32.totalorder %s21, 0
      %p111 = por %p109, %p110
      %s113 = sadd.s32 %s112, 1
      %p116 = scmp.eq.s32.totalorder %s15, 1
      %p117 = scmp.ne.s32.totalorder %s112, %s114
      %p118 = scmp.eq.s32.totalorder %s15, 0
      %p119 = por %p117, %p118
      %p120 = scmp.ne.s32.totalorder %s112, %s114
      %p121 = scmp.eq.s32.totalorder %s20, 1
      %p122 = por %p120, %p121
      %p123 = scmp.ne.s32.totalorder %s114, %s115
      %p124 = scmp.eq.s32.totalorder %s20, 0
      %p125 = por %p123, %p124
      %p126 = scmp.ne.s32.totalorder %s114, %s115
      %p127 = scmp.eq.s32.totalorder %s21, 1
      %p128 = por %p126, %p127
      %p130 = scmp.ne.s32.totalorder %s115, %s129
      %p131 = scmp.eq.s32.totalorder %s21, 0
      %p132 = por %p130, %p131
      %s133 = ssub.s32 %s15, %s22
      %p134 = scmp.eq.s32.totalorder %s133, 0
      %s136 = sadd.s32 %s135, 1
      %s137 = scalar_select %p134, %s135, %s136
      %p140 = pneg %p134
      %p141 = scmp.eq.s32.totalorder %s15, 1
      %p142 = por %p140, %p141
      %p143 = scmp.ne.s32.totalorder %s135, %s138
      %p144 = scmp.eq.s32.totalorder %s15, 0
      %p145 = por %p143, %p144
      %p146 = scmp.ne.s32.totalorder %s135, %s138
      %p147 = scmp.eq.s32.totalorder %s20, 1
      %p148 = por %p146, %p147
      %p149 = scmp.ne.s32.totalorder %s138, %s139
      %p150 = scmp.eq.s32.totalorder %s20, 0
      %p151 = por %p149, %p150
      %p152 = scmp.ne.s32.totalorder %s138, %s139
      %p153 = scmp.eq.s32.totalorder %s21, 1
      %p154 = por %p152, %p153
      %p156 = scmp.ne.s32.totalorder %s139, %s155
      %p157 = scmp.eq.s32.totalorder %s21, 0
      %p158 = por %p156, %p157
      %p159 = scmp.le.s32.totalorder 1, %s15
      %p160 = scmp.lt.s32.totalorder %s15, 3
      %p161 = pnand %p159, %p160
      %p162 = pneg %p161
      // Predicated region
      $region9: #{tpu_custom_call.1} parent=5 // pred_check
        _
      $region10: #{tpu_custom_call.1} parent=5 // pred_check_branch
        %164 = sbr.rel (%p161) target = $region12
      $region11: #{tpu_custom_call.1} parent=5 // pred_region
        %s165 = ssub.s32 %s15, 1
        // Predicated region
        $region13: #{tpu_custom_call.1} parent=11 // pred_check
          %p166 = pneg %p62
        $region14: #{tpu_custom_call.1} parent=11 // pred_check_branch
          %168 = sbr.rel (%p166) target = $region16
        $region15: #{tpu_custom_call.1} parent=11 // pred_region
          _
        $region16: #{tpu_custom_call.1} parent=11 // pred_fallthru
          _
        // Predicated region
        $region17: #{tpu_custom_call.1} parent=11 // pred_check
          %p169 = pneg %p83
        $region18: #{tpu_custom_call.1} parent=11 // pred_check_branch
          %171 = sbr.rel (%p169) target = $region20
        $region19: #{tpu_custom_call.1} parent=11 // pred_region
          _
        $region20: #{tpu_custom_call.1} parent=11 // pred_fallthru
          _
        // Predicated region
        $region21: #{tpu_custom_call.1} parent=11 // pred_check
          %p172 = pneg %p104
        $region22: #{tpu_custom_call.1} parent=11 // pred_check_branch
          %174 = sbr.rel (%p172) target = $region24
        $region23: #{tpu_custom_call.1} parent=11 // pred_region
          _
        $region24: #{tpu_custom_call.1} parent=11 // pred_fallthru
          _
        // Predicated region
        $region25: #{tpu_custom_call.1} parent=11 // pred_check
          %p175 = pneg %p125
        $region26: #{tpu_custom_call.1} parent=11 // pred_check_branch
          %177 = sbr.rel (%p175) target = $region28
        $region27: #{tpu_custom_call.1} parent=11 // pred_region
          _
        $region28: #{tpu_custom_call.1} parent=11 // pred_fallthru
          _
      $region12: #{tpu_custom_call.1} parent=5 // pred_fallthru
        _
      %p178 = scmp.lt.s32.totalorder %s15, 2
      // Predicated region
      $region29: #{tpu_custom_call.1} parent=5 // pred_check
        %p179 = pneg %p178
      $region30: #{tpu_custom_call.1} parent=5 // pred_check_branch
        %181 = sbr.rel (%p179) target = $region32
      $region31: #{tpu_custom_call.1} parent=5 // pred_region
        // Predicated region
        $region33: #{tpu_custom_call.1} parent=31 // pred_check
          %p182 = pneg %p35
        $region34: #{tpu_custom_call.1} parent=31 // pred_check_branch
          %184 = sbr.rel (%p182) target = $region36
        $region35: #{tpu_custom_call.1} parent=31 // pred_region
          %s185 = smul.u32 32, %s15
          %s186 = ssub.s32 48, %s185
          %p187 = scmp.lt.s32.totalorder %s186, 32
          %s188 = scalar_select %p187, %s186, 32
          %s189 = smul.u32 128, %s188
          %p190 = scmp.lt.s32.totalorder %s185, 47
          %s191 = scalar_select %p190, %s185, 47
          %s192 = smul.addr %s191, 8
          %s193 = scalar_lea.vmem %s0, %s192
          %s194 = smul.u32 32, %s15
          %s195 = ssub.s32 48, %s194
          %p196 = scmp.lt.s32.totalorder %s195, 32
          %s197 = scalar_select %p196, %s195, 32
          %s198 = smul.u32 128, %s197
        $region36: #{tpu_custom_call.1} parent=31 // pred_fallthru
          _
      $region32: #{tpu_custom_call.1} parent=5 // pred_fallthru
        _
      %p199 = scmp.le.s32.totalorder 1, %s15
      %p200 = scmp.lt.s32.totalorder %s15, 3
      %p201 = pnand %p199, %p200
      %p202 = pneg %p201
      // Predicated region
      $region37: #{tpu_custom_call.1} parent=5 // pred_check
        _
      $region38: #{tpu_custom_call.1} parent=5 // pred_check_branch
        %204 = sbr.rel (%p201) target = $region40
      $region39: #{tpu_custom_call.1} parent=5 // pred_region
        %s205 = ssub.s32 %s15, 1
        %s206 = smul.u32 32, %s20
        %s207 = ssub.s32 48, %s206
        %p208 = scmp.lt.s32.totalorder %s207, 32
        %s209 = scalar_select %p208, %s207, 32
        %s210 = smul.u32 128, %s209
        %p211 = scmp.lt.s32.totalorder %s206, 47
        %s212 = scalar_select %p211, %s206, 47
        %s213 = smul.addr %s212, 8
        %s214 = scalar_lea.vmem %s0, %s213
        %p215 = pneg %p41
        %p216 = pneg %p38
        %p217 = pneg %p62
        %p218 = pneg %p59
        %p219 = pneg %p83
        %p220 = pneg %p80
        %p221 = pneg %p104
        %p222 = pneg %p101
        %p223 = pneg %p125
        %p224 = pneg %p122
        %p225 = pneg %p151
        %p226 = pneg %p148
        %s227 = sand.u32 %s138, 1
        %s228 = scalar_lea.sflag [#allocation4], %s227
        %s229 = sand.u32 %s138, 1
        %s230 = smul.addr %s229, 2
        %s231 = scalar_lea.vmem [#allocation3], %s230
        %s232 = smul.u32 32, %s20
        %s233 = ssub.s32 48, %s232
        %p234 = scmp.lt.s32.totalorder %s233, 32
        %s235 = scalar_select %p234, %s233, 32
        %s236 = smul.u32 128, %s235
        %p237 = scmp.lt.s32.totalorder %s232, 47
        %s238 = scalar_select %p237, %s232, 47
        %s239 = smul.addr %s238, 8
        %s240 = scalar_lea.vmem %s0, %s239
        %s241 = smul.u32 32, %s20
        %s242 = ssub.s32 48, %s241
        %p243 = scmp.lt.s32.totalorder %s242, 32
        %s244 = scalar_select %p243, %s242, 32
        %s245 = smul.u32 128, %s244
        %s246 = smul.u32 2, %s20
        %v247 = vld [vmem:[%s1] sm:$0xff]
        %v248 = vld [vmem:[%s1 + $0x8] sm:$0xff]
        %v249 = vld [vmem:[%s1 + $0x10] sm:$0xff]
        %v250 = vld [vmem:[%s1 + $0x18] sm:$0xff]
        %v251 = vld [vmem:[%s1 + $0x20] sm:$0xff]
        %v252 = vld [vmem:[%s1 + $0x28] sm:$0xff]
        %v253 = vld [vmem:[%s1 + $0x30] sm:$0xff]
        %v254 = vld [vmem:[%s1 + $0x38] sm:$0xff]
        %v255 = vld [vmem:[%s2] sm:$0x3]
        %v256 = vld [vmem:[%s3] sm:$0x3]
        %s257 = sld [smem:[#allocation2]]
        %v258 = vld [vmem:[%s240] sm:$0xff]
        %v259 = vld [vmem:[%s240 + $0x8] sm:$0xff]
        %v260 = vld [vmem:[%s240 + $0x10] sm:$0xff]
        %v261 = vld [vmem:[%s240 + $0x18] sm:$0xff]
        %v262 = vld [vmem:[%s240 + $0x20] sm:$0xff]
        %v263 = vld [vmem:[%s240 + $0x28] sm:$0xff]
        %v264 = vld [vmem:[%s240 + $0x30] sm:$0xff]
        %v265 = vld [vmem:[%s240 + $0x38] sm:$0xff]
        %v266 = vld [vmem:[%s240 + $0x40] sm:$0xff]
        %v267 = vld [vmem:[%s240 + $0x48] sm:$0xff]
        %v268 = vld [vmem:[%s240 + $0x50] sm:$0xff]
        %v269 = vld [vmem:[%s240 + $0x58] sm:$0xff]
        %v270 = vld [vmem:[%s240 + $0x60] sm:$0xff]
        %v271 = vld [vmem:[%s240 + $0x68] sm:$0xff]
        %v272 = vld [vmem:[%s240 + $0x70] sm:$0xff]
        %v273 = vld [vmem:[%s240 + $0x78] sm:$0xff]
        %v274 = vld [vmem:[%s240 + $0x80] sm:$0xff]
        %v275 = vld [vmem:[%s240 + $0x88] sm:$0xff]
        %v276 = vld [vmem:[%s240 + $0x90] sm:$0xff]
        %v277 = vld [vmem:[%s240 + $0x98] sm:$0xff]
        %v278 = vld [vmem:[%s240 + $0xa0] sm:$0xff]
        %v279 = vld [vmem:[%s240 + $0xa8] sm:$0xff]
        %v280 = vld [vmem:[%s240 + $0xb0] sm:$0xff]
        %v281 = vld [vmem:[%s240 + $0xb8] sm:$0xff]
        %v282 = vld [vmem:[%s240 + $0xc0] sm:$0xff]
        %v283 = vld [vmem:[%s240 + $0xc8] sm:$0xff]
        %v284 = vld [vmem:[%s240 + $0xd0] sm:$0xff]
        %v285 = vld [vmem:[%s240 + $0xd8] sm:$0xff]
        %v286 = vld [vmem:[%s240 + $0xe0] sm:$0xff]
        %v287 = vld [vmem:[%s240 + $0xe8] sm:$0xff]
        %v288 = vld [vmem:[%s240 + $0xf0] sm:$0xff]
        %v289 = vld [vmem:[%s240 + $0xf8] sm:$0xff]
        %v291 = vlaneseq
        %v292 = vshrl.u32 %v291, 7
        %v293 = vsub.s32 0, %v292
        %v294 = vrot.slane %v255, %v293
        %v295 = vlaneseq
        %v296 = vshrl.u32 %v295, 7
        %v297 = vsub.s32 1, %v296
        %v298 = vrot.slane %v255, %v297
        %vm301 = vcmask 261120
        %v303 = vsel %vm301, %v258, 0
        %v306 = vsel %vm301, %v259, 0
        %v309 = vsel %vm301, %v260, 0
        %v312 = vsel %vm301, %v261, 0
        %v315 = vsel %vm301, %v262, 0
        %v318 = vsel %vm301, %v263, 0
        %v321 = vsel %vm301, %v264, 0
        %v324 = vsel %vm301, %v265, 0
        %v327 = vsel %vm301, %v266, 0
        %v330 = vsel %vm301, %v267, 0
        %v333 = vsel %vm301, %v268, 0
        %v336 = vsel %vm301, %v269, 0
        %v339 = vsel %vm301, %v270, 0
        %v342 = vsel %vm301, %v271, 0
        %v345 = vsel %vm301, %v272, 0
        %v348 = vsel %vm301, %v273, 0
        %v351 = vsel %vm301, %v274, 0
        %v354 = vsel %vm301, %v275, 0
        %v357 = vsel %vm301, %v276, 0
        %v360 = vsel %vm301, %v277, 0
        %v363 = vsel %vm301, %v278, 0
        %v366 = vsel %vm301, %v279, 0
        %v369 = vsel %vm301, %v280, 0
        %v372 = vsel %vm301, %v281, 0
        %v375 = vsel %vm301, %v282, 0
        %v378 = vsel %vm301, %v283, 0
        %v381 = vsel %vm301, %v284, 0
        %v384 = vsel %vm301, %v285, 0
        %v387 = vsel %vm301, %v286, 0
        %v390 = vsel %vm301, %v287, 0
        %v393 = vsel %vm301, %v288, 0
        %v396 = vsel %vm301, %v289, 0
        %398 = vmatprep.subr.mxu0 %v248
        %399 = vmatpush1.msra.mxu0 %v247
        %400 = vmatprep.subr.mxu0 %v250
        %401 = vmatpush1.msra.mxu0 %v249
        %402 = vmatprep.subr.mxu0 %v252
        %403 = vmatpush1.msra.mxu0 %v251
        %404 = vmatprep.subr.mxu0 %v254
        %405 = vmatpush1.msra.mxu0 %v253
        %406 = vmatprep.subr.mxu0 0.0
        %407 = vmatpush1.msra.mxu0 0.0
        %408 = vmatprep.subr.mxu0 0.0
        %409 = vmatpush1.msra.mxu0 0.0
        %410 = vmatprep.subr.mxu0 0.0
        %411 = vmatpush1.msra.mxu0 0.0
        %412 = vmatprep.subr.mxu0 0.0
        %413 = vmatpush1.msra.mxu0 0.0
        %414 = vmatprep.subr.mxu0 0.0
        %415 = vmatpush1.msra.mxu0 0.0
        %416 = vmatprep.subr.mxu0 0.0
        %417 = vmatpush1.msra.mxu0 0.0
        %418 = vmatprep.subr.mxu0 0.0
        %419 = vmatpush1.msra.mxu0 0.0
        %420 = vmatprep.subr.mxu0 0.0
        %421 = vmatpush1.msra.mxu0 0.0
        %422 = vmatprep.subr.mxu0 0.0
        %423 = vmatpush1.msra.mxu0 0.0
        %424 = vmatprep.subr.mxu0 0.0
        %425 = vmatpush1.msra.mxu0 0.0
        %426 = vmatprep.subr.mxu0 0.0
        %427 = vmatpush1.msra.mxu0 0.0
        %428 = vmatprep.subr.mxu0 0.0
        %429 = vmatpush1.msra.mxu0 0.0
        %430 = vmatprep.subr.mxu0 0.0
        %431 = vmatpush1.msra.mxu0 0.0
        %432 = vmatprep.subr.mxu0 0.0
        %433 = vmatpush1.msra.mxu0 0.0
        %434 = vmatprep.subr.mxu0 0.0
        %435 = vmatpush1.msra.mxu0 0.0
        %436 = vmatprep.subr.mxu0 0.0
        %437 = vmatpush1.msra.mxu0 0.0
        %438 = vmatprep.subr.mxu0 0.0
        %439 = vmatpush1.msra.mxu0 0.0
        %440 = vmatprep.subr.mxu0 0.0
        %441 = vmatpush1.msra.mxu0 0.0
        %442 = vmatprep.subr.mxu0 0.0
        %443 = vmatpush1.msra.mxu0 0.0
        %444 = vmatprep.subr.mxu0 0.0
        %445 = vmatpush1.msra.mxu0 0.0
        %446 = vmatprep.subr.mxu0 0.0
        %447 = vmatpush1.msra.mxu0 0.0
        %448 = vmatprep.subr.mxu0 0.0
        %449 = vmatpush1.msra.mxu0 0.0
        %450 = vmatprep.subr.mxu0 0.0
        %451 = vmatpush1.msra.mxu0 0.0
        %452 = vmatprep.subr.mxu0 0.0
        %453 = vmatpush1.msra.mxu0 0.0
        %454 = vmatprep.subr.mxu0 0.0
        %455 = vmatpush1.msra.mxu0 0.0
        %456 = vmatprep.subr.mxu0 0.0
        %457 = vmatpush1.msra.mxu0 0.0
        %458 = vmatprep.subr.mxu0 0.0
        %459 = vmatpush1.msra.mxu0 0.0
        %460 = vmatprep.subr.mxu0 0.0
        %461 = vmatpush1.msra.mxu0 0.0
        %462 = vmatprep.mubr.f32.mxu0 0.0
        %463 = vmatmul.mubr.f32.gmra.mrb[0].mxu0 %v303
        %v464 = vpop.f32.mrb[0].mxu0
        %v465 = vadd.f32 %v294, %v464
        %v466 = vpop.f32.mrb[0].mxu0
        %v467 = vadd.f32 %v298, %v466
        %468 = vmatprep.mubr.f32.mxu0 0.0
        %469 = vmatmul.mubr.f32.gmra.mrb[0].mxu0 %v306
        %v470 = vpop.f32.mrb[0].mxu0
        %v471 = vadd.f32 %v294, %v470
        %v472 = vpop.f32.mrb[0].mxu0
        %v473 = vadd.f32 %v298, %v472
        %474 = vmatprep.mubr.f32.mxu0 0.0
        %475 = vmatmul.mubr.f32.gmra.mrb[0].mxu0 %v309
        %v476 = vpop.f32.mrb[0].mxu0
        %v477 = vadd.f32 %v294, %v476
        %v478 = vpop.f32.mrb[0].mxu0
        %v479 = vadd.f32 %v298, %v478
        %480 = vmatprep.mubr.f32.mxu0 0.0
        %481 = vmatmul.mubr.f32.gmra.mrb[0].mxu0 %v312
        %v482 = vpop.f32.mrb[0].mxu0
        %v483 = vadd.f32 %v294, %v482
        %v484 = vpop.f32.mrb[0].mxu0
        %v485 = vadd.f32 %v298, %v484
        %486 = vmatprep.mubr.f32.mxu0 0.0
        %487 = vmatmul.mubr.f32.gmra.mrb[0].mxu0 %v315
        %v488 = vpop.f32.mrb[0].mxu0
        %v489 = vadd.f32 %v294, %v488
        %v490 = vpop.f32.mrb[0].mxu0
        %v491 = vadd.f32 %v298, %v490
        %492 = vmatprep.mubr.f32.mxu0 0.0
        %493 = vmatmul.mubr.f32.gmra.mrb[0].mxu0 %v318
        %v494 = vpop.f32.mrb[0].mxu0
        %v495 = vadd.f32 %v294, %v494
        %v496 = vpop.f32.mrb[0].mxu0
        %v497 = vadd.f32 %v298, %v496
        %498 = vmatprep.mubr.f32.mxu0 0.0
        %499 = vmatmul.mubr.f32.gmra.mrb[0].mxu0 %v321
        %v500 = vpop.f32.mrb[0].mxu0
        %v501 = vadd.f32 %v294, %v500
        %v502 = vpop.f32.mrb[0].mxu0
        %v503 = vadd.f32 %v298, %v502
        %504 = vmatprep.mubr.f32.mxu0 0.0
        %505 = vmatmul.mubr.f32.gmra.mrb[0].mxu0 %v324
        %v506 = vpop.f32.mrb[0].mxu0
        %v507 = vadd.f32 %v294, %v506
        %v508 = vpop.f32.mrb[0].mxu0
        %v509 = vadd.f32 %v298, %v508
        %510 = vmatprep.mubr.f32.mxu0 0.0
        %511 = vmatmul.mubr.f32.gmra.mrb[0].mxu0 %v327
        %v512 = vpop.f32.mrb[0].mxu0
        %v513 = vadd.f32 %v294, %v512
        %v514 = vpop.f32.mrb[0].mxu0
        %v515 = vadd.f32 %v298, %v514
        %516 = vmatprep.mubr.f32.mxu0 0.0
        %517 = vmatmul.mubr.f32.gmra.mrb[0].mxu0 %v330
        %v518 = vpop.f32.mrb[0].mxu0
        %v519 = vadd.f32 %v294, %v518
        %v520 = vpop.f32.mrb[0].mxu0
        %v521 = vadd.f32 %v298, %v520
        %522 = vmatprep.mubr.f32.mxu0 0.0
        %523 = vmatmul.mubr.f32.gmra.mrb[0].mxu0 %v333
        %v524 = vpop.f32.mrb[0].mxu0
        %v525 = vadd.f32 %v294, %v524
        %v526 = vpop.f32.mrb[0].mxu0
        %v527 = vadd.f32 %v298, %v526
        %528 = vmatprep.mubr.f32.mxu0 0.0
        %529 = vmatmul.mubr.f32.gmra.mrb[0].mxu0 %v336
        %v530 = vpop.f32.mrb[0].mxu0
        %v531 = vadd.f32 %v294, %v530
        %v532 = vpop.f32.mrb[0].mxu0
        %v533 = vadd.f32 %v298, %v532
        %534 = vmatprep.mubr.f32.mxu0 0.0
        %535 = vmatmul.mubr.f32.gmra.mrb[0].mxu0 %v339
        %v536 = vpop.f32.mrb[0].mxu0
        %v537 = vadd.f32 %v294, %v536
        %v538 = vpop.f32.mrb[0].mxu0
        %v539 = vadd.f32 %v298, %v538
        %540 = vmatprep.mubr.f32.mxu0 0.0
        %541 = vmatmul.mubr.f32.gmra.mrb[0].mxu0 %v342
        %v542 = vpop.f32.mrb[0].mxu0
        %v543 = vadd.f32 %v294, %v542
        %v544 = vpop.f32.mrb[0].mxu0
        %v545 = vadd.f32 %v298, %v544
        %546 = vmatprep.mubr.f32.mxu0 0.0
        %547 = vmatmul.mubr.f32.gmra.mrb[0].mxu0 %v345
        %v548 = vpop.f32.mrb[0].mxu0
        %v549 = vadd.f32 %v294, %v548
        %v550 = vpop.f32.mrb[0].mxu0
        %v551 = vadd.f32 %v298, %v550
        %552 = vmatprep.mubr.f32.mxu0 0.0
        %553 = vmatmul.mubr.f32.gmra.mrb[0].mxu0 %v348
        %v554 = vpop.f32.mrb[0].mxu0
        %v555 = vadd.f32 %v294, %v554
        %v556 = vpop.f32.mrb[0].mxu0
        %v557 = vadd.f32 %v298, %v556
        %558 = vmatprep.mubr.f32.mxu0 0.0
        %559 = vmatmul.mubr.f32.gmra.mrb[0].mxu0 %v351
        %v560 = vpop.f32.mrb[0].mxu0
        %v561 = vadd.f32 %v294, %v560
        %v562 = vpop.f32.mrb[0].mxu0
        %v563 = vadd.f32 %v298, %v562
        %564 = vmatprep.mubr.f32.mxu0 0.0
        %565 = vmatmul.mubr.f32.gmra.mrb[0].mxu0 %v354
        %v566 = vpop.f32.mrb[0].mxu0
        %v567 = vadd.f32 %v294, %v566
        %v568 = vpop.f32.mrb[0].mxu0
        %v569 = vadd.f32 %v298, %v568
        %570 = vmatprep.mubr.f32.mxu0 0.0
        %571 = vmatmul.mubr.f32.gmra.mrb[0].mxu0 %v357
        %v572 = vpop.f32.mrb[0].mxu0
        %v573 = vadd.f32 %v294, %v572
        %v574 = vpop.f32.mrb[0].mxu0
        %v575 = vadd.f32 %v298, %v574
        %576 = vmatprep.mubr.f32.mxu0 0.0
        %577 = vmatmul.mubr.f32.gmra.mrb[0].mxu0 %v360
        %v578 = vpop.f32.mrb[0].mxu0
        %v579 = vadd.f32 %v294, %v578
        %v580 = vpop.f32.mrb[0].mxu0
        %v581 = vadd.f32 %v298, %v580
        %582 = vmatprep.mubr.f32.mxu0 0.0
        %583 = vmatmul.mubr.f32.gmra.mrb[0].mxu0 %v363
        %v584 = vpop.f32.mrb[0].mxu0
        %v585 = vadd.f32 %v294, %v584
        %v586 = vpop.f32.mrb[0].mxu0
        %v587 = vadd.f32 %v298, %v586
        %588 = vmatprep.mubr.f32.mxu0 0.0
        %589 = vmatmul.mubr.f32.gmra.mrb[0].mxu0 %v366
        %v590 = vpop.f32.mrb[0].mxu0
        %v591 = vadd.f32 %v294, %v590
        %v592 = vpop.f32.mrb[0].mxu0
        %v593 = vadd.f32 %v298, %v592
        %594 = vmatprep.mubr.f32.mxu0 0.0
        %595 = vmatmul.mubr.f32.gmra.mrb[0].mxu0 %v369
        %v596 = vpop.f32.mrb[0].mxu0
        %v597 = vadd.f32 %v294, %v596
        %v598 = vpop.f32.mrb[0].mxu0
        %v599 = vadd.f32 %v298, %v598
        %600 = vmatprep.mubr.f32.mxu0 0.0
        %601 = vmatmul.mubr.f32.gmra.mrb[0].mxu0 %v372
        %v602 = vpop.f32.mrb[0].mxu0
        %v603 = vadd.f32 %v294, %v602
        %v604 = vpop.f32.mrb[0].mxu0
        %v605 = vadd.f32 %v298, %v604
        %606 = vmatprep.mubr.f32.mxu0 0.0
        %607 = vmatmul.mubr.f32.gmra.mrb[0].mxu0 %v375
        %v608 = vpop.f32.mrb[0].mxu0
        %v609 = vadd.f32 %v294, %v608
        %v610 = vpop.f32.mrb[0].mxu0
        %v611 = vadd.f32 %v298, %v610
        %612 = vmatprep.mubr.f32.mxu0 0.0
        %613 = vmatmul.mubr.f32.gmra.mrb[0].mxu0 %v378
        %v614 = vpop.f32.mrb[0].mxu0
        %v615 = vadd.f32 %v294, %v614
        %v616 = vpop.f32.mrb[0].mxu0
        %v617 = vadd.f32 %v298, %v616
        %618 = vmatprep.mubr.f32.mxu0 0.0
        %619 = vmatmul.mubr.f32.gmra.mrb[0].mxu0 %v381
        %v620 = vpop.f32.mrb[0].mxu0
        %v621 = vadd.f32 %v294, %v620
        %v622 = vpop.f32.mrb[0].mxu0
        %v623 = vadd.f32 %v298, %v622
        %624 = vmatprep.mubr.f32.mxu0 0.0
        %625 = vmatmul.mubr.f32.gmra.mrb[0].mxu0 %v384
        %v626 = vpop.f32.mrb[0].mxu0
        %v627 = vadd.f32 %v294, %v626
        %v628 = vpop.f32.mrb[0].mxu0
        %v629 = vadd.f32 %v298, %v628
        %630 = vmatprep.mubr.f32.mxu0 0.0
        %631 = vmatmul.mubr.f32.gmra.mrb[0].mxu0 %v387
        %v632 = vpop.f32.mrb[0].mxu0
        %v633 = vadd.f32 %v294, %v632
        %v634 = vpop.f32.mrb[0].mxu0
        %v635 = vadd.f32 %v298, %v634
        %636 = vmatprep.mubr.f32.mxu0 0.0
        %637 = vmatmul.mubr.f32.gmra.mrb[0].mxu0 %v390
        %v638 = vpop.f32.mrb[0].mxu0
        %v639 = vadd.f32 %v294, %v638
        %v640 = vpop.f32.mrb[0].mxu0
        %v641 = vadd.f32 %v298, %v640
        %642 = vmatprep.mubr.f32.mxu0 0.0
        %643 = vmatmul.mubr.f32.gmra.mrb[0].mxu0 %v393
        %v644 = vpop.f32.mrb[0].mxu0
        %v645 = vadd.f32 %v294, %v644
        %v646 = vpop.f32.mrb[0].mxu0
        %v647 = vadd.f32 %v298, %v646
        %648 = vmatprep.mubr.f32.mxu0 0.0
        %649 = vmatmul.mubr.f32.gmra.mrb[0].mxu0 %v396
        %v650 = vpop.f32.mrb[0].mxu0
        %v651 = vadd.f32 %v294, %v650
        %v652 = vpop.f32.mrb[0].mxu0
        %v653 = vadd.f32 %v298, %v652
        %654 = vdwg.mxu0
        %v655 = vmax.f32 %v465, 0.0
        %v656 = vmax.f32 %v467, 0.0
        %v657 = vmax.f32 %v471, 0.0
        %v658 = vmax.f32 %v473, 0.0
        %v659 = vmax.f32 %v477, 0.0
        %v660 = vmax.f32 %v479, 0.0
        %v661 = vmax.f32 %v483, 0.0
        %v662 = vmax.f32 %v485, 0.0
        %v663 = vmax.f32 %v489, 0.0
        %v664 = vmax.f32 %v491, 0.0
        %v665 = vmax.f32 %v495, 0.0
        %v666 = vmax.f32 %v497, 0.0
        %v667 = vmax.f32 %v501, 0.0
        %v668 = vmax.f32 %v503, 0.0
        %v669 = vmax.f32 %v507, 0.0
        %v670 = vmax.f32 %v509, 0.0
        %v671 = vmax.f32 %v513, 0.0
        %v672 = vmax.f32 %v515, 0.0
        %v673 = vmax.f32 %v519, 0.0
        %v674 = vmax.f32 %v521, 0.0
        %v675 = vmax.f32 %v525, 0.0
        %v676 = vmax.f32 %v527, 0.0
        %v677 = vmax.f32 %v531, 0.0
        %v678 = vmax.f32 %v533, 0.0
        %v679 = vmax.f32 %v537, 0.0
        %v680 = vmax.f32 %v539, 0.0
        %v681 = vmax.f32 %v543, 0.0
        %v682 = vmax.f32 %v545, 0.0
        %v683 = vmax.f32 %v549, 0.0
        %v684 = vmax.f32 %v551, 0.0
        %v685 = vmax.f32 %v555, 0.0
        %v686 = vmax.f32 %v557, 0.0
        %v687 = vmax.f32 %v561, 0.0
        %v688 = vmax.f32 %v563, 0.0
        %v689 = vmax.f32 %v567, 0.0
        %v690 = vmax.f32 %v569, 0.0
        %v691 = vmax.f32 %v573, 0.0
        %v692 = vmax.f32 %v575, 0.0
        %v693 = vmax.f32 %v579, 0.0
        %v694 = vmax.f32 %v581, 0.0
        %v695 = vmax.f32 %v585, 0.0
        %v696 = vmax.f32 %v587, 0.0
        %v697 = vmax.f32 %v591, 0.0
        %v698 = vmax.f32 %v593, 0.0
        %v699 = vmax.f32 %v597, 0.0
        %v700 = vmax.f32 %v599, 0.0
        %v701 = vmax.f32 %v603, 0.0
        %v702 = vmax.f32 %v605, 0.0
        %v703 = vmax.f32 %v609, 0.0
        %v704 = vmax.f32 %v611, 0.0
        %v705 = vmax.f32 %v615, 0.0
        %v706 = vmax.f32 %v617, 0.0
        %v707 = vmax.f32 %v621, 0.0
        %v708 = vmax.f32 %v623, 0.0
        %v709 = vmax.f32 %v627, 0.0
        %v710 = vmax.f32 %v629, 0.0
        %v711 = vmax.f32 %v633, 0.0
        %v712 = vmax.f32 %v635, 0.0
        %v713 = vmax.f32 %v639, 0.0
        %v714 = vmax.f32 %v641, 0.0
        %v715 = vmax.f32 %v645, 0.0
        %v716 = vmax.f32 %v647, 0.0
        %v717 = vmax.f32 %v651, 0.0
        %v718 = vmax.f32 %v653, 0.0
        %v720 = vlaneseq
        %v721 = vshrl.u32 %v720, 7
        %v722 = vsub.s32 0, %v721
        %v723 = vrot.slane %v256, %v722
        %v724 = vlaneseq
        %v725 = vshrl.u32 %v724, 7
        %v726 = vsub.s32 1, %v725
        %v727 = vrot.slane %v256, %v726
        %v730 = vmul.f32 %v655, %v723
        %v731 = vmul.f32 %v656, %v727
        %v732 = vmul.f32 %v657, %v723
        %v733 = vmul.f32 %v658, %v727
        %v734 = vmul.f32 %v659, %v723
        %v735 = vmul.f32 %v660, %v727
        %v736 = vmul.f32 %v661, %v723
        %v737 = vmul.f32 %v662, %v727
        %v738 = vmul.f32 %v663, %v723
        %v739 = vmul.f32 %v664, %v727
        %v740 = vmul.f32 %v665, %v723
        %v741 = vmul.f32 %v666, %v727
        %v742 = vmul.f32 %v667, %v723
        %v743 = vmul.f32 %v668, %v727
        %v744 = vmul.f32 %v669, %v723
        %v745 = vmul.f32 %v670, %v727
        %v746 = vmul.f32 %v671, %v723
        %v747 = vmul.f32 %v672, %v727
        %v748 = vmul.f32 %v673, %v723
        %v749 = vmul.f32 %v674, %v727
        %v750 = vmul.f32 %v675, %v723
        %v751 = vmul.f32 %v676, %v727
        %v752 = vmul.f32 %v677, %v723
        %v753 = vmul.f32 %v678, %v727
        %v754 = vmul.f32 %v679, %v723
        %v755 = vmul.f32 %v680, %v727
        %v756 = vmul.f32 %v681, %v723
        %v757 = vmul.f32 %v682, %v727
        %v758 = vmul.f32 %v683, %v723
        %v759 = vmul.f32 %v684, %v727
        %v760 = vmul.f32 %v685, %v723
        %v761 = vmul.f32 %v686, %v727
        %v762 = vmul.f32 %v687, %v723
        %v763 = vmul.f32 %v688, %v727
        %v764 = vmul.f32 %v689, %v723
        %v765 = vmul.f32 %v690, %v727
        %v766 = vmul.f32 %v691, %v723
        %v767 = vmul.f32 %v692, %v727
        %v768 = vmul.f32 %v693, %v723
        %v769 = vmul.f32 %v694, %v727
        %v770 = vmul.f32 %v695, %v723
        %v771 = vmul.f32 %v696, %v727
        %v772 = vmul.f32 %v697, %v723
        %v773 = vmul.f32 %v698, %v727
        %v774 = vmul.f32 %v699, %v723
        %v775 = vmul.f32 %v700, %v727
        %v776 = vmul.f32 %v701, %v723
        %v777 = vmul.f32 %v702, %v727
        %v778 = vmul.f32 %v703, %v723
        %v779 = vmul.f32 %v704, %v727
        %v780 = vmul.f32 %v705, %v723
        %v781 = vmul.f32 %v706, %v727
        %v782 = vmul.f32 %v707, %v723
        %v783 = vmul.f32 %v708, %v727
        %v784 = vmul.f32 %v709, %v723
        %v785 = vmul.f32 %v710, %v727
        %v786 = vmul.f32 %v711, %v723
        %v787 = vmul.f32 %v712, %v727
        %v788 = vmul.f32 %v713, %v723
        %v789 = vmul.f32 %v714, %v727
        %v790 = vmul.f32 %v715, %v723
        %v791 = vmul.f32 %v716, %v727
        %v792 = vmul.f32 %v717, %v723
        %v793 = vmul.f32 %v718, %v727
        %v794 = vadd.f32 %v730, %v731
        %795 = vadd.xlane.f32.xlu0 %v794
        %v796 = vpop.xlane.xlu0 %795
        %v797 = vadd.f32 %v732, %v733
        %798 = vadd.xlane.f32.xlu0 %v797
        %v799 = vpop.xlane.xlu0 %798
        %v800 = vadd.f32 %v734, %v735
        %801 = vadd.xlane.f32.xlu0 %v800
        %v802 = vpop.xlane.xlu0 %801
        %v803 = vadd.f32 %v736, %v737
        %804 = vadd.xlane.f32.xlu0 %v803
        %v805 = vpop.xlane.xlu0 %804
        %v806 = vadd.f32 %v738, %v739
        %807 = vadd.xlane.f32.xlu0 %v806
        %v808 = vpop.xlane.xlu0 %807
        %v809 = vadd.f32 %v740, %v741
        %810 = vadd.xlane.f32.xlu0 %v809
        %v811 = vpop.xlane.xlu0 %810
        %v812 = vadd.f32 %v742, %v743
        %813 = vadd.xlane.f32.xlu0 %v812
        %v814 = vpop.xlane.xlu0 %813
        %v815 = vadd.f32 %v744, %v745
        %816 = vadd.xlane.f32.xlu0 %v815
        %v817 = vpop.xlane.xlu0 %816
        %v818 = vadd.f32 %v746, %v747
        %819 = vadd.xlane.f32.xlu0 %v818
        %v820 = vpop.xlane.xlu0 %819
        %v821 = vadd.f32 %v748, %v749
        %822 = vadd.xlane.f32.xlu0 %v821
        %v823 = vpop.xlane.xlu0 %822
        %v824 = vadd.f32 %v750, %v751
        %825 = vadd.xlane.f32.xlu0 %v824
        %v826 = vpop.xlane.xlu0 %825
        %v827 = vadd.f32 %v752, %v753
        %828 = vadd.xlane.f32.xlu0 %v827
        %v829 = vpop.xlane.xlu0 %828
        %v830 = vadd.f32 %v754, %v755
        %831 = vadd.xlane.f32.xlu0 %v830
        %v832 = vpop.xlane.xlu0 %831
        %v833 = vadd.f32 %v756, %v757
        %834 = vadd.xlane.f32.xlu0 %v833
        %v835 = vpop.xlane.xlu0 %834
        %v836 = vadd.f32 %v758, %v759
        %837 = vadd.xlane.f32.xlu0 %v836
        %v838 = vpop.xlane.xlu0 %837
        %v839 = vadd.f32 %v760, %v761
        %840 = vadd.xlane.f32.xlu0 %v839
        %v841 = vpop.xlane.xlu0 %840
        %v842 = vadd.f32 %v762, %v763
        %843 = vadd.xlane.f32.xlu0 %v842
        %v844 = vpop.xlane.xlu0 %843
        %v845 = vadd.f32 %v764, %v765
        %846 = vadd.xlane.f32.xlu0 %v845
        %v847 = vpop.xlane.xlu0 %846
        %v848 = vadd.f32 %v766, %v767
        %849 = vadd.xlane.f32.xlu0 %v848
        %v850 = vpop.xlane.xlu0 %849
        %v851 = vadd.f32 %v768, %v769
        %852 = vadd.xlane.f32.xlu0 %v851
        %v853 = vpop.xlane.xlu0 %852
        %v854 = vadd.f32 %v770, %v771
        %855 = vadd.xlane.f32.xlu0 %v854
        %v856 = vpop.xlane.xlu0 %855
        %v857 = vadd.f32 %v772, %v773
        %858 = vadd.xlane.f32.xlu0 %v857
        %v859 = vpop.xlane.xlu0 %858
        %v860 = vadd.f32 %v774, %v775
        %861 = vadd.xlane.f32.xlu0 %v860
        %v862 = vpop.xlane.xlu0 %861
        %v863 = vadd.f32 %v776, %v777
        %864 = vadd.xlane.f32.xlu0 %v863
        %v865 = vpop.xlane.xlu0 %864
        %v866 = vadd.f32 %v778, %v779
        %867 = vadd.xlane.f32.xlu0 %v866
        %v868 = vpop.xlane.xlu0 %867
        %v869 = vadd.f32 %v780, %v781
        %870 = vadd.xlane.f32.xlu0 %v869
        %v871 = vpop.xlane.xlu0 %870
        %v872 = vadd.f32 %v782, %v783
        %873 = vadd.xlane.f32.xlu0 %v872
        %v874 = vpop.xlane.xlu0 %873
        %v875 = vadd.f32 %v784, %v785
        %876 = vadd.xlane.f32.xlu0 %v875
        %v877 = vpop.xlane.xlu0 %876
        %v878 = vadd.f32 %v786, %v787
        %879 = vadd.xlane.f32.xlu0 %v878
        %v880 = vpop.xlane.xlu0 %879
        %v881 = vadd.f32 %v788, %v789
        %882 = vadd.xlane.f32.xlu0 %v881
        %v883 = vpop.xlane.xlu0 %882
        %v884 = vadd.f32 %v790, %v791
        %885 = vadd.xlane.f32.xlu0 %v884
        %v886 = vpop.xlane.xlu0 %885
        %v887 = vadd.f32 %v792, %v793
        %888 = vadd.xlane.f32.xlu0 %v887
        %v889 = vpop.xlane.xlu0 %888
        %v890 = vstv %s257
        %v891 = vadd.f32 %v796, %v890
        %v892 = vadd.f32 %v799, %v890
        %v893 = vadd.f32 %v802, %v890
        %v894 = vadd.f32 %v805, %v890
        %v895 = vadd.f32 %v808, %v890
        %v896 = vadd.f32 %v811, %v890
        %v897 = vadd.f32 %v814, %v890
        %v898 = vadd.f32 %v817, %v890
        %v899 = vadd.f32 %v820, %v890
        %v900 = vadd.f32 %v823, %v890
        %v901 = vadd.f32 %v826, %v890
        %v902 = vadd.f32 %v829, %v890
        %v903 = vadd.f32 %v832, %v890
        %v904 = vadd.f32 %v835, %v890
        %v905 = vadd.f32 %v838, %v890
        %v906 = vadd.f32 %v841, %v890
        %v907 = vadd.f32 %v844, %v890
        %v908 = vadd.f32 %v847, %v890
        %v909 = vadd.f32 %v850, %v890
        %v910 = vadd.f32 %v853, %v890
        %v911 = vadd.f32 %v856, %v890
        %v912 = vadd.f32 %v859, %v890
        %v913 = vadd.f32 %v862, %v890
        %v914 = vadd.f32 %v865, %v890
        %v915 = vadd.f32 %v868, %v890
        %v916 = vadd.f32 %v871, %v890
        %v917 = vadd.f32 %v874, %v890
        %v918 = vadd.f32 %v877, %v890
        %v919 = vadd.f32 %v880, %v890
        %v920 = vadd.f32 %v883, %v890
        %v921 = vadd.f32 %v886, %v890
        %v922 = vadd.f32 %v889, %v890
        %v955 = vlaneseq
        %v956 = vshrl.u32 %v955, 7
        %v957 = vsub.s32 0, %v956
        %v958 = vrot.slane %v891, %v957
        %v959 = vlaneseq
        %v960 = vshrl.u32 %v959, 7
        %v961 = vsub.s32 1, %v960
        %v962 = vrot.slane %v891, %v961
        %v963 = vlaneseq
        %v964 = vshrl.u32 %v963, 7
        %v965 = vsub.s32 2, %v964
        %v966 = vrot.slane %v891, %v965
        %v967 = vlaneseq
        %v968 = vshrl.u32 %v967, 7
        %v969 = vsub.s32 3, %v968
        %v970 = vrot.slane %v891, %v969
        %v971 = vlaneseq
        %v972 = vshrl.u32 %v971, 7
        %v973 = vsub.s32 4, %v972
        %v974 = vrot.slane %v891, %v973
        %v975 = vlaneseq
        %v976 = vshrl.u32 %v975, 7
        %v977 = vsub.s32 5, %v976
        %v978 = vrot.slane %v891, %v977
        %v979 = vlaneseq
        %v980 = vshrl.u32 %v979, 7
        %v981 = vsub.s32 6, %v980
        %v982 = vrot.slane %v891, %v981
        %v983 = vlaneseq
        %v984 = vshrl.u32 %v983, 7
        %v985 = vsub.s32 7, %v984
        %v986 = vrot.slane %v891, %v985
        %v987 = vlaneseq
        %v988 = vshrl.u32 %v987, 7
        %v989 = vsub.s32 0, %v988
        %v990 = vrot.slane %v892, %v989
        %v991 = vlaneseq
        %v992 = vshrl.u32 %v991, 7
        %v993 = vsub.s32 1, %v992
        %v994 = vrot.slane %v892, %v993
        %v995 = vlaneseq
        %v996 = vshrl.u32 %v995, 7
        %v997 = vsub.s32 2, %v996
        %v998 = vrot.slane %v892, %v997
        %v999 = vlaneseq
        %v1000 = vshrl.u32 %v999, 7
        %v1001 = vsub.s32 3, %v1000
        %v1002 = vrot.slane %v892, %v1001
        %v1003 = vlaneseq
        %v1004 = vshrl.u32 %v1003, 7
        %v1005 = vsub.s32 4, %v1004
        %v1006 = vrot.slane %v892, %v1005
        %v1007 = vlaneseq
        %v1008 = vshrl.u32 %v1007, 7
        %v1009 = vsub.s32 5, %v1008
        %v1010 = vrot.slane %v892, %v1009
        %v1011 = vlaneseq
        %v1012 = vshrl.u32 %v1011, 7
        %v1013 = vsub.s32 6, %v1012
        %v1014 = vrot.slane %v892, %v1013
        %v1015 = vlaneseq
        %v1016 = vshrl.u32 %v1015, 7
        %v1017 = vsub.s32 7, %v1016
        %v1018 = vrot.slane %v892, %v1017
        %v1019 = vlaneseq
        %v1020 = vshrl.u32 %v1019, 7
        %v1021 = vsub.s32 0, %v1020
        %v1022 = vrot.slane %v893, %v1021
        %v1023 = vlaneseq
        %v1024 = vshrl.u32 %v1023, 7
        %v1025 = vsub.s32 1, %v1024
        %v1026 = vrot.slane %v893, %v1025
        %v1027 = vlaneseq
        %v1028 = vshrl.u32 %v1027, 7
        %v1029 = vsub.s32 2, %v1028
        %v1030 = vrot.slane %v893, %v1029
        %v1031 = vlaneseq
        %v1032 = vshrl.u32 %v1031, 7
        %v1033 = vsub.s32 3, %v1032
        %v1034 = vrot.slane %v893, %v1033
        %v1035 = vlaneseq
        %v1036 = vshrl.u32 %v1035, 7
        %v1037 = vsub.s32 4, %v1036
        %v1038 = vrot.slane %v893, %v1037
        %v1039 = vlaneseq
        %v1040 = vshrl.u32 %v1039, 7
        %v1041 = vsub.s32 5, %v1040
        %v1042 = vrot.slane %v893, %v1041
        %v1043 = vlaneseq
        %v1044 = vshrl.u32 %v1043, 7
        %v1045 = vsub.s32 6, %v1044
        %v1046 = vrot.slane %v893, %v1045
        %v1047 = vlaneseq
        %v1048 = vshrl.u32 %v1047, 7
        %v1049 = vsub.s32 7, %v1048
        %v1050 = vrot.slane %v893, %v1049
        %v1051 = vlaneseq
        %v1052 = vshrl.u32 %v1051, 7
        %v1053 = vsub.s32 0, %v1052
        %v1054 = vrot.slane %v894, %v1053
        %v1055 = vlaneseq
        %v1056 = vshrl.u32 %v1055, 7
        %v1057 = vsub.s32 1, %v1056
        %v1058 = vrot.slane %v894, %v1057
        %v1059 = vlaneseq
        %v1060 = vshrl.u32 %v1059, 7
        %v1061 = vsub.s32 2, %v1060
        %v1062 = vrot.slane %v894, %v1061
        %v1063 = vlaneseq
        %v1064 = vshrl.u32 %v1063, 7
        %v1065 = vsub.s32 3, %v1064
        %v1066 = vrot.slane %v894, %v1065
        %v1067 = vlaneseq
        %v1068 = vshrl.u32 %v1067, 7
        %v1069 = vsub.s32 4, %v1068
        %v1070 = vrot.slane %v894, %v1069
        %v1071 = vlaneseq
        %v1072 = vshrl.u32 %v1071, 7
        %v1073 = vsub.s32 5, %v1072
        %v1074 = vrot.slane %v894, %v1073
        %v1075 = vlaneseq
        %v1076 = vshrl.u32 %v1075, 7
        %v1077 = vsub.s32 6, %v1076
        %v1078 = vrot.slane %v894, %v1077
        %v1079 = vlaneseq
        %v1080 = vshrl.u32 %v1079, 7
        %v1081 = vsub.s32 7, %v1080
        %v1082 = vrot.slane %v894, %v1081
        %v1083 = vlaneseq
        %v1084 = vshrl.u32 %v1083, 7
        %v1085 = vsub.s32 0, %v1084
        %v1086 = vrot.slane %v895, %v1085
        %v1087 = vlaneseq
        %v1088 = vshrl.u32 %v1087, 7
        %v1089 = vsub.s32 1, %v1088
        %v1090 = vrot.slane %v895, %v1089
        %v1091 = vlaneseq
        %v1092 = vshrl.u32 %v1091, 7
        %v1093 = vsub.s32 2, %v1092
        %v1094 = vrot.slane %v895, %v1093
        %v1095 = vlaneseq
        %v1096 = vshrl.u32 %v1095, 7
        %v1097 = vsub.s32 3, %v1096
        %v1098 = vrot.slane %v895, %v1097
        %v1099 = vlaneseq
        %v1100 = vshrl.u32 %v1099, 7
        %v1101 = vsub.s32 4, %v1100
        %v1102 = vrot.slane %v895, %v1101
        %v1103 = vlaneseq
        %v1104 = vshrl.u32 %v1103, 7
        %v1105 = vsub.s32 5, %v1104
        %v1106 = vrot.slane %v895, %v1105
        %v1107 = vlaneseq
        %v1108 = vshrl.u32 %v1107, 7
        %v1109 = vsub.s32 6, %v1108
        %v1110 = vrot.slane %v895, %v1109
        %v1111 = vlaneseq
        %v1112 = vshrl.u32 %v1111, 7
        %v1113 = vsub.s32 7, %v1112
        %v1114 = vrot.slane %v895, %v1113
        %v1115 = vlaneseq
        %v1116 = vshrl.u32 %v1115, 7
        %v1117 = vsub.s32 0, %v1116
        %v1118 = vrot.slane %v896, %v1117
        %v1119 = vlaneseq
        %v1120 = vshrl.u32 %v1119, 7
        %v1121 = vsub.s32 1, %v1120
        %v1122 = vrot.slane %v896, %v1121
        %v1123 = vlaneseq
        %v1124 = vshrl.u32 %v1123, 7
        %v1125 = vsub.s32 2, %v1124
        %v1126 = vrot.slane %v896, %v1125
        %v1127 = vlaneseq
        %v1128 = vshrl.u32 %v1127, 7
        %v1129 = vsub.s32 3, %v1128
        %v1130 = vrot.slane %v896, %v1129
        %v1131 = vlaneseq
        %v1132 = vshrl.u32 %v1131, 7
        %v1133 = vsub.s32 4, %v1132
        %v1134 = vrot.slane %v896, %v1133
        %v1135 = vlaneseq
        %v1136 = vshrl.u32 %v1135, 7
        %v1137 = vsub.s32 5, %v1136
        %v1138 = vrot.slane %v896, %v1137
        %v1139 = vlaneseq
        %v1140 = vshrl.u32 %v1139, 7
        %v1141 = vsub.s32 6, %v1140
        %v1142 = vrot.slane %v896, %v1141
        %v1143 = vlaneseq
        %v1144 = vshrl.u32 %v1143, 7
        %v1145 = vsub.s32 7, %v1144
        %v1146 = vrot.slane %v896, %v1145
        %v1147 = vlaneseq
        %v1148 = vshrl.u32 %v1147, 7
        %v1149 = vsub.s32 0, %v1148
        %v1150 = vrot.slane %v897, %v1149
        %v1151 = vlaneseq
        %v1152 = vshrl.u32 %v1151, 7
        %v1153 = vsub.s32 1, %v1152
        %v1154 = vrot.slane %v897, %v1153
        %v1155 = vlaneseq
        %v1156 = vshrl.u32 %v1155, 7
        %v1157 = vsub.s32 2, %v1156
        %v1158 = vrot.slane %v897, %v1157
        %v1159 = vlaneseq
        %v1160 = vshrl.u32 %v1159, 7
        %v1161 = vsub.s32 3, %v1160
        %v1162 = vrot.slane %v897, %v1161
        %v1163 = vlaneseq
        %v1164 = vshrl.u32 %v1163, 7
        %v1165 = vsub.s32 4, %v1164
        %v1166 = vrot.slane %v897, %v1165
        %v1167 = vlaneseq
        %v1168 = vshrl.u32 %v1167, 7
        %v1169 = vsub.s32 5, %v1168
        %v1170 = vrot.slane %v897, %v1169
        %v1171 = vlaneseq
        %v1172 = vshrl.u32 %v1171, 7
        %v1173 = vsub.s32 6, %v1172
        %v1174 = vrot.slane %v897, %v1173
        %v1175 = vlaneseq
        %v1176 = vshrl.u32 %v1175, 7
        %v1177 = vsub.s32 7, %v1176
        %v1178 = vrot.slane %v897, %v1177
        %v1179 = vlaneseq
        %v1180 = vshrl.u32 %v1179, 7
        %v1181 = vsub.s32 0, %v1180
        %v1182 = vrot.slane %v898, %v1181
        %v1183 = vlaneseq
        %v1184 = vshrl.u32 %v1183, 7
        %v1185 = vsub.s32 1, %v1184
        %v1186 = vrot.slane %v898, %v1185
        %v1187 = vlaneseq
        %v1188 = vshrl.u32 %v1187, 7
        %v1189 = vsub.s32 2, %v1188
        %v1190 = vrot.slane %v898, %v1189
        %v1191 = vlaneseq
        %v1192 = vshrl.u32 %v1191, 7
        %v1193 = vsub.s32 3, %v1192
        %v1194 = vrot.slane %v898, %v1193
        %v1195 = vlaneseq
        %v1196 = vshrl.u32 %v1195, 7
        %v1197 = vsub.s32 4, %v1196
        %v1198 = vrot.slane %v898, %v1197
        %v1199 = vlaneseq
        %v1200 = vshrl.u32 %v1199, 7
        %v1201 = vsub.s32 5, %v1200
        %v1202 = vrot.slane %v898, %v1201
        %v1203 = vlaneseq
        %v1204 = vshrl.u32 %v1203, 7
        %v1205 = vsub.s32 6, %v1204
        %v1206 = vrot.slane %v898, %v1205
        %v1207 = vlaneseq
        %v1208 = vshrl.u32 %v1207, 7
        %v1209 = vsub.s32 7, %v1208
        %v1210 = vrot.slane %v898, %v1209
        %v1211 = vlaneseq
        %v1212 = vshrl.u32 %v1211, 7
        %v1213 = vsub.s32 0, %v1212
        %v1214 = vrot.slane %v899, %v1213
        %v1215 = vlaneseq
        %v1216 = vshrl.u32 %v1215, 7
        %v1217 = vsub.s32 1, %v1216
        %v1218 = vrot.slane %v899, %v1217
        %v1219 = vlaneseq
        %v1220 = vshrl.u32 %v1219, 7
        %v1221 = vsub.s32 2, %v1220
        %v1222 = vrot.slane %v899, %v1221
        %v1223 = vlaneseq
        %v1224 = vshrl.u32 %v1223, 7
        %v1225 = vsub.s32 3, %v1224
        %v1226 = vrot.slane %v899, %v1225
        %v1227 = vlaneseq
        %v1228 = vshrl.u32 %v1227, 7
        %v1229 = vsub.s32 4, %v1228
        %v1230 = vrot.slane %v899, %v1229
        %v1231 = vlaneseq
        %v1232 = vshrl.u32 %v1231, 7
        %v1233 = vsub.s32 5, %v1232
        %v1234 = vrot.slane %v899, %v1233
        %v1235 = vlaneseq
        %v1236 = vshrl.u32 %v1235, 7
        %v1237 = vsub.s32 6, %v1236
        %v1238 = vrot.slane %v899, %v1237
        %v1239 = vlaneseq
        %v1240 = vshrl.u32 %v1239, 7
        %v1241 = vsub.s32 7, %v1240
        %v1242 = vrot.slane %v899, %v1241
        %v1243 = vlaneseq
        %v1244 = vshrl.u32 %v1243, 7
        %v1245 = vsub.s32 0, %v1244
        %v1246 = vrot.slane %v900, %v1245
        %v1247 = vlaneseq
        %v1248 = vshrl.u32 %v1247, 7
        %v1249 = vsub.s32 1, %v1248
        %v1250 = vrot.slane %v900, %v1249
        %v1251 = vlaneseq
        %v1252 = vshrl.u32 %v1251, 7
        %v1253 = vsub.s32 2, %v1252
        %v1254 = vrot.slane %v900, %v1253
        %v1255 = vlaneseq
        %v1256 = vshrl.u32 %v1255, 7
        %v1257 = vsub.s32 3, %v1256
        %v1258 = vrot.slane %v900, %v1257
        %v1259 = vlaneseq
        %v1260 = vshrl.u32 %v1259, 7
        %v1261 = vsub.s32 4, %v1260
        %v1262 = vrot.slane %v900, %v1261
        %v1263 = vlaneseq
        %v1264 = vshrl.u32 %v1263, 7
        %v1265 = vsub.s32 5, %v1264
        %v1266 = vrot.slane %v900, %v1265
        %v1267 = vlaneseq
        %v1268 = vshrl.u32 %v1267, 7
        %v1269 = vsub.s32 6, %v1268
        %v1270 = vrot.slane %v900, %v1269
        %v1271 = vlaneseq
        %v1272 = vshrl.u32 %v1271, 7
        %v1273 = vsub.s32 7, %v1272
        %v1274 = vrot.slane %v900, %v1273
        %v1275 = vlaneseq
        %v1276 = vshrl.u32 %v1275, 7
        %v1277 = vsub.s32 0, %v1276
        %v1278 = vrot.slane %v901, %v1277
        %v1279 = vlaneseq
        %v1280 = vshrl.u32 %v1279, 7
        %v1281 = vsub.s32 1, %v1280
        %v1282 = vrot.slane %v901, %v1281
        %v1283 = vlaneseq
        %v1284 = vshrl.u32 %v1283, 7
        %v1285 = vsub.s32 2, %v1284
        %v1286 = vrot.slane %v901, %v1285
        %v1287 = vlaneseq
        %v1288 = vshrl.u32 %v1287, 7
        %v1289 = vsub.s32 3, %v1288
        %v1290 = vrot.slane %v901, %v1289
        %v1291 = vlaneseq
        %v1292 = vshrl.u32 %v1291, 7
        %v1293 = vsub.s32 4, %v1292
        %v1294 = vrot.slane %v901, %v1293
        %v1295 = vlaneseq
        %v1296 = vshrl.u32 %v1295, 7
        %v1297 = vsub.s32 5, %v1296
        %v1298 = vrot.slane %v901, %v1297
        %v1299 = vlaneseq
        %v1300 = vshrl.u32 %v1299, 7
        %v1301 = vsub.s32 6, %v1300
        %v1302 = vrot.slane %v901, %v1301
        %v1303 = vlaneseq
        %v1304 = vshrl.u32 %v1303, 7
        %v1305 = vsub.s32 7, %v1304
        %v1306 = vrot.slane %v901, %v1305
        %v1307 = vlaneseq
        %v1308 = vshrl.u32 %v1307, 7
        %v1309 = vsub.s32 0, %v1308
        %v1310 = vrot.slane %v902, %v1309
        %v1311 = vlaneseq
        %v1312 = vshrl.u32 %v1311, 7
        %v1313 = vsub.s32 1, %v1312
        %v1314 = vrot.slane %v902, %v1313
        %v1315 = vlaneseq
        %v1316 = vshrl.u32 %v1315, 7
        %v1317 = vsub.s32 2, %v1316
        %v1318 = vrot.slane %v902, %v1317
        %v1319 = vlaneseq
        %v1320 = vshrl.u32 %v1319, 7
        %v1321 = vsub.s32 3, %v1320
        %v1322 = vrot.slane %v902, %v1321
        %v1323 = vlaneseq
        %v1324 = vshrl.u32 %v1323, 7
        %v1325 = vsub.s32 4, %v1324
        %v1326 = vrot.slane %v902, %v1325
        %v1327 = vlaneseq
        %v1328 = vshrl.u32 %v1327, 7
        %v1329 = vsub.s32 5, %v1328
        %v1330 = vrot.slane %v902, %v1329
        %v1331 = vlaneseq
        %v1332 = vshrl.u32 %v1331, 7
        %v1333 = vsub.s32 6, %v1332
        %v1334 = vrot.slane %v902, %v1333
        %v1335 = vlaneseq
        %v1336 = vshrl.u32 %v1335, 7
        %v1337 = vsub.s32 7, %v1336
        %v1338 = vrot.slane %v902, %v1337
        %v1339 = vlaneseq
        %v1340 = vshrl.u32 %v1339, 7
        %v1341 = vsub.s32 0, %v1340
        %v1342 = vrot.slane %v903, %v1341
        %v1343 = vlaneseq
        %v1344 = vshrl.u32 %v1343, 7
        %v1345 = vsub.s32 1, %v1344
        %v1346 = vrot.slane %v903, %v1345
        %v1347 = vlaneseq
        %v1348 = vshrl.u32 %v1347, 7
        %v1349 = vsub.s32 2, %v1348
        %v1350 = vrot.slane %v903, %v1349
        %v1351 = vlaneseq
        %v1352 = vshrl.u32 %v1351, 7
        %v1353 = vsub.s32 3, %v1352
        %v1354 = vrot.slane %v903, %v1353
        %v1355 = vlaneseq
        %v1356 = vshrl.u32 %v1355, 7
        %v1357 = vsub.s32 4, %v1356
        %v1358 = vrot.slane %v903, %v1357
        %v1359 = vlaneseq
        %v1360 = vshrl.u32 %v1359, 7
        %v1361 = vsub.s32 5, %v1360
        %v1362 = vrot.slane %v903, %v1361
        %v1363 = vlaneseq
        %v1364 = vshrl.u32 %v1363, 7
        %v1365 = vsub.s32 6, %v1364
        %v1366 = vrot.slane %v903, %v1365
        %v1367 = vlaneseq
        %v1368 = vshrl.u32 %v1367, 7
        %v1369 = vsub.s32 7, %v1368
        %v1370 = vrot.slane %v903, %v1369
        %v1371 = vlaneseq
        %v1372 = vshrl.u32 %v1371, 7
        %v1373 = vsub.s32 0, %v1372
        %v1374 = vrot.slane %v904, %v1373
        %v1375 = vlaneseq
        %v1376 = vshrl.u32 %v1375, 7
        %v1377 = vsub.s32 1, %v1376
        %v1378 = vrot.slane %v904, %v1377
        %v1379 = vlaneseq
        %v1380 = vshrl.u32 %v1379, 7
        %v1381 = vsub.s32 2, %v1380
        %v1382 = vrot.slane %v904, %v1381
        %v1383 = vlaneseq
        %v1384 = vshrl.u32 %v1383, 7
        %v1385 = vsub.s32 3, %v1384
        %v1386 = vrot.slane %v904, %v1385
        %v1387 = vlaneseq
        %v1388 = vshrl.u32 %v1387, 7
        %v1389 = vsub.s32 4, %v1388
        %v1390 = vrot.slane %v904, %v1389
        %v1391 = vlaneseq
        %v1392 = vshrl.u32 %v1391, 7
        %v1393 = vsub.s32 5, %v1392
        %v1394 = vrot.slane %v904, %v1393
        %v1395 = vlaneseq
        %v1396 = vshrl.u32 %v1395, 7
        %v1397 = vsub.s32 6, %v1396
        %v1398 = vrot.slane %v904, %v1397
        %v1399 = vlaneseq
        %v1400 = vshrl.u32 %v1399, 7
        %v1401 = vsub.s32 7, %v1400
        %v1402 = vrot.slane %v904, %v1401
        %v1403 = vlaneseq
        %v1404 = vshrl.u32 %v1403, 7
        %v1405 = vsub.s32 0, %v1404
        %v1406 = vrot.slane %v905, %v1405
        %v1407 = vlaneseq
        %v1408 = vshrl.u32 %v1407, 7
        %v1409 = vsub.s32 1, %v1408
        %v1410 = vrot.slane %v905, %v1409
        %v1411 = vlaneseq
        %v1412 = vshrl.u32 %v1411, 7
        %v1413 = vsub.s32 2, %v1412
        %v1414 = vrot.slane %v905, %v1413
        %v1415 = vlaneseq
        %v1416 = vshrl.u32 %v1415, 7
        %v1417 = vsub.s32 3, %v1416
        %v1418 = vrot.slane %v905, %v1417
        %v1419 = vlaneseq
        %v1420 = vshrl.u32 %v1419, 7
        %v1421 = vsub.s32 4, %v1420
        %v1422 = vrot.slane %v905, %v1421
        %v1423 = vlaneseq
        %v1424 = vshrl.u32 %v1423, 7
        %v1425 = vsub.s32 5, %v1424
        %v1426 = vrot.slane %v905, %v1425
        %v1427 = vlaneseq
        %v1428 = vshrl.u32 %v1427, 7
        %v1429 = vsub.s32 6, %v1428
        %v1430 = vrot.slane %v905, %v1429
        %v1431 = vlaneseq
        %v1432 = vshrl.u32 %v1431, 7
        %v1433 = vsub.s32 7, %v1432
        %v1434 = vrot.slane %v905, %v1433
        %v1435 = vlaneseq
        %v1436 = vshrl.u32 %v1435, 7
        %v1437 = vsub.s32 0, %v1436
        %v1438 = vrot.slane %v906, %v1437
        %v1439 = vlaneseq
        %v1440 = vshrl.u32 %v1439, 7
        %v1441 = vsub.s32 1, %v1440
        %v1442 = vrot.slane %v906, %v1441
        %v1443 = vlaneseq
        %v1444 = vshrl.u32 %v1443, 7
        %v1445 = vsub.s32 2, %v1444
        %v1446 = vrot.slane %v906, %v1445
        %v1447 = vlaneseq
        %v1448 = vshrl.u32 %v1447, 7
        %v1449 = vsub.s32 3, %v1448
        %v1450 = vrot.slane %v906, %v1449
        %v1451 = vlaneseq
        %v1452 = vshrl.u32 %v1451, 7
        %v1453 = vsub.s32 4, %v1452
        %v1454 = vrot.slane %v906, %v1453
        %v1455 = vlaneseq
        %v1456 = vshrl.u32 %v1455, 7
        %v1457 = vsub.s32 5, %v1456
        %v1458 = vrot.slane %v906, %v1457
        %v1459 = vlaneseq
        %v1460 = vshrl.u32 %v1459, 7
        %v1461 = vsub.s32 6, %v1460
        %v1462 = vrot.slane %v906, %v1461
        %v1463 = vlaneseq
        %v1464 = vshrl.u32 %v1463, 7
        %v1465 = vsub.s32 7, %v1464
        %v1466 = vrot.slane %v906, %v1465
        %v1467 = vlaneseq
        %v1468 = vshrl.u32 %v1467, 7
        %v1469 = vsub.s32 0, %v1468
        %v1470 = vrot.slane %v907, %v1469
        %v1471 = vlaneseq
        %v1472 = vshrl.u32 %v1471, 7
        %v1473 = vsub.s32 1, %v1472
        %v1474 = vrot.slane %v907, %v1473
        %v1475 = vlaneseq
        %v1476 = vshrl.u32 %v1475, 7
        %v1477 = vsub.s32 2, %v1476
        %v1478 = vrot.slane %v907, %v1477
        %v1479 = vlaneseq
        %v1480 = vshrl.u32 %v1479, 7
        %v1481 = vsub.s32 3, %v1480
        %v1482 = vrot.slane %v907, %v1481
        %v1483 = vlaneseq
        %v1484 = vshrl.u32 %v1483, 7
        %v1485 = vsub.s32 4, %v1484
        %v1486 = vrot.slane %v907, %v1485
        %v1487 = vlaneseq
        %v1488 = vshrl.u32 %v1487, 7
        %v1489 = vsub.s32 5, %v1488
        %v1490 = vrot.slane %v907, %v1489
        %v1491 = vlaneseq
        %v1492 = vshrl.u32 %v1491, 7
        %v1493 = vsub.s32 6, %v1492
        %v1494 = vrot.slane %v907, %v1493
        %v1495 = vlaneseq
        %v1496 = vshrl.u32 %v1495, 7
        %v1497 = vsub.s32 7, %v1496
        %v1498 = vrot.slane %v907, %v1497
        %v1499 = vlaneseq
        %v1500 = vshrl.u32 %v1499, 7
        %v1501 = vsub.s32 0, %v1500
        %v1502 = vrot.slane %v908, %v1501
        %v1503 = vlaneseq
        %v1504 = vshrl.u32 %v1503, 7
        %v1505 = vsub.s32 1, %v1504
        %v1506 = vrot.slane %v908, %v1505
        %v1507 = vlaneseq
        %v1508 = vshrl.u32 %v1507, 7
        %v1509 = vsub.s32 2, %v1508
        %v1510 = vrot.slane %v908, %v1509
        %v1511 = vlaneseq
        %v1512 = vshrl.u32 %v1511, 7
        %v1513 = vsub.s32 3, %v1512
        %v1514 = vrot.slane %v908, %v1513
        %v1515 = vlaneseq
        %v1516 = vshrl.u32 %v1515, 7
        %v1517 = vsub.s32 4, %v1516
        %v1518 = vrot.slane %v908, %v1517
        %v1519 = vlaneseq
        %v1520 = vshrl.u32 %v1519, 7
        %v1521 = vsub.s32 5, %v1520
        %v1522 = vrot.slane %v908, %v1521
        %v1523 = vlaneseq
        %v1524 = vshrl.u32 %v1523, 7
        %v1525 = vsub.s32 6, %v1524
        %v1526 = vrot.slane %v908, %v1525
        %v1527 = vlaneseq
        %v1528 = vshrl.u32 %v1527, 7
        %v1529 = vsub.s32 7, %v1528
        %v1530 = vrot.slane %v908, %v1529
        %v1531 = vlaneseq
        %v1532 = vshrl.u32 %v1531, 7
        %v1533 = vsub.s32 0, %v1532
        %v1534 = vrot.slane %v909, %v1533
        %v1535 = vlaneseq
        %v1536 = vshrl.u32 %v1535, 7
        %v1537 = vsub.s32 1, %v1536
        %v1538 = vrot.slane %v909, %v1537
        %v1539 = vlaneseq
        %v1540 = vshrl.u32 %v1539, 7
        %v1541 = vsub.s32 2, %v1540
        %v1542 = vrot.slane %v909, %v1541
        %v1543 = vlaneseq
        %v1544 = vshrl.u32 %v1543, 7
        %v1545 = vsub.s32 3, %v1544
        %v1546 = vrot.slane %v909, %v1545
        %v1547 = vlaneseq
        %v1548 = vshrl.u32 %v1547, 7
        %v1549 = vsub.s32 4, %v1548
        %v1550 = vrot.slane %v909, %v1549
        %v1551 = vlaneseq
        %v1552 = vshrl.u32 %v1551, 7
        %v1553 = vsub.s32 5, %v1552
        %v1554 = vrot.slane %v909, %v1553
        %v1555 = vlaneseq
        %v1556 = vshrl.u32 %v1555, 7
        %v1557 = vsub.s32 6, %v1556
        %v1558 = vrot.slane %v909, %v1557
        %v1559 = vlaneseq
        %v1560 = vshrl.u32 %v1559, 7
        %v1561 = vsub.s32 7, %v1560
        %v1562 = vrot.slane %v909, %v1561
        %v1563 = vlaneseq
        %v1564 = vshrl.u32 %v1563, 7
        %v1565 = vsub.s32 0, %v1564
        %v1566 = vrot.slane %v910, %v1565
        %v1567 = vlaneseq
        %v1568 = vshrl.u32 %v1567, 7
        %v1569 = vsub.s32 1, %v1568
        %v1570 = vrot.slane %v910, %v1569
        %v1571 = vlaneseq
        %v1572 = vshrl.u32 %v1571, 7
        %v1573 = vsub.s32 2, %v1572
        %v1574 = vrot.slane %v910, %v1573
        %v1575 = vlaneseq
        %v1576 = vshrl.u32 %v1575, 7
        %v1577 = vsub.s32 3, %v1576
        %v1578 = vrot.slane %v910, %v1577
        %v1579 = vlaneseq
        %v1580 = vshrl.u32 %v1579, 7
        %v1581 = vsub.s32 4, %v1580
        %v1582 = vrot.slane %v910, %v1581
        %v1583 = vlaneseq
        %v1584 = vshrl.u32 %v1583, 7
        %v1585 = vsub.s32 5, %v1584
        %v1586 = vrot.slane %v910, %v1585
        %v1587 = vlaneseq
        %v1588 = vshrl.u32 %v1587, 7
        %v1589 = vsub.s32 6, %v1588
        %v1590 = vrot.slane %v910, %v1589
        %v1591 = vlaneseq
        %v1592 = vshrl.u32 %v1591, 7
        %v1593 = vsub.s32 7, %v1592
        %v1594 = vrot.slane %v910, %v1593
        %v1595 = vlaneseq
        %v1596 = vshrl.u32 %v1595, 7
        %v1597 = vsub.s32 0, %v1596
        %v1598 = vrot.slane %v911, %v1597
        %v1599 = vlaneseq
        %v1600 = vshrl.u32 %v1599, 7
        %v1601 = vsub.s32 1, %v1600
        %v1602 = vrot.slane %v911, %v1601
        %v1603 = vlaneseq
        %v1604 = vshrl.u32 %v1603, 7
        %v1605 = vsub.s32 2, %v1604
        %v1606 = vrot.slane %v911, %v1605
        %v1607 = vlaneseq
        %v1608 = vshrl.u32 %v1607, 7
        %v1609 = vsub.s32 3, %v1608
        %v1610 = vrot.slane %v911, %v1609
        %v1611 = vlaneseq
        %v1612 = vshrl.u32 %v1611, 7
        %v1613 = vsub.s32 4, %v1612
        %v1614 = vrot.slane %v911, %v1613
        %v1615 = vlaneseq
        %v1616 = vshrl.u32 %v1615, 7
        %v1617 = vsub.s32 5, %v1616
        %v1618 = vrot.slane %v911, %v1617
        %v1619 = vlaneseq
        %v1620 = vshrl.u32 %v1619, 7
        %v1621 = vsub.s32 6, %v1620
        %v1622 = vrot.slane %v911, %v1621
        %v1623 = vlaneseq
        %v1624 = vshrl.u32 %v1623, 7
        %v1625 = vsub.s32 7, %v1624
        %v1626 = vrot.slane %v911, %v1625
        %v1627 = vlaneseq
        %v1628 = vshrl.u32 %v1627, 7
        %v1629 = vsub.s32 0, %v1628
        %v1630 = vrot.slane %v912, %v1629
        %v1631 = vlaneseq
        %v1632 = vshrl.u32 %v1631, 7
        %v1633 = vsub.s32 1, %v1632
        %v1634 = vrot.slane %v912, %v1633
        %v1635 = vlaneseq
        %v1636 = vshrl.u32 %v1635, 7
        %v1637 = vsub.s32 2, %v1636
        %v1638 = vrot.slane %v912, %v1637
        %v1639 = vlaneseq
        %v1640 = vshrl.u32 %v1639, 7
        %v1641 = vsub.s32 3, %v1640
        %v1642 = vrot.slane %v912, %v1641
        %v1643 = vlaneseq
        %v1644 = vshrl.u32 %v1643, 7
        %v1645 = vsub.s32 4, %v1644
        %v1646 = vrot.slane %v912, %v1645
        %v1647 = vlaneseq
        %v1648 = vshrl.u32 %v1647, 7
        %v1649 = vsub.s32 5, %v1648
        %v1650 = vrot.slane %v912, %v1649
        %v1651 = vlaneseq
        %v1652 = vshrl.u32 %v1651, 7
        %v1653 = vsub.s32 6, %v1652
        %v1654 = vrot.slane %v912, %v1653
        %v1655 = vlaneseq
        %v1656 = vshrl.u32 %v1655, 7
        %v1657 = vsub.s32 7, %v1656
        %v1658 = vrot.slane %v912, %v1657
        %v1659 = vlaneseq
        %v1660 = vshrl.u32 %v1659, 7
        %v1661 = vsub.s32 0, %v1660
        %v1662 = vrot.slane %v913, %v1661
        %v1663 = vlaneseq
        %v1664 = vshrl.u32 %v1663, 7
        %v1665 = vsub.s32 1, %v1664
        %v1666 = vrot.slane %v913, %v1665
        %v1667 = vlaneseq
        %v1668 = vshrl.u32 %v1667, 7
        %v1669 = vsub.s32 2, %v1668
        %v1670 = vrot.slane %v913, %v1669
        %v1671 = vlaneseq
        %v1672 = vshrl.u32 %v1671, 7
        %v1673 = vsub.s32 3, %v1672
        %v1674 = vrot.slane %v913, %v1673
        %v1675 = vlaneseq
        %v1676 = vshrl.u32 %v1675, 7
        %v1677 = vsub.s32 4, %v1676
        %v1678 = vrot.slane %v913, %v1677
        %v1679 = vlaneseq
        %v1680 = vshrl.u32 %v1679, 7
        %v1681 = vsub.s32 5, %v1680
        %v1682 = vrot.slane %v913, %v1681
        %v1683 = vlaneseq
        %v1684 = vshrl.u32 %v1683, 7
        %v1685 = vsub.s32 6, %v1684
        %v1686 = vrot.slane %v913, %v1685
        %v1687 = vlaneseq
        %v1688 = vshrl.u32 %v1687, 7
        %v1689 = vsub.s32 7, %v1688
        %v1690 = vrot.slane %v913, %v1689
        %v1691 = vlaneseq
        %v1692 = vshrl.u32 %v1691, 7
        %v1693 = vsub.s32 0, %v1692
        %v1694 = vrot.slane %v914, %v1693
        %v1695 = vlaneseq
        %v1696 = vshrl.u32 %v1695, 7
        %v1697 = vsub.s32 1, %v1696
        %v1698 = vrot.slane %v914, %v1697
        %v1699 = vlaneseq
        %v1700 = vshrl.u32 %v1699, 7
        %v1701 = vsub.s32 2, %v1700
        %v1702 = vrot.slane %v914, %v1701
        %v1703 = vlaneseq
        %v1704 = vshrl.u32 %v1703, 7
        %v1705 = vsub.s32 3, %v1704
        %v1706 = vrot.slane %v914, %v1705
        %v1707 = vlaneseq
        %v1708 = vshrl.u32 %v1707, 7
        %v1709 = vsub.s32 4, %v1708
        %v1710 = vrot.slane %v914, %v1709
        %v1711 = vlaneseq
        %v1712 = vshrl.u32 %v1711, 7
        %v1713 = vsub.s32 5, %v1712
        %v1714 = vrot.slane %v914, %v1713
        %v1715 = vlaneseq
        %v1716 = vshrl.u32 %v1715, 7
        %v1717 = vsub.s32 6, %v1716
        %v1718 = vrot.slane %v914, %v1717
        %v1719 = vlaneseq
        %v1720 = vshrl.u32 %v1719, 7
        %v1721 = vsub.s32 7, %v1720
        %v1722 = vrot.slane %v914, %v1721
        %v1723 = vlaneseq
        %v1724 = vshrl.u32 %v1723, 7
        %v1725 = vsub.s32 0, %v1724
        %v1726 = vrot.slane %v915, %v1725
        %v1727 = vlaneseq
        %v1728 = vshrl.u32 %v1727, 7
        %v1729 = vsub.s32 1, %v1728
        %v1730 = vrot.slane %v915, %v1729
        %v1731 = vlaneseq
        %v1732 = vshrl.u32 %v1731, 7
        %v1733 = vsub.s32 2, %v1732
        %v1734 = vrot.slane %v915, %v1733
        %v1735 = vlaneseq
        %v1736 = vshrl.u32 %v1735, 7
        %v1737 = vsub.s32 3, %v1736
        %v1738 = vrot.slane %v915, %v1737
        %v1739 = vlaneseq
        %v1740 = vshrl.u32 %v1739, 7
        %v1741 = vsub.s32 4, %v1740
        %v1742 = vrot.slane %v915, %v1741
        %v1743 = vlaneseq
        %v1744 = vshrl.u32 %v1743, 7
        %v1745 = vsub.s32 5, %v1744
        %v1746 = vrot.slane %v915, %v1745
        %v1747 = vlaneseq
        %v1748 = vshrl.u32 %v1747, 7
        %v1749 = vsub.s32 6, %v1748
        %v1750 = vrot.slane %v915, %v1749
        %v1751 = vlaneseq
        %v1752 = vshrl.u32 %v1751, 7
        %v1753 = vsub.s32 7, %v1752
        %v1754 = vrot.slane %v915, %v1753
        %v1755 = vlaneseq
        %v1756 = vshrl.u32 %v1755, 7
        %v1757 = vsub.s32 0, %v1756
        %v1758 = vrot.slane %v916, %v1757
        %v1759 = vlaneseq
        %v1760 = vshrl.u32 %v1759, 7
        %v1761 = vsub.s32 1, %v1760
        %v1762 = vrot.slane %v916, %v1761
        %v1763 = vlaneseq
        %v1764 = vshrl.u32 %v1763, 7
        %v1765 = vsub.s32 2, %v1764
        %v1766 = vrot.slane %v916, %v1765
        %v1767 = vlaneseq
        %v1768 = vshrl.u32 %v1767, 7
        %v1769 = vsub.s32 3, %v1768
        %v1770 = vrot.slane %v916, %v1769
        %v1771 = vlaneseq
        %v1772 = vshrl.u32 %v1771, 7
        %v1773 = vsub.s32 4, %v1772
        %v1774 = vrot.slane %v916, %v1773
        %v1775 = vlaneseq
        %v1776 = vshrl.u32 %v1775, 7
        %v1777 = vsub.s32 5, %v1776
        %v1778 = vrot.slane %v916, %v1777
        %v1779 = vlaneseq
        %v1780 = vshrl.u32 %v1779, 7
        %v1781 = vsub.s32 6, %v1780
        %v1782 = vrot.slane %v916, %v1781
        %v1783 = vlaneseq
        %v1784 = vshrl.u32 %v1783, 7
        %v1785 = vsub.s32 7, %v1784
        %v1786 = vrot.slane %v916, %v1785
        %v1787 = vlaneseq
        %v1788 = vshrl.u32 %v1787, 7
        %v1789 = vsub.s32 0, %v1788
        %v1790 = vrot.slane %v917, %v1789
        %v1791 = vlaneseq
        %v1792 = vshrl.u32 %v1791, 7
        %v1793 = vsub.s32 1, %v1792
        %v1794 = vrot.slane %v917, %v1793
        %v1795 = vlaneseq
        %v1796 = vshrl.u32 %v1795, 7
        %v1797 = vsub.s32 2, %v1796
        %v1798 = vrot.slane %v917, %v1797
        %v1799 = vlaneseq
        %v1800 = vshrl.u32 %v1799, 7
        %v1801 = vsub.s32 3, %v1800
        %v1802 = vrot.slane %v917, %v1801
        %v1803 = vlaneseq
        %v1804 = vshrl.u32 %v1803, 7
        %v1805 = vsub.s32 4, %v1804
        %v1806 = vrot.slane %v917, %v1805
        %v1807 = vlaneseq
        %v1808 = vshrl.u32 %v1807, 7
        %v1809 = vsub.s32 5, %v1808
        %v1810 = vrot.slane %v917, %v1809
        %v1811 = vlaneseq
        %v1812 = vshrl.u32 %v1811, 7
        %v1813 = vsub.s32 6, %v1812
        %v1814 = vrot.slane %v917, %v1813
        %v1815 = vlaneseq
        %v1816 = vshrl.u32 %v1815, 7
        %v1817 = vsub.s32 7, %v1816
        %v1818 = vrot.slane %v917, %v1817
        %v1819 = vlaneseq
        %v1820 = vshrl.u32 %v1819, 7
        %v1821 = vsub.s32 0, %v1820
        %v1822 = vrot.slane %v918, %v1821
        %v1823 = vlaneseq
        %v1824 = vshrl.u32 %v1823, 7
        %v1825 = vsub.s32 1, %v1824
        %v1826 = vrot.slane %v918, %v1825
        %v1827 = vlaneseq
        %v1828 = vshrl.u32 %v1827, 7
        %v1829 = vsub.s32 2, %v1828
        %v1830 = vrot.slane %v918, %v1829
        %v1831 = vlaneseq
        %v1832 = vshrl.u32 %v1831, 7
        %v1833 = vsub.s32 3, %v1832
        %v1834 = vrot.slane %v918, %v1833
        %v1835 = vlaneseq
        %v1836 = vshrl.u32 %v1835, 7
        %v1837 = vsub.s32 4, %v1836
        %v1838 = vrot.slane %v918, %v1837
        %v1839 = vlaneseq
        %v1840 = vshrl.u32 %v1839, 7
        %v1841 = vsub.s32 5, %v1840
        %v1842 = vrot.slane %v918, %v1841
        %v1843 = vlaneseq
        %v1844 = vshrl.u32 %v1843, 7
        %v1845 = vsub.s32 6, %v1844
        %v1846 = vrot.slane %v918, %v1845
        %v1847 = vlaneseq
        %v1848 = vshrl.u32 %v1847, 7
        %v1849 = vsub.s32 7, %v1848
        %v1850 = vrot.slane %v918, %v1849
        %v1851 = vlaneseq
        %v1852 = vshrl.u32 %v1851, 7
        %v1853 = vsub.s32 0, %v1852
        %v1854 = vrot.slane %v919, %v1853
        %v1855 = vlaneseq
        %v1856 = vshrl.u32 %v1855, 7
        %v1857 = vsub.s32 1, %v1856
        %v1858 = vrot.slane %v919, %v1857
        %v1859 = vlaneseq
        %v1860 = vshrl.u32 %v1859, 7
        %v1861 = vsub.s32 2, %v1860
        %v1862 = vrot.slane %v919, %v1861
        %v1863 = vlaneseq
        %v1864 = vshrl.u32 %v1863, 7
        %v1865 = vsub.s32 3, %v1864
        %v1866 = vrot.slane %v919, %v1865
        %v1867 = vlaneseq
        %v1868 = vshrl.u32 %v1867, 7
        %v1869 = vsub.s32 4, %v1868
        %v1870 = vrot.slane %v919, %v1869
        %v1871 = vlaneseq
        %v1872 = vshrl.u32 %v1871, 7
        %v1873 = vsub.s32 5, %v1872
        %v1874 = vrot.slane %v919, %v1873
        %v1875 = vlaneseq
        %v1876 = vshrl.u32 %v1875, 7
        %v1877 = vsub.s32 6, %v1876
        %v1878 = vrot.slane %v919, %v1877
        %v1879 = vlaneseq
        %v1880 = vshrl.u32 %v1879, 7
        %v1881 = vsub.s32 7, %v1880
        %v1882 = vrot.slane %v919, %v1881
        %v1883 = vlaneseq
        %v1884 = vshrl.u32 %v1883, 7
        %v1885 = vsub.s32 0, %v1884
        %v1886 = vrot.slane %v920, %v1885
        %v1887 = vlaneseq
        %v1888 = vshrl.u32 %v1887, 7
        %v1889 = vsub.s32 1, %v1888
        %v1890 = vrot.slane %v920, %v1889
        %v1891 = vlaneseq
        %v1892 = vshrl.u32 %v1891, 7
        %v1893 = vsub.s32 2, %v1892
        %v1894 = vrot.slane %v920, %v1893
        %v1895 = vlaneseq
        %v1896 = vshrl.u32 %v1895, 7
        %v1897 = vsub.s32 3, %v1896
        %v1898 = vrot.slane %v920, %v1897
        %v1899 = vlaneseq
        %v1900 = vshrl.u32 %v1899, 7
        %v1901 = vsub.s32 4, %v1900
        %v1902 = vrot.slane %v920, %v1901
        %v1903 = vlaneseq
        %v1904 = vshrl.u32 %v1903, 7
        %v1905 = vsub.s32 5, %v1904
        %v1906 = vrot.slane %v920, %v1905
        %v1907 = vlaneseq
        %v1908 = vshrl.u32 %v1907, 7
        %v1909 = vsub.s32 6, %v1908
        %v1910 = vrot.slane %v920, %v1909
        %v1911 = vlaneseq
        %v1912 = vshrl.u32 %v1911, 7
        %v1913 = vsub.s32 7, %v1912
        %v1914 = vrot.slane %v920, %v1913
        %v1915 = vlaneseq
        %v1916 = vshrl.u32 %v1915, 7
        %v1917 = vsub.s32 0, %v1916
        %v1918 = vrot.slane %v921, %v1917
        %v1919 = vlaneseq
        %v1920 = vshrl.u32 %v1919, 7
        %v1921 = vsub.s32 1, %v1920
        %v1922 = vrot.slane %v921, %v1921
        %v1923 = vlaneseq
        %v1924 = vshrl.u32 %v1923, 7
        %v1925 = vsub.s32 2, %v1924
        %v1926 = vrot.slane %v921, %v1925
        %v1927 = vlaneseq
        %v1928 = vshrl.u32 %v1927, 7
        %v1929 = vsub.s32 3, %v1928
        %v1930 = vrot.slane %v921, %v1929
        %v1931 = vlaneseq
        %v1932 = vshrl.u32 %v1931, 7
        %v1933 = vsub.s32 4, %v1932
        %v1934 = vrot.slane %v921, %v1933
        %v1935 = vlaneseq
        %v1936 = vshrl.u32 %v1935, 7
        %v1937 = vsub.s32 5, %v1936
        %v1938 = vrot.slane %v921, %v1937
        %v1939 = vlaneseq
        %v1940 = vshrl.u32 %v1939, 7
        %v1941 = vsub.s32 6, %v1940
        %v1942 = vrot.slane %v921, %v1941
        %v1943 = vlaneseq
        %v1944 = vshrl.u32 %v1943, 7
        %v1945 = vsub.s32 7, %v1944
        %v1946 = vrot.slane %v921, %v1945
        %v1947 = vlaneseq
        %v1948 = vshrl.u32 %v1947, 7
        %v1949 = vsub.s32 0, %v1948
        %v1950 = vrot.slane %v922, %v1949
        %v1951 = vlaneseq
        %v1952 = vshrl.u32 %v1951, 7
        %v1953 = vsub.s32 1, %v1952
        %v1954 = vrot.slane %v922, %v1953
        %v1955 = vlaneseq
        %v1956 = vshrl.u32 %v1955, 7
        %v1957 = vsub.s32 2, %v1956
        %v1958 = vrot.slane %v922, %v1957
        %v1959 = vlaneseq
        %v1960 = vshrl.u32 %v1959, 7
        %v1961 = vsub.s32 3, %v1960
        %v1962 = vrot.slane %v922, %v1961
        %v1963 = vlaneseq
        %v1964 = vshrl.u32 %v1963, 7
        %v1965 = vsub.s32 4, %v1964
        %v1966 = vrot.slane %v922, %v1965
        %v1967 = vlaneseq
        %v1968 = vshrl.u32 %v1967, 7
        %v1969 = vsub.s32 5, %v1968
        %v1970 = vrot.slane %v922, %v1969
        %v1971 = vlaneseq
        %v1972 = vshrl.u32 %v1971, 7
        %v1973 = vsub.s32 6, %v1972
        %v1974 = vrot.slane %v922, %v1973
        %v1975 = vlaneseq
        %v1976 = vshrl.u32 %v1975, 7
        %v1977 = vsub.s32 7, %v1976
        %v1978 = vrot.slane %v922, %v1977
        %v1979 = vcombine.low %v958, %v962
        %v1980 = vcombine.low %v966, %v970
        %v1981 = vcombine.low %v974, %v978
        %v1982 = vcombine.low %v982, %v986
        %v1984 = vunpack.c.l.s4 1966171168
        %v1985 = vunpack.c.0.s8 %v1984
        %v1986 = vlaneseq
        %v1987 = vshrl.u32 %v1986, 7
        %v1988 = vsub.s32 %v1985, %v1987
        %v1989 = vrot.slane %v1979, %v1988
        %v1991 = vunpack.c.l.s4 1966171168
        %v1992 = vunpack.c.0.s8 %v1991
        %v1993 = vlaneseq
        %v1994 = vshrl.u32 %v1993, 7
        %v1995 = vsub.s32 %v1992, %v1994
        %v1996 = vrot.slane %v1980, %v1995
        %v1998 = vunpack.c.l.s4 1966171168
        %v1999 = vunpack.c.0.s8 %v1998
        %v2000 = vlaneseq
        %v2001 = vshrl.u32 %v2000, 7
        %v2002 = vsub.s32 %v1999, %v2001
        %v2003 = vrot.slane %v1981, %v2002
        %v2005 = vunpack.c.l.s4 1966171168
        %v2006 = vunpack.c.0.s8 %v2005
        %v2007 = vlaneseq
        %v2008 = vshrl.u32 %v2007, 7
        %v2009 = vsub.s32 %v2006, %v2008
        %v2010 = vrot.slane %v1982, %v2009
        %v2011 = vcombine.low %v1989, %v1996
        %v2012 = vcombine.low %v2003, %v2010
        %v2014 = vunpack.c.l.s4 1966171168
        %v2015 = vunpack.c.0.s8 %v2014
        %v2016 = vlaneseq
        %v2017 = vshrl.u32 %v2016, 7
        %v2018 = vsub.s32 %v2015, %v2017
        %v2019 = vrot.slane %v2011, %v2018
        %v2021 = vunpack.c.l.s4 1966171168
        %v2022 = vunpack.c.0.s8 %v2021
        %v2023 = vlaneseq
        %v2024 = vshrl.u32 %v2023, 7
        %v2025 = vsub.s32 %v2022, %v2024
        %v2026 = vrot.slane %v2012, %v2025
        %v2027 = vcombine.low %v2019, %v2026
        %v2028 = vcombine.low %v990, %v994
        %v2029 = vcombine.low %v998, %v1002
        %v2030 = vcombine.low %v1006, %v1010
        %v2031 = vcombine.low %v1014, %v1018
        %v2033 = vunpack.c.l.s4 1966171168
        %v2034 = vunpack.c.0.s8 %v2033
        %v2035 = vlaneseq
        %v2036 = vshrl.u32 %v2035, 7
        %v2037 = vsub.s32 %v2034, %v2036
        %v2038 = vrot.slane %v2028, %v2037
        %v2040 = vunpack.c.l.s4 1966171168
        %v2041 = vunpack.c.0.s8 %v2040
        %v2042 = vlaneseq
        %v2043 = vshrl.u32 %v2042, 7
        %v2044 = vsub.s32 %v2041, %v2043
        %v2045 = vrot.slane %v2029, %v2044
        %v2047 = vunpack.c.l.s4 1966171168
        %v2048 = vunpack.c.0.s8 %v2047
        %v2049 = vlaneseq
        %v2050 = vshrl.u32 %v2049, 7
        %v2051 = vsub.s32 %v2048, %v2050
        %v2052 = vrot.slane %v2030, %v2051
        %v2054 = vunpack.c.l.s4 1966171168
        %v2055 = vunpack.c.0.s8 %v2054
        %v2056 = vlaneseq
        %v2057 = vshrl.u32 %v2056, 7
        %v2058 = vsub.s32 %v2055, %v2057
        %v2059 = vrot.slane %v2031, %v2058
        %v2060 = vcombine.low %v2038, %v2045
        %v2061 = vcombine.low %v2052, %v2059
        %v2063 = vunpack.c.l.s4 1966171168
        %v2064 = vunpack.c.0.s8 %v2063
        %v2065 = vlaneseq
        %v2066 = vshrl.u32 %v2065, 7
        %v2067 = vsub.s32 %v2064, %v2066
        %v2068 = vrot.slane %v2060, %v2067
        %v2070 = vunpack.c.l.s4 1966171168
        %v2071 = vunpack.c.0.s8 %v2070
        %v2072 = vlaneseq
        %v2073 = vshrl.u32 %v2072, 7
        %v2074 = vsub.s32 %v2071, %v2073
        %v2075 = vrot.slane %v2061, %v2074
        %v2076 = vcombine.low %v2068, %v2075
        %v2077 = vcombine.low %v1022, %v1026
        %v2078 = vcombine.low %v1030, %v1034
        %v2079 = vcombine.low %v1038, %v1042
        %v2080 = vcombine.low %v1046, %v1050
        %v2082 = vunpack.c.l.s4 1966171168
        %v2083 = vunpack.c.0.s8 %v2082
        %v2084 = vlaneseq
        %v2085 = vshrl.u32 %v2084, 7
        %v2086 = vsub.s32 %v2083, %v2085
        %v2087 = vrot.slane %v2077, %v2086
        %v2089 = vunpack.c.l.s4 1966171168
        %v2090 = vunpack.c.0.s8 %v2089
        %v2091 = vlaneseq
        %v2092 = vshrl.u32 %v2091, 7
        %v2093 = vsub.s32 %v2090, %v2092
        %v2094 = vrot.slane %v2078, %v2093
        %v2096 = vunpack.c.l.s4 1966171168
        %v2097 = vunpack.c.0.s8 %v2096
        %v2098 = vlaneseq
        %v2099 = vshrl.u32 %v2098, 7
        %v2100 = vsub.s32 %v2097, %v2099
        %v2101 = vrot.slane %v2079, %v2100
        %v2103 = vunpack.c.l.s4 1966171168
        %v2104 = vunpack.c.0.s8 %v2103
        %v2105 = vlaneseq
        %v2106 = vshrl.u32 %v2105, 7
        %v2107 = vsub.s32 %v2104, %v2106
        %v2108 = vrot.slane %v2080, %v2107
        %v2109 = vcombine.low %v2087, %v2094
        %v2110 = vcombine.low %v2101, %v2108
        %v2112 = vunpack.c.l.s4 1966171168
        %v2113 = vunpack.c.0.s8 %v2112
        %v2114 = vlaneseq
        %v2115 = vshrl.u32 %v2114, 7
        %v2116 = vsub.s32 %v2113, %v2115
        %v2117 = vrot.slane %v2109, %v2116
        %v2119 = vunpack.c.l.s4 1966171168
        %v2120 = vunpack.c.0.s8 %v2119
        %v2121 = vlaneseq
        %v2122 = vshrl.u32 %v2121, 7
        %v2123 = vsub.s32 %v2120, %v2122
        %v2124 = vrot.slane %v2110, %v2123
        %v2125 = vcombine.low %v2117, %v2124
        %v2126 = vcombine.low %v1054, %v1058
        %v2127 = vcombine.low %v1062, %v1066
        %v2128 = vcombine.low %v1070, %v1074
        %v2129 = vcombine.low %v1078, %v1082
        %v2131 = vunpack.c.l.s4 1966171168
        %v2132 = vunpack.c.0.s8 %v2131
        %v2133 = vlaneseq
        %v2134 = vshrl.u32 %v2133, 7
        %v2135 = vsub.s32 %v2132, %v2134
        %v2136 = vrot.slane %v2126, %v2135
        %v2138 = vunpack.c.l.s4 1966171168
        %v2139 = vunpack.c.0.s8 %v2138
        %v2140 = vlaneseq
        %v2141 = vshrl.u32 %v2140, 7
        %v2142 = vsub.s32 %v2139, %v2141
        %v2143 = vrot.slane %v2127, %v2142
        %v2145 = vunpack.c.l.s4 1966171168
        %v2146 = vunpack.c.0.s8 %v2145
        %v2147 = vlaneseq
        %v2148 = vshrl.u32 %v2147, 7
        %v2149 = vsub.s32 %v2146, %v2148
        %v2150 = vrot.slane %v2128, %v2149
        %v2152 = vunpack.c.l.s4 1966171168
        %v2153 = vunpack.c.0.s8 %v2152
        %v2154 = vlaneseq
        %v2155 = vshrl.u32 %v2154, 7
        %v2156 = vsub.s32 %v2153, %v2155
        %v2157 = vrot.slane %v2129, %v2156
        %v2158 = vcombine.low %v2136, %v2143
        %v2159 = vcombine.low %v2150, %v2157
        %v2161 = vunpack.c.l.s4 1966171168
        %v2162 = vunpack.c.0.s8 %v2161
        %v2163 = vlaneseq
        %v2164 = vshrl.u32 %v2163, 7
        %v2165 = vsub.s32 %v2162, %v2164
        %v2166 = vrot.slane %v2158, %v2165
        %v2168 = vunpack.c.l.s4 1966171168
        %v2169 = vunpack.c.0.s8 %v2168
        %v2170 = vlaneseq
        %v2171 = vshrl.u32 %v2170, 7
        %v2172 = vsub.s32 %v2169, %v2171
        %v2173 = vrot.slane %v2159, %v2172
        %v2174 = vcombine.low %v2166, %v2173
        %v2175 = vcombine.low %v1086, %v1090
        %v2176 = vcombine.low %v1094, %v1098
        %v2177 = vcombine.low %v1102, %v1106
        %v2178 = vcombine.low %v1110, %v1114
        %v2180 = vunpack.c.l.s4 1966171168
        %v2181 = vunpack.c.0.s8 %v2180
        %v2182 = vlaneseq
        %v2183 = vshrl.u32 %v2182, 7
        %v2184 = vsub.s32 %v2181, %v2183
        %v2185 = vrot.slane %v2175, %v2184
        %v2187 = vunpack.c.l.s4 1966171168
        %v2188 = vunpack.c.0.s8 %v2187
        %v2189 = vlaneseq
        %v2190 = vshrl.u32 %v2189, 7
        %v2191 = vsub.s32 %v2188, %v2190
        %v2192 = vrot.slane %v2176, %v2191
        %v2194 = vunpack.c.l.s4 1966171168
        %v2195 = vunpack.c.0.s8 %v2194
        %v2196 = vlaneseq
        %v2197 = vshrl.u32 %v2196, 7
        %v2198 = vsub.s32 %v2195, %v2197
        %v2199 = vrot.slane %v2177, %v2198
        %v2201 = vunpack.c.l.s4 1966171168
        %v2202 = vunpack.c.0.s8 %v2201
        %v2203 = vlaneseq
        %v2204 = vshrl.u32 %v2203, 7
        %v2205 = vsub.s32 %v2202, %v2204
        %v2206 = vrot.slane %v2178, %v2205
        %v2207 = vcombine.low %v2185, %v2192
        %v2208 = vcombine.low %v2199, %v2206
        %v2210 = vunpack.c.l.s4 1966171168
        %v2211 = vunpack.c.0.s8 %v2210
        %v2212 = vlaneseq
        %v2213 = vshrl.u32 %v2212, 7
        %v2214 = vsub.s32 %v2211, %v2213
        %v2215 = vrot.slane %v2207, %v2214
        %v2217 = vunpack.c.l.s4 1966171168
        %v2218 = vunpack.c.0.s8 %v2217
        %v2219 = vlaneseq
        %v2220 = vshrl.u32 %v2219, 7
        %v2221 = vsub.s32 %v2218, %v2220
        %v2222 = vrot.slane %v2208, %v2221
        %v2223 = vcombine.low %v2215, %v2222
        %v2224 = vcombine.low %v1118, %v1122
        %v2225 = vcombine.low %v1126, %v1130
        %v2226 = vcombine.low %v1134, %v1138
        %v2227 = vcombine.low %v1142, %v1146
        %v2229 = vunpack.c.l.s4 1966171168
        %v2230 = vunpack.c.0.s8 %v2229
        %v2231 = vlaneseq
        %v2232 = vshrl.u32 %v2231, 7
        %v2233 = vsub.s32 %v2230, %v2232
        %v2234 = vrot.slane %v2224, %v2233
        %v2236 = vunpack.c.l.s4 1966171168
        %v2237 = vunpack.c.0.s8 %v2236
        %v2238 = vlaneseq
        %v2239 = vshrl.u32 %v2238, 7
        %v2240 = vsub.s32 %v2237, %v2239
        %v2241 = vrot.slane %v2225, %v2240
        %v2243 = vunpack.c.l.s4 1966171168
        %v2244 = vunpack.c.0.s8 %v2243
        %v2245 = vlaneseq
        %v2246 = vshrl.u32 %v2245, 7
        %v2247 = vsub.s32 %v2244, %v2246
        %v2248 = vrot.slane %v2226, %v2247
        %v2250 = vunpack.c.l.s4 1966171168
        %v2251 = vunpack.c.0.s8 %v2250
        %v2252 = vlaneseq
        %v2253 = vshrl.u32 %v2252, 7
        %v2254 = vsub.s32 %v2251, %v2253
        %v2255 = vrot.slane %v2227, %v2254
        %v2256 = vcombine.low %v2234, %v2241
        %v2257 = vcombine.low %v2248, %v2255
        %v2259 = vunpack.c.l.s4 1966171168
        %v2260 = vunpack.c.0.s8 %v2259
        %v2261 = vlaneseq
        %v2262 = vshrl.u32 %v2261, 7
        %v2263 = vsub.s32 %v2260, %v2262
        %v2264 = vrot.slane %v2256, %v2263
        %v2266 = vunpack.c.l.s4 1966171168
        %v2267 = vunpack.c.0.s8 %v2266
        %v2268 = vlaneseq
        %v2269 = vshrl.u32 %v2268, 7
        %v2270 = vsub.s32 %v2267, %v2269
        %v2271 = vrot.slane %v2257, %v2270
        %v2272 = vcombine.low %v2264, %v2271
        %v2273 = vcombine.low %v1150, %v1154
        %v2274 = vcombine.low %v1158, %v1162
        %v2275 = vcombine.low %v1166, %v1170
        %v2276 = vcombine.low %v1174, %v1178
        %v2278 = vunpack.c.l.s4 1966171168
        %v2279 = vunpack.c.0.s8 %v2278
        %v2280 = vlaneseq
        %v2281 = vshrl.u32 %v2280, 7
        %v2282 = vsub.s32 %v2279, %v2281
        %v2283 = vrot.slane %v2273, %v2282
        %v2285 = vunpack.c.l.s4 1966171168
        %v2286 = vunpack.c.0.s8 %v2285
        %v2287 = vlaneseq
        %v2288 = vshrl.u32 %v2287, 7
        %v2289 = vsub.s32 %v2286, %v2288
        %v2290 = vrot.slane %v2274, %v2289
        %v2292 = vunpack.c.l.s4 1966171168
        %v2293 = vunpack.c.0.s8 %v2292
        %v2294 = vlaneseq
        %v2295 = vshrl.u32 %v2294, 7
        %v2296 = vsub.s32 %v2293, %v2295
        %v2297 = vrot.slane %v2275, %v2296
        %v2299 = vunpack.c.l.s4 1966171168
        %v2300 = vunpack.c.0.s8 %v2299
        %v2301 = vlaneseq
        %v2302 = vshrl.u32 %v2301, 7
        %v2303 = vsub.s32 %v2300, %v2302
        %v2304 = vrot.slane %v2276, %v2303
        %v2305 = vcombine.low %v2283, %v2290
        %v2306 = vcombine.low %v2297, %v2304
        %v2308 = vunpack.c.l.s4 1966171168
        %v2309 = vunpack.c.0.s8 %v2308
        %v2310 = vlaneseq
        %v2311 = vshrl.u32 %v2310, 7
        %v2312 = vsub.s32 %v2309, %v2311
        %v2313 = vrot.slane %v2305, %v2312
        %v2315 = vunpack.c.l.s4 1966171168
        %v2316 = vunpack.c.0.s8 %v2315
        %v2317 = vlaneseq
        %v2318 = vshrl.u32 %v2317, 7
        %v2319 = vsub.s32 %v2316, %v2318
        %v2320 = vrot.slane %v2306, %v2319
        %v2321 = vcombine.low %v2313, %v2320
        %v2322 = vcombine.low %v1182, %v1186
        %v2323 = vcombine.low %v1190, %v1194
        %v2324 = vcombine.low %v1198, %v1202
        %v2325 = vcombine.low %v1206, %v1210
        %v2327 = vunpack.c.l.s4 1966171168
        %v2328 = vunpack.c.0.s8 %v2327
        %v2329 = vlaneseq
        %v2330 = vshrl.u32 %v2329, 7
        %v2331 = vsub.s32 %v2328, %v2330
        %v2332 = vrot.slane %v2322, %v2331
        %v2334 = vunpack.c.l.s4 1966171168
        %v2335 = vunpack.c.0.s8 %v2334
        %v2336 = vlaneseq
        %v2337 = vshrl.u32 %v2336, 7
        %v2338 = vsub.s32 %v2335, %v2337
        %v2339 = vrot.slane %v2323, %v2338
        %v2341 = vunpack.c.l.s4 1966171168
        %v2342 = vunpack.c.0.s8 %v2341
        %v2343 = vlaneseq
        %v2344 = vshrl.u32 %v2343, 7
        %v2345 = vsub.s32 %v2342, %v2344
        %v2346 = vrot.slane %v2324, %v2345
        %v2348 = vunpack.c.l.s4 1966171168
        %v2349 = vunpack.c.0.s8 %v2348
        %v2350 = vlaneseq
        %v2351 = vshrl.u32 %v2350, 7
        %v2352 = vsub.s32 %v2349, %v2351
        %v2353 = vrot.slane %v2325, %v2352
        %v2354 = vcombine.low %v2332, %v2339
        %v2355 = vcombine.low %v2346, %v2353
        %v2357 = vunpack.c.l.s4 1966171168
        %v2358 = vunpack.c.0.s8 %v2357
        %v2359 = vlaneseq
        %v2360 = vshrl.u32 %v2359, 7
        %v2361 = vsub.s32 %v2358, %v2360
        %v2362 = vrot.slane %v2354, %v2361
        %v2364 = vunpack.c.l.s4 1966171168
        %v2365 = vunpack.c.0.s8 %v2364
        %v2366 = vlaneseq
        %v2367 = vshrl.u32 %v2366, 7
        %v2368 = vsub.s32 %v2365, %v2367
        %v2369 = vrot.slane %v2355, %v2368
        %v2370 = vcombine.low %v2362, %v2369
        %v2371 = vcombine.low %v1214, %v1218
        %v2372 = vcombine.low %v1222, %v1226
        %v2373 = vcombine.low %v1230, %v1234
        %v2374 = vcombine.low %v1238, %v1242
        %v2376 = vunpack.c.l.s4 1966171168
        %v2377 = vunpack.c.0.s8 %v2376
        %v2378 = vlaneseq
        %v2379 = vshrl.u32 %v2378, 7
        %v2380 = vsub.s32 %v2377, %v2379
        %v2381 = vrot.slane %v2371, %v2380
        %v2383 = vunpack.c.l.s4 1966171168
        %v2384 = vunpack.c.0.s8 %v2383
        %v2385 = vlaneseq
        %v2386 = vshrl.u32 %v2385, 7
        %v2387 = vsub.s32 %v2384, %v2386
        %v2388 = vrot.slane %v2372, %v2387
        %v2390 = vunpack.c.l.s4 1966171168
        %v2391 = vunpack.c.0.s8 %v2390
        %v2392 = vlaneseq
        %v2393 = vshrl.u32 %v2392, 7
        %v2394 = vsub.s32 %v2391, %v2393
        %v2395 = vrot.slane %v2373, %v2394
        %v2397 = vunpack.c.l.s4 1966171168
        %v2398 = vunpack.c.0.s8 %v2397
        %v2399 = vlaneseq
        %v2400 = vshrl.u32 %v2399, 7
        %v2401 = vsub.s32 %v2398, %v2400
        %v2402 = vrot.slane %v2374, %v2401
        %v2403 = vcombine.low %v2381, %v2388
        %v2404 = vcombine.low %v2395, %v2402
        %v2406 = vunpack.c.l.s4 1966171168
        %v2407 = vunpack.c.0.s8 %v2406
        %v2408 = vlaneseq
        %v2409 = vshrl.u32 %v2408, 7
        %v2410 = vsub.s32 %v2407, %v2409
        %v2411 = vrot.slane %v2403, %v2410
        %v2413 = vunpack.c.l.s4 1966171168
        %v2414 = vunpack.c.0.s8 %v2413
        %v2415 = vlaneseq
        %v2416 = vshrl.u32 %v2415, 7
        %v2417 = vsub.s32 %v2414, %v2416
        %v2418 = vrot.slane %v2404, %v2417
        %v2419 = vcombine.low %v2411, %v2418
        %v2420 = vcombine.low %v1246, %v1250
        %v2421 = vcombine.low %v1254, %v1258
        %v2422 = vcombine.low %v1262, %v1266
        %v2423 = vcombine.low %v1270, %v1274
        %v2425 = vunpack.c.l.s4 1966171168
        %v2426 = vunpack.c.0.s8 %v2425
        %v2427 = vlaneseq
        %v2428 = vshrl.u32 %v2427, 7
        %v2429 = vsub.s32 %v2426, %v2428
        %v2430 = vrot.slane %v2420, %v2429
        %v2432 = vunpack.c.l.s4 1966171168
        %v2433 = vunpack.c.0.s8 %v2432
        %v2434 = vlaneseq
        %v2435 = vshrl.u32 %v2434, 7
        %v2436 = vsub.s32 %v2433, %v2435
        %v2437 = vrot.slane %v2421, %v2436
        %v2439 = vunpack.c.l.s4 1966171168
        %v2440 = vunpack.c.0.s8 %v2439
        %v2441 = vlaneseq
        %v2442 = vshrl.u32 %v2441, 7
        %v2443 = vsub.s32 %v2440, %v2442
        %v2444 = vrot.slane %v2422, %v2443
        %v2446 = vunpack.c.l.s4 1966171168
        %v2447 = vunpack.c.0.s8 %v2446
        %v2448 = vlaneseq
        %v2449 = vshrl.u32 %v2448, 7
        %v2450 = vsub.s32 %v2447, %v2449
        %v2451 = vrot.slane %v2423, %v2450
        %v2452 = vcombine.low %v2430, %v2437
        %v2453 = vcombine.low %v2444, %v2451
        %v2455 = vunpack.c.l.s4 1966171168
        %v2456 = vunpack.c.0.s8 %v2455
        %v2457 = vlaneseq
        %v2458 = vshrl.u32 %v2457, 7
        %v2459 = vsub.s32 %v2456, %v2458
        %v2460 = vrot.slane %v2452, %v2459
        %v2462 = vunpack.c.l.s4 1966171168
        %v2463 = vunpack.c.0.s8 %v2462
        %v2464 = vlaneseq
        %v2465 = vshrl.u32 %v2464, 7
        %v2466 = vsub.s32 %v2463, %v2465
        %v2467 = vrot.slane %v2453, %v2466
        %v2468 = vcombine.low %v2460, %v2467
        %v2469 = vcombine.low %v1278, %v1282
        %v2470 = vcombine.low %v1286, %v1290
        %v2471 = vcombine.low %v1294, %v1298
        %v2472 = vcombine.low %v1302, %v1306
        %v2474 = vunpack.c.l.s4 1966171168
        %v2475 = vunpack.c.0.s8 %v2474
        %v2476 = vlaneseq
        %v2477 = vshrl.u32 %v2476, 7
        %v2478 = vsub.s32 %v2475, %v2477
        %v2479 = vrot.slane %v2469, %v2478
        %v2481 = vunpack.c.l.s4 1966171168
        %v2482 = vunpack.c.0.s8 %v2481
        %v2483 = vlaneseq
        %v2484 = vshrl.u32 %v2483, 7
        %v2485 = vsub.s32 %v2482, %v2484
        %v2486 = vrot.slane %v2470, %v2485
        %v2488 = vunpack.c.l.s4 1966171168
        %v2489 = vunpack.c.0.s8 %v2488
        %v2490 = vlaneseq
        %v2491 = vshrl.u32 %v2490, 7
        %v2492 = vsub.s32 %v2489, %v2491
        %v2493 = vrot.slane %v2471, %v2492
        %v2495 = vunpack.c.l.s4 1966171168
        %v2496 = vunpack.c.0.s8 %v2495
        %v2497 = vlaneseq
        %v2498 = vshrl.u32 %v2497, 7
        %v2499 = vsub.s32 %v2496, %v2498
        %v2500 = vrot.slane %v2472, %v2499
        %v2501 = vcombine.low %v2479, %v2486
        %v2502 = vcombine.low %v2493, %v2500
        %v2504 = vunpack.c.l.s4 1966171168
        %v2505 = vunpack.c.0.s8 %v2504
        %v2506 = vlaneseq
        %v2507 = vshrl.u32 %v2506, 7
        %v2508 = vsub.s32 %v2505, %v2507
        %v2509 = vrot.slane %v2501, %v2508
        %v2511 = vunpack.c.l.s4 1966171168
        %v2512 = vunpack.c.0.s8 %v2511
        %v2513 = vlaneseq
        %v2514 = vshrl.u32 %v2513, 7
        %v2515 = vsub.s32 %v2512, %v2514
        %v2516 = vrot.slane %v2502, %v2515
        %v2517 = vcombine.low %v2509, %v2516
        %v2518 = vcombine.low %v1310, %v1314
        %v2519 = vcombine.low %v1318, %v1322
        %v2520 = vcombine.low %v1326, %v1330
        %v2521 = vcombine.low %v1334, %v1338
        %v2523 = vunpack.c.l.s4 1966171168
        %v2524 = vunpack.c.0.s8 %v2523
        %v2525 = vlaneseq
        %v2526 = vshrl.u32 %v2525, 7
        %v2527 = vsub.s32 %v2524, %v2526
        %v2528 = vrot.slane %v2518, %v2527
        %v2530 = vunpack.c.l.s4 1966171168
        %v2531 = vunpack.c.0.s8 %v2530
        %v2532 = vlaneseq
        %v2533 = vshrl.u32 %v2532, 7
        %v2534 = vsub.s32 %v2531, %v2533
        %v2535 = vrot.slane %v2519, %v2534
        %v2537 = vunpack.c.l.s4 1966171168
        %v2538 = vunpack.c.0.s8 %v2537
        %v2539 = vlaneseq
        %v2540 = vshrl.u32 %v2539, 7
        %v2541 = vsub.s32 %v2538, %v2540
        %v2542 = vrot.slane %v2520, %v2541
        %v2544 = vunpack.c.l.s4 1966171168
        %v2545 = vunpack.c.0.s8 %v2544
        %v2546 = vlaneseq
        %v2547 = vshrl.u32 %v2546, 7
        %v2548 = vsub.s32 %v2545, %v2547
        %v2549 = vrot.slane %v2521, %v2548
        %v2550 = vcombine.low %v2528, %v2535
        %v2551 = vcombine.low %v2542, %v2549
        %v2553 = vunpack.c.l.s4 1966171168
        %v2554 = vunpack.c.0.s8 %v2553
        %v2555 = vlaneseq
        %v2556 = vshrl.u32 %v2555, 7
        %v2557 = vsub.s32 %v2554, %v2556
        %v2558 = vrot.slane %v2550, %v2557
        %v2560 = vunpack.c.l.s4 1966171168
        %v2561 = vunpack.c.0.s8 %v2560
        %v2562 = vlaneseq
        %v2563 = vshrl.u32 %v2562, 7
        %v2564 = vsub.s32 %v2561, %v2563
        %v2565 = vrot.slane %v2551, %v2564
        %v2566 = vcombine.low %v2558, %v2565
        %v2567 = vcombine.low %v1342, %v1346
        %v2568 = vcombine.low %v1350, %v1354
        %v2569 = vcombine.low %v1358, %v1362
        %v2570 = vcombine.low %v1366, %v1370
        %v2572 = vunpack.c.l.s4 1966171168
        %v2573 = vunpack.c.0.s8 %v2572
        %v2574 = vlaneseq
        %v2575 = vshrl.u32 %v2574, 7
        %v2576 = vsub.s32 %v2573, %v2575
        %v2577 = vrot.slane %v2567, %v2576
        %v2579 = vunpack.c.l.s4 1966171168
        %v2580 = vunpack.c.0.s8 %v2579
        %v2581 = vlaneseq
        %v2582 = vshrl.u32 %v2581, 7
        %v2583 = vsub.s32 %v2580, %v2582
        %v2584 = vrot.slane %v2568, %v2583
        %v2586 = vunpack.c.l.s4 1966171168
        %v2587 = vunpack.c.0.s8 %v2586
        %v2588 = vlaneseq
        %v2589 = vshrl.u32 %v2588, 7
        %v2590 = vsub.s32 %v2587, %v2589
        %v2591 = vrot.slane %v2569, %v2590
        %v2593 = vunpack.c.l.s4 1966171168
        %v2594 = vunpack.c.0.s8 %v2593
        %v2595 = vlaneseq
        %v2596 = vshrl.u32 %v2595, 7
        %v2597 = vsub.s32 %v2594, %v2596
        %v2598 = vrot.slane %v2570, %v2597
        %v2599 = vcombine.low %v2577, %v2584
        %v2600 = vcombine.low %v2591, %v2598
        %v2602 = vunpack.c.l.s4 1966171168
        %v2603 = vunpack.c.0.s8 %v2602
        %v2604 = vlaneseq
        %v2605 = vshrl.u32 %v2604, 7
        %v2606 = vsub.s32 %v2603, %v2605
        %v2607 = vrot.slane %v2599, %v2606
        %v2609 = vunpack.c.l.s4 1966171168
        %v2610 = vunpack.c.0.s8 %v2609
        %v2611 = vlaneseq
        %v2612 = vshrl.u32 %v2611, 7
        %v2613 = vsub.s32 %v2610, %v2612
        %v2614 = vrot.slane %v2600, %v2613
        %v2615 = vcombine.low %v2607, %v2614
        %v2616 = vcombine.low %v1374, %v1378
        %v2617 = vcombine.low %v1382, %v1386
        %v2618 = vcombine.low %v1390, %v1394
        %v2619 = vcombine.low %v1398, %v1402
        %v2621 = vunpack.c.l.s4 1966171168
        %v2622 = vunpack.c.0.s8 %v2621
        %v2623 = vlaneseq
        %v2624 = vshrl.u32 %v2623, 7
        %v2625 = vsub.s32 %v2622, %v2624
        %v2626 = vrot.slane %v2616, %v2625
        %v2628 = vunpack.c.l.s4 1966171168
        %v2629 = vunpack.c.0.s8 %v2628
        %v2630 = vlaneseq
        %v2631 = vshrl.u32 %v2630, 7
        %v2632 = vsub.s32 %v2629, %v2631
        %v2633 = vrot.slane %v2617, %v2632
        %v2635 = vunpack.c.l.s4 1966171168
        %v2636 = vunpack.c.0.s8 %v2635
        %v2637 = vlaneseq
        %v2638 = vshrl.u32 %v2637, 7
        %v2639 = vsub.s32 %v2636, %v2638
        %v2640 = vrot.slane %v2618, %v2639
        %v2642 = vunpack.c.l.s4 1966171168
        %v2643 = vunpack.c.0.s8 %v2642
        %v2644 = vlaneseq
        %v2645 = vshrl.u32 %v2644, 7
        %v2646 = vsub.s32 %v2643, %v2645
        %v2647 = vrot.slane %v2619, %v2646
        %v2648 = vcombine.low %v2626, %v2633
        %v2649 = vcombine.low %v2640, %v2647
        %v2651 = vunpack.c.l.s4 1966171168
        %v2652 = vunpack.c.0.s8 %v2651
        %v2653 = vlaneseq
        %v2654 = vshrl.u32 %v2653, 7
        %v2655 = vsub.s32 %v2652, %v2654
        %v2656 = vrot.slane %v2648, %v2655
        %v2658 = vunpack.c.l.s4 1966171168
        %v2659 = vunpack.c.0.s8 %v2658
        %v2660 = vlaneseq
        %v2661 = vshrl.u32 %v2660, 7
        %v2662 = vsub.s32 %v2659, %v2661
        %v2663 = vrot.slane %v2649, %v2662
        %v2664 = vcombine.low %v2656, %v2663
        %v2665 = vcombine.low %v1406, %v1410
        %v2666 = vcombine.low %v1414, %v1418
        %v2667 = vcombine.low %v1422, %v1426
        %v2668 = vcombine.low %v1430, %v1434
        %v2670 = vunpack.c.l.s4 1966171168
        %v2671 = vunpack.c.0.s8 %v2670
        %v2672 = vlaneseq
        %v2673 = vshrl.u32 %v2672, 7
        %v2674 = vsub.s32 %v2671, %v2673
        %v2675 = vrot.slane %v2665, %v2674
        %v2677 = vunpack.c.l.s4 1966171168
        %v2678 = vunpack.c.0.s8 %v2677
        %v2679 = vlaneseq
        %v2680 = vshrl.u32 %v2679, 7
        %v2681 = vsub.s32 %v2678, %v2680
        %v2682 = vrot.slane %v2666, %v2681
        %v2684 = vunpack.c.l.s4 1966171168
        %v2685 = vunpack.c.0.s8 %v2684
        %v2686 = vlaneseq
        %v2687 = vshrl.u32 %v2686, 7
        %v2688 = vsub.s32 %v2685, %v2687
        %v2689 = vrot.slane %v2667, %v2688
        %v2691 = vunpack.c.l.s4 1966171168
        %v2692 = vunpack.c.0.s8 %v2691
        %v2693 = vlaneseq
        %v2694 = vshrl.u32 %v2693, 7
        %v2695 = vsub.s32 %v2692, %v2694
        %v2696 = vrot.slane %v2668, %v2695
        %v2697 = vcombine.low %v2675, %v2682
        %v2698 = vcombine.low %v2689, %v2696
        %v2700 = vunpack.c.l.s4 1966171168
        %v2701 = vunpack.c.0.s8 %v2700
        %v2702 = vlaneseq
        %v2703 = vshrl.u32 %v2702, 7
        %v2704 = vsub.s32 %v2701, %v2703
        %v2705 = vrot.slane %v2697, %v2704
        %v2707 = vunpack.c.l.s4 1966171168
        %v2708 = vunpack.c.0.s8 %v2707
        %v2709 = vlaneseq
        %v2710 = vshrl.u32 %v2709, 7
        %v2711 = vsub.s32 %v2708, %v2710
        %v2712 = vrot.slane %v2698, %v2711
        %v2713 = vcombine.low %v2705, %v2712
        %v2714 = vcombine.low %v1438, %v1442
        %v2715 = vcombine.low %v1446, %v1450
        %v2716 = vcombine.low %v1454, %v1458
        %v2717 = vcombine.low %v1462, %v1466
        %v2719 = vunpack.c.l.s4 1966171168
        %v2720 = vunpack.c.0.s8 %v2719
        %v2721 = vlaneseq
        %v2722 = vshrl.u32 %v2721, 7
        %v2723 = vsub.s32 %v2720, %v2722
        %v2724 = vrot.slane %v2714, %v2723
        %v2726 = vunpack.c.l.s4 1966171168
        %v2727 = vunpack.c.0.s8 %v2726
        %v2728 = vlaneseq
        %v2729 = vshrl.u32 %v2728, 7
        %v2730 = vsub.s32 %v2727, %v2729
        %v2731 = vrot.slane %v2715, %v2730
        %v2733 = vunpack.c.l.s4 1966171168
        %v2734 = vunpack.c.0.s8 %v2733
        %v2735 = vlaneseq
        %v2736 = vshrl.u32 %v2735, 7
        %v2737 = vsub.s32 %v2734, %v2736
        %v2738 = vrot.slane %v2716, %v2737
        %v2740 = vunpack.c.l.s4 1966171168
        %v2741 = vunpack.c.0.s8 %v2740
        %v2742 = vlaneseq
        %v2743 = vshrl.u32 %v2742, 7
        %v2744 = vsub.s32 %v2741, %v2743
        %v2745 = vrot.slane %v2717, %v2744
        %v2746 = vcombine.low %v2724, %v2731
        %v2747 = vcombine.low %v2738, %v2745
        %v2749 = vunpack.c.l.s4 1966171168
        %v2750 = vunpack.c.0.s8 %v2749
        %v2751 = vlaneseq
        %v2752 = vshrl.u32 %v2751, 7
        %v2753 = vsub.s32 %v2750, %v2752
        %v2754 = vrot.slane %v2746, %v2753
        %v2756 = vunpack.c.l.s4 1966171168
        %v2757 = vunpack.c.0.s8 %v2756
        %v2758 = vlaneseq
        %v2759 = vshrl.u32 %v2758, 7
        %v2760 = vsub.s32 %v2757, %v2759
        %v2761 = vrot.slane %v2747, %v2760
        %v2762 = vcombine.low %v2754, %v2761
        %v2763 = vcombine.low %v1470, %v1474
        %v2764 = vcombine.low %v1478, %v1482
        %v2765 = vcombine.low %v1486, %v1490
        %v2766 = vcombine.low %v1494, %v1498
        %v2768 = vunpack.c.l.s4 1966171168
        %v2769 = vunpack.c.0.s8 %v2768
        %v2770 = vlaneseq
        %v2771 = vshrl.u32 %v2770, 7
        %v2772 = vsub.s32 %v2769, %v2771
        %v2773 = vrot.slane %v2763, %v2772
        %v2775 = vunpack.c.l.s4 1966171168
        %v2776 = vunpack.c.0.s8 %v2775
        %v2777 = vlaneseq
        %v2778 = vshrl.u32 %v2777, 7
        %v2779 = vsub.s32 %v2776, %v2778
        %v2780 = vrot.slane %v2764, %v2779
        %v2782 = vunpack.c.l.s4 1966171168
        %v2783 = vunpack.c.0.s8 %v2782
        %v2784 = vlaneseq
        %v2785 = vshrl.u32 %v2784, 7
        %v2786 = vsub.s32 %v2783, %v2785
        %v2787 = vrot.slane %v2765, %v2786
        %v2789 = vunpack.c.l.s4 1966171168
        %v2790 = vunpack.c.0.s8 %v2789
        %v2791 = vlaneseq
        %v2792 = vshrl.u32 %v2791, 7
        %v2793 = vsub.s32 %v2790, %v2792
        %v2794 = vrot.slane %v2766, %v2793
        %v2795 = vcombine.low %v2773, %v2780
        %v2796 = vcombine.low %v2787, %v2794
        %v2798 = vunpack.c.l.s4 1966171168
        %v2799 = vunpack.c.0.s8 %v2798
        %v2800 = vlaneseq
        %v2801 = vshrl.u32 %v2800, 7
        %v2802 = vsub.s32 %v2799, %v2801
        %v2803 = vrot.slane %v2795, %v2802
        %v2805 = vunpack.c.l.s4 1966171168
        %v2806 = vunpack.c.0.s8 %v2805
        %v2807 = vlaneseq
        %v2808 = vshrl.u32 %v2807, 7
        %v2809 = vsub.s32 %v2806, %v2808
        %v2810 = vrot.slane %v2796, %v2809
        %v2811 = vcombine.low %v2803, %v2810
        %v2812 = vcombine.low %v1502, %v1506
        %v2813 = vcombine.low %v1510, %v1514
        %v2814 = vcombine.low %v1518, %v1522
        %v2815 = vcombine.low %v1526, %v1530
        %v2817 = vunpack.c.l.s4 1966171168
        %v2818 = vunpack.c.0.s8 %v2817
        %v2819 = vlaneseq
        %v2820 = vshrl.u32 %v2819, 7
        %v2821 = vsub.s32 %v2818, %v2820
        %v2822 = vrot.slane %v2812, %v2821
        %v2824 = vunpack.c.l.s4 1966171168
        %v2825 = vunpack.c.0.s8 %v2824
        %v2826 = vlaneseq
        %v2827 = vshrl.u32 %v2826, 7
        %v2828 = vsub.s32 %v2825, %v2827
        %v2829 = vrot.slane %v2813, %v2828
        %v2831 = vunpack.c.l.s4 1966171168
        %v2832 = vunpack.c.0.s8 %v2831
        %v2833 = vlaneseq
        %v2834 = vshrl.u32 %v2833, 7
        %v2835 = vsub.s32 %v2832, %v2834
        %v2836 = vrot.slane %v2814, %v2835
        %v2838 = vunpack.c.l.s4 1966171168
        %v2839 = vunpack.c.0.s8 %v2838
        %v2840 = vlaneseq
        %v2841 = vshrl.u32 %v2840, 7
        %v2842 = vsub.s32 %v2839, %v2841
        %v2843 = vrot.slane %v2815, %v2842
        %v2844 = vcombine.low %v2822, %v2829
        %v2845 = vcombine.low %v2836, %v2843
        %v2847 = vunpack.c.l.s4 1966171168
        %v2848 = vunpack.c.0.s8 %v2847
        %v2849 = vlaneseq
        %v2850 = vshrl.u32 %v2849, 7
        %v2851 = vsub.s32 %v2848, %v2850
        %v2852 = vrot.slane %v2844, %v2851
        %v2854 = vunpack.c.l.s4 1966171168
        %v2855 = vunpack.c.0.s8 %v2854
        %v2856 = vlaneseq
        %v2857 = vshrl.u32 %v2856, 7
        %v2858 = vsub.s32 %v2855, %v2857
        %v2859 = vrot.slane %v2845, %v2858
        %v2860 = vcombine.low %v2852, %v2859
        %v2861 = vcombine.low %v1534, %v1538
        %v2862 = vcombine.low %v1542, %v1546
        %v2863 = vcombine.low %v1550, %v1554
        %v2864 = vcombine.low %v1558, %v1562
        %v2866 = vunpack.c.l.s4 1966171168
        %v2867 = vunpack.c.0.s8 %v2866
        %v2868 = vlaneseq
        %v2869 = vshrl.u32 %v2868, 7
        %v2870 = vsub.s32 %v2867, %v2869
        %v2871 = vrot.slane %v2861, %v2870
        %v2873 = vunpack.c.l.s4 1966171168
        %v2874 = vunpack.c.0.s8 %v2873
        %v2875 = vlaneseq
        %v2876 = vshrl.u32 %v2875, 7
        %v2877 = vsub.s32 %v2874, %v2876
        %v2878 = vrot.slane %v2862, %v2877
        %v2880 = vunpack.c.l.s4 1966171168
        %v2881 = vunpack.c.0.s8 %v2880
        %v2882 = vlaneseq
        %v2883 = vshrl.u32 %v2882, 7
        %v2884 = vsub.s32 %v2881, %v2883
        %v2885 = vrot.slane %v2863, %v2884
        %v2887 = vunpack.c.l.s4 1966171168
        %v2888 = vunpack.c.0.s8 %v2887
        %v2889 = vlaneseq
        %v2890 = vshrl.u32 %v2889, 7
        %v2891 = vsub.s32 %v2888, %v2890
        %v2892 = vrot.slane %v2864, %v2891
        %v2893 = vcombine.low %v2871, %v2878
        %v2894 = vcombine.low %v2885, %v2892
        %v2896 = vunpack.c.l.s4 1966171168
        %v2897 = vunpack.c.0.s8 %v2896
        %v2898 = vlaneseq
        %v2899 = vshrl.u32 %v2898, 7
        %v2900 = vsub.s32 %v2897, %v2899
        %v2901 = vrot.slane %v2893, %v2900
        %v2903 = vunpack.c.l.s4 1966171168
        %v2904 = vunpack.c.0.s8 %v2903
        %v2905 = vlaneseq
        %v2906 = vshrl.u32 %v2905, 7
        %v2907 = vsub.s32 %v2904, %v2906
        %v2908 = vrot.slane %v2894, %v2907
        %v2909 = vcombine.low %v2901, %v2908
        %v2910 = vcombine.low %v1566, %v1570
        %v2911 = vcombine.low %v1574, %v1578
        %v2912 = vcombine.low %v1582, %v1586
        %v2913 = vcombine.low %v1590, %v1594
        %v2915 = vunpack.c.l.s4 1966171168
        %v2916 = vunpack.c.0.s8 %v2915
        %v2917 = vlaneseq
        %v2918 = vshrl.u32 %v2917, 7
        %v2919 = vsub.s32 %v2916, %v2918
        %v2920 = vrot.slane %v2910, %v2919
        %v2922 = vunpack.c.l.s4 1966171168
        %v2923 = vunpack.c.0.s8 %v2922
        %v2924 = vlaneseq
        %v2925 = vshrl.u32 %v2924, 7
        %v2926 = vsub.s32 %v2923, %v2925
        %v2927 = vrot.slane %v2911, %v2926
        %v2929 = vunpack.c.l.s4 1966171168
        %v2930 = vunpack.c.0.s8 %v2929
        %v2931 = vlaneseq
        %v2932 = vshrl.u32 %v2931, 7
        %v2933 = vsub.s32 %v2930, %v2932
        %v2934 = vrot.slane %v2912, %v2933
        %v2936 = vunpack.c.l.s4 1966171168
        %v2937 = vunpack.c.0.s8 %v2936
        %v2938 = vlaneseq
        %v2939 = vshrl.u32 %v2938, 7
        %v2940 = vsub.s32 %v2937, %v2939
        %v2941 = vrot.slane %v2913, %v2940
        %v2942 = vcombine.low %v2920, %v2927
        %v2943 = vcombine.low %v2934, %v2941
        %v2945 = vunpack.c.l.s4 1966171168
        %v2946 = vunpack.c.0.s8 %v2945
        %v2947 = vlaneseq
        %v2948 = vshrl.u32 %v2947, 7
        %v2949 = vsub.s32 %v2946, %v2948
        %v2950 = vrot.slane %v2942, %v2949
        %v2952 = vunpack.c.l.s4 1966171168
        %v2953 = vunpack.c.0.s8 %v2952
        %v2954 = vlaneseq
        %v2955 = vshrl.u32 %v2954, 7
        %v2956 = vsub.s32 %v2953, %v2955
        %v2957 = vrot.slane %v2943, %v2956
        %v2958 = vcombine.low %v2950, %v2957
        %v2959 = vcombine.low %v1598, %v1602
        %v2960 = vcombine.low %v1606, %v1610
        %v2961 = vcombine.low %v1614, %v1618
        %v2962 = vcombine.low %v1622, %v1626
        %v2964 = vunpack.c.l.s4 1966171168
        %v2965 = vunpack.c.0.s8 %v2964
        %v2966 = vlaneseq
        %v2967 = vshrl.u32 %v2966, 7
        %v2968 = vsub.s32 %v2965, %v2967
        %v2969 = vrot.slane %v2959, %v2968
        %v2971 = vunpack.c.l.s4 1966171168
        %v2972 = vunpack.c.0.s8 %v2971
        %v2973 = vlaneseq
        %v2974 = vshrl.u32 %v2973, 7
        %v2975 = vsub.s32 %v2972, %v2974
        %v2976 = vrot.slane %v2960, %v2975
        %v2978 = vunpack.c.l.s4 1966171168
        %v2979 = vunpack.c.0.s8 %v2978
        %v2980 = vlaneseq
        %v2981 = vshrl.u32 %v2980, 7
        %v2982 = vsub.s32 %v2979, %v2981
        %v2983 = vrot.slane %v2961, %v2982
        %v2985 = vunpack.c.l.s4 1966171168
        %v2986 = vunpack.c.0.s8 %v2985
        %v2987 = vlaneseq
        %v2988 = vshrl.u32 %v2987, 7
        %v2989 = vsub.s32 %v2986, %v2988
        %v2990 = vrot.slane %v2962, %v2989
        %v2991 = vcombine.low %v2969, %v2976
        %v2992 = vcombine.low %v2983, %v2990
        %v2994 = vunpack.c.l.s4 1966171168
        %v2995 = vunpack.c.0.s8 %v2994
        %v2996 = vlaneseq
        %v2997 = vshrl.u32 %v2996, 7
        %v2998 = vsub.s32 %v2995, %v2997
        %v2999 = vrot.slane %v2991, %v2998
        %v3001 = vunpack.c.l.s4 1966171168
        %v3002 = vunpack.c.0.s8 %v3001
        %v3003 = vlaneseq
        %v3004 = vshrl.u32 %v3003, 7
        %v3005 = vsub.s32 %v3002, %v3004
        %v3006 = vrot.slane %v2992, %v3005
        %v3007 = vcombine.low %v2999, %v3006
        %v3008 = vcombine.low %v1630, %v1634
        %v3009 = vcombine.low %v1638, %v1642
        %v3010 = vcombine.low %v1646, %v1650
        %v3011 = vcombine.low %v1654, %v1658
        %v3013 = vunpack.c.l.s4 1966171168
        %v3014 = vunpack.c.0.s8 %v3013
        %v3015 = vlaneseq
        %v3016 = vshrl.u32 %v3015, 7
        %v3017 = vsub.s32 %v3014, %v3016
        %v3018 = vrot.slane %v3008, %v3017
        %v3020 = vunpack.c.l.s4 1966171168
        %v3021 = vunpack.c.0.s8 %v3020
        %v3022 = vlaneseq
        %v3023 = vshrl.u32 %v3022, 7
        %v3024 = vsub.s32 %v3021, %v3023
        %v3025 = vrot.slane %v3009, %v3024
        %v3027 = vunpack.c.l.s4 1966171168
        %v3028 = vunpack.c.0.s8 %v3027
        %v3029 = vlaneseq
        %v3030 = vshrl.u32 %v3029, 7
        %v3031 = vsub.s32 %v3028, %v3030
        %v3032 = vrot.slane %v3010, %v3031
        %v3034 = vunpack.c.l.s4 1966171168
        %v3035 = vunpack.c.0.s8 %v3034
        %v3036 = vlaneseq
        %v3037 = vshrl.u32 %v3036, 7
        %v3038 = vsub.s32 %v3035, %v3037
        %v3039 = vrot.slane %v3011, %v3038
        %v3040 = vcombine.low %v3018, %v3025
        %v3041 = vcombine.low %v3032, %v3039
        %v3043 = vunpack.c.l.s4 1966171168
        %v3044 = vunpack.c.0.s8 %v3043
        %v3045 = vlaneseq
        %v3046 = vshrl.u32 %v3045, 7
        %v3047 = vsub.s32 %v3044, %v3046
        %v3048 = vrot.slane %v3040, %v3047
        %v3050 = vunpack.c.l.s4 1966171168
        %v3051 = vunpack.c.0.s8 %v3050
        %v3052 = vlaneseq
        %v3053 = vshrl.u32 %v3052, 7
        %v3054 = vsub.s32 %v3051, %v3053
        %v3055 = vrot.slane %v3041, %v3054
        %v3056 = vcombine.low %v3048, %v3055
        %v3057 = vcombine.low %v1662, %v1666
        %v3058 = vcombine.low %v1670, %v1674
        %v3059 = vcombine.low %v1678, %v1682
        %v3060 = vcombine.low %v1686, %v1690
        %v3062 = vunpack.c.l.s4 1966171168
        %v3063 = vunpack.c.0.s8 %v3062
        %v3064 = vlaneseq
        %v3065 = vshrl.u32 %v3064, 7
        %v3066 = vsub.s32 %v3063, %v3065
        %v3067 = vrot.slane %v3057, %v3066
        %v3069 = vunpack.c.l.s4 1966171168
        %v3070 = vunpack.c.0.s8 %v3069
        %v3071 = vlaneseq
        %v3072 = vshrl.u32 %v3071, 7
        %v3073 = vsub.s32 %v3070, %v3072
        %v3074 = vrot.slane %v3058, %v3073
        %v3076 = vunpack.c.l.s4 1966171168
        %v3077 = vunpack.c.0.s8 %v3076
        %v3078 = vlaneseq
        %v3079 = vshrl.u32 %v3078, 7
        %v3080 = vsub.s32 %v3077, %v3079
        %v3081 = vrot.slane %v3059, %v3080
        %v3083 = vunpack.c.l.s4 1966171168
        %v3084 = vunpack.c.0.s8 %v3083
        %v3085 = vlaneseq
        %v3086 = vshrl.u32 %v3085, 7
        %v3087 = vsub.s32 %v3084, %v3086
        %v3088 = vrot.slane %v3060, %v3087
        %v3089 = vcombine.low %v3067, %v3074
        %v3090 = vcombine.low %v3081, %v3088
        %v3092 = vunpack.c.l.s4 1966171168
        %v3093 = vunpack.c.0.s8 %v3092
        %v3094 = vlaneseq
        %v3095 = vshrl.u32 %v3094, 7
        %v3096 = vsub.s32 %v3093, %v3095
        %v3097 = vrot.slane %v3089, %v3096
        %v3099 = vunpack.c.l.s4 1966171168
        %v3100 = vunpack.c.0.s8 %v3099
        %v3101 = vlaneseq
        %v3102 = vshrl.u32 %v3101, 7
        %v3103 = vsub.s32 %v3100, %v3102
        %v3104 = vrot.slane %v3090, %v3103
        %v3105 = vcombine.low %v3097, %v3104
        %v3106 = vcombine.low %v1694, %v1698
        %v3107 = vcombine.low %v1702, %v1706
        %v3108 = vcombine.low %v1710, %v1714
        %v3109 = vcombine.low %v1718, %v1722
        %v3111 = vunpack.c.l.s4 1966171168
        %v3112 = vunpack.c.0.s8 %v3111
        %v3113 = vlaneseq
        %v3114 = vshrl.u32 %v3113, 7
        %v3115 = vsub.s32 %v3112, %v3114
        %v3116 = vrot.slane %v3106, %v3115
        %v3118 = vunpack.c.l.s4 1966171168
        %v3119 = vunpack.c.0.s8 %v3118
        %v3120 = vlaneseq
        %v3121 = vshrl.u32 %v3120, 7
        %v3122 = vsub.s32 %v3119, %v3121
        %v3123 = vrot.slane %v3107, %v3122
        %v3125 = vunpack.c.l.s4 1966171168
        %v3126 = vunpack.c.0.s8 %v3125
        %v3127 = vlaneseq
        %v3128 = vshrl.u32 %v3127, 7
        %v3129 = vsub.s32 %v3126, %v3128
        %v3130 = vrot.slane %v3108, %v3129
        %v3132 = vunpack.c.l.s4 1966171168
        %v3133 = vunpack.c.0.s8 %v3132
        %v3134 = vlaneseq
        %v3135 = vshrl.u32 %v3134, 7
        %v3136 = vsub.s32 %v3133, %v3135
        %v3137 = vrot.slane %v3109, %v3136
        %v3138 = vcombine.low %v3116, %v3123
        %v3139 = vcombine.low %v3130, %v3137
        %v3141 = vunpack.c.l.s4 1966171168
        %v3142 = vunpack.c.0.s8 %v3141
        %v3143 = vlaneseq
        %v3144 = vshrl.u32 %v3143, 7
        %v3145 = vsub.s32 %v3142, %v3144
        %v3146 = vrot.slane %v3138, %v3145
        %v3148 = vunpack.c.l.s4 1966171168
        %v3149 = vunpack.c.0.s8 %v3148
        %v3150 = vlaneseq
        %v3151 = vshrl.u32 %v3150, 7
        %v3152 = vsub.s32 %v3149, %v3151
        %v3153 = vrot.slane %v3139, %v3152
        %v3154 = vcombine.low %v3146, %v3153
        %v3155 = vcombine.low %v1726, %v1730
        %v3156 = vcombine.low %v1734, %v1738
        %v3157 = vcombine.low %v1742, %v1746
        %v3158 = vcombine.low %v1750, %v1754
        %v3160 = vunpack.c.l.s4 1966171168
        %v3161 = vunpack.c.0.s8 %v3160
        %v3162 = vlaneseq
        %v3163 = vshrl.u32 %v3162, 7
        %v3164 = vsub.s32 %v3161, %v3163
        %v3165 = vrot.slane %v3155, %v3164
        %v3167 = vunpack.c.l.s4 1966171168
        %v3168 = vunpack.c.0.s8 %v3167
        %v3169 = vlaneseq
        %v3170 = vshrl.u32 %v3169, 7
        %v3171 = vsub.s32 %v3168, %v3170
        %v3172 = vrot.slane %v3156, %v3171
        %v3174 = vunpack.c.l.s4 1966171168
        %v3175 = vunpack.c.0.s8 %v3174
        %v3176 = vlaneseq
        %v3177 = vshrl.u32 %v3176, 7
        %v3178 = vsub.s32 %v3175, %v3177
        %v3179 = vrot.slane %v3157, %v3178
        %v3181 = vunpack.c.l.s4 1966171168
        %v3182 = vunpack.c.0.s8 %v3181
        %v3183 = vlaneseq
        %v3184 = vshrl.u32 %v3183, 7
        %v3185 = vsub.s32 %v3182, %v3184
        %v3186 = vrot.slane %v3158, %v3185
        %v3187 = vcombine.low %v3165, %v3172
        %v3188 = vcombine.low %v3179, %v3186
        %v3190 = vunpack.c.l.s4 1966171168
        %v3191 = vunpack.c.0.s8 %v3190
        %v3192 = vlaneseq
        %v3193 = vshrl.u32 %v3192, 7
        %v3194 = vsub.s32 %v3191, %v3193
        %v3195 = vrot.slane %v3187, %v3194
        %v3197 = vunpack.c.l.s4 1966171168
        %v3198 = vunpack.c.0.s8 %v3197
        %v3199 = vlaneseq
        %v3200 = vshrl.u32 %v3199, 7
        %v3201 = vsub.s32 %v3198, %v3200
        %v3202 = vrot.slane %v3188, %v3201
        %v3203 = vcombine.low %v3195, %v3202
        %v3204 = vcombine.low %v1758, %v1762
        %v3205 = vcombine.low %v1766, %v1770
        %v3206 = vcombine.low %v1774, %v1778
        %v3207 = vcombine.low %v1782, %v1786
        %v3209 = vunpack.c.l.s4 1966171168
        %v3210 = vunpack.c.0.s8 %v3209
        %v3211 = vlaneseq
        %v3212 = vshrl.u32 %v3211, 7
        %v3213 = vsub.s32 %v3210, %v3212
        %v3214 = vrot.slane %v3204, %v3213
        %v3216 = vunpack.c.l.s4 1966171168
        %v3217 = vunpack.c.0.s8 %v3216
        %v3218 = vlaneseq
        %v3219 = vshrl.u32 %v3218, 7
        %v3220 = vsub.s32 %v3217, %v3219
        %v3221 = vrot.slane %v3205, %v3220
        %v3223 = vunpack.c.l.s4 1966171168
        %v3224 = vunpack.c.0.s8 %v3223
        %v3225 = vlaneseq
        %v3226 = vshrl.u32 %v3225, 7
        %v3227 = vsub.s32 %v3224, %v3226
        %v3228 = vrot.slane %v3206, %v3227
        %v3230 = vunpack.c.l.s4 1966171168
        %v3231 = vunpack.c.0.s8 %v3230
        %v3232 = vlaneseq
        %v3233 = vshrl.u32 %v3232, 7
        %v3234 = vsub.s32 %v3231, %v3233
        %v3235 = vrot.slane %v3207, %v3234
        %v3236 = vcombine.low %v3214, %v3221
        %v3237 = vcombine.low %v3228, %v3235
        %v3239 = vunpack.c.l.s4 1966171168
        %v3240 = vunpack.c.0.s8 %v3239
        %v3241 = vlaneseq
        %v3242 = vshrl.u32 %v3241, 7
        %v3243 = vsub.s32 %v3240, %v3242
        %v3244 = vrot.slane %v3236, %v3243
        %v3246 = vunpack.c.l.s4 1966171168
        %v3247 = vunpack.c.0.s8 %v3246
        %v3248 = vlaneseq
        %v3249 = vshrl.u32 %v3248, 7
        %v3250 = vsub.s32 %v3247, %v3249
        %v3251 = vrot.slane %v3237, %v3250
        %v3252 = vcombine.low %v3244, %v3251
        %v3253 = vcombine.low %v1790, %v1794
        %v3254 = vcombine.low %v1798, %v1802
        %v3255 = vcombine.low %v1806, %v1810
        %v3256 = vcombine.low %v1814, %v1818
        %v3258 = vunpack.c.l.s4 1966171168
        %v3259 = vunpack.c.0.s8 %v3258
        %v3260 = vlaneseq
        %v3261 = vshrl.u32 %v3260, 7
        %v3262 = vsub.s32 %v3259, %v3261
        %v3263 = vrot.slane %v3253, %v3262
        %v3265 = vunpack.c.l.s4 1966171168
        %v3266 = vunpack.c.0.s8 %v3265
        %v3267 = vlaneseq
        %v3268 = vshrl.u32 %v3267, 7
        %v3269 = vsub.s32 %v3266, %v3268
        %v3270 = vrot.slane %v3254, %v3269
        %v3272 = vunpack.c.l.s4 1966171168
        %v3273 = vunpack.c.0.s8 %v3272
        %v3274 = vlaneseq
        %v3275 = vshrl.u32 %v3274, 7
        %v3276 = vsub.s32 %v3273, %v3275
        %v3277 = vrot.slane %v3255, %v3276
        %v3279 = vunpack.c.l.s4 1966171168
        %v3280 = vunpack.c.0.s8 %v3279
        %v3281 = vlaneseq
        %v3282 = vshrl.u32 %v3281, 7
        %v3283 = vsub.s32 %v3280, %v3282
        %v3284 = vrot.slane %v3256, %v3283
        %v3285 = vcombine.low %v3263, %v3270
        %v3286 = vcombine.low %v3277, %v3284
        %v3288 = vunpack.c.l.s4 1966171168
        %v3289 = vunpack.c.0.s8 %v3288
        %v3290 = vlaneseq
        %v3291 = vshrl.u32 %v3290, 7
        %v3292 = vsub.s32 %v3289, %v3291
        %v3293 = vrot.slane %v3285, %v3292
        %v3295 = vunpack.c.l.s4 1966171168
        %v3296 = vunpack.c.0.s8 %v3295
        %v3297 = vlaneseq
        %v3298 = vshrl.u32 %v3297, 7
        %v3299 = vsub.s32 %v3296, %v3298
        %v3300 = vrot.slane %v3286, %v3299
        %v3301 = vcombine.low %v3293, %v3300
        %v3302 = vcombine.low %v1822, %v1826
        %v3303 = vcombine.low %v1830, %v1834
        %v3304 = vcombine.low %v1838, %v1842
        %v3305 = vcombine.low %v1846, %v1850
        %v3307 = vunpack.c.l.s4 1966171168
        %v3308 = vunpack.c.0.s8 %v3307
        %v3309 = vlaneseq
        %v3310 = vshrl.u32 %v3309, 7
        %v3311 = vsub.s32 %v3308, %v3310
        %v3312 = vrot.slane %v3302, %v3311
        %v3314 = vunpack.c.l.s4 1966171168
        %v3315 = vunpack.c.0.s8 %v3314
        %v3316 = vlaneseq
        %v3317 = vshrl.u32 %v3316, 7
        %v3318 = vsub.s32 %v3315, %v3317
        %v3319 = vrot.slane %v3303, %v3318
        %v3321 = vunpack.c.l.s4 1966171168
        %v3322 = vunpack.c.0.s8 %v3321
        %v3323 = vlaneseq
        %v3324 = vshrl.u32 %v3323, 7
        %v3325 = vsub.s32 %v3322, %v3324
        %v3326 = vrot.slane %v3304, %v3325
        %v3328 = vunpack.c.l.s4 1966171168
        %v3329 = vunpack.c.0.s8 %v3328
        %v3330 = vlaneseq
        %v3331 = vshrl.u32 %v3330, 7
        %v3332 = vsub.s32 %v3329, %v3331
        %v3333 = vrot.slane %v3305, %v3332
        %v3334 = vcombine.low %v3312, %v3319
        %v3335 = vcombine.low %v3326, %v3333
        %v3337 = vunpack.c.l.s4 1966171168
        %v3338 = vunpack.c.0.s8 %v3337
        %v3339 = vlaneseq
        %v3340 = vshrl.u32 %v3339, 7
        %v3341 = vsub.s32 %v3338, %v3340
        %v3342 = vrot.slane %v3334, %v3341
        %v3344 = vunpack.c.l.s4 1966171168
        %v3345 = vunpack.c.0.s8 %v3344
        %v3346 = vlaneseq
        %v3347 = vshrl.u32 %v3346, 7
        %v3348 = vsub.s32 %v3345, %v3347
        %v3349 = vrot.slane %v3335, %v3348
        %v3350 = vcombine.low %v3342, %v3349
        %v3351 = vcombine.low %v1854, %v1858
        %v3352 = vcombine.low %v1862, %v1866
        %v3353 = vcombine.low %v1870, %v1874
        %v3354 = vcombine.low %v1878, %v1882
        %v3356 = vunpack.c.l.s4 1966171168
        %v3357 = vunpack.c.0.s8 %v3356
        %v3358 = vlaneseq
        %v3359 = vshrl.u32 %v3358, 7
        %v3360 = vsub.s32 %v3357, %v3359
        %v3361 = vrot.slane %v3351, %v3360
        %v3363 = vunpack.c.l.s4 1966171168
        %v3364 = vunpack.c.0.s8 %v3363
        %v3365 = vlaneseq
        %v3366 = vshrl.u32 %v3365, 7
        %v3367 = vsub.s32 %v3364, %v3366
        %v3368 = vrot.slane %v3352, %v3367
        %v3370 = vunpack.c.l.s4 1966171168
        %v3371 = vunpack.c.0.s8 %v3370
        %v3372 = vlaneseq
        %v3373 = vshrl.u32 %v3372, 7
        %v3374 = vsub.s32 %v3371, %v3373
        %v3375 = vrot.slane %v3353, %v3374
        %v3377 = vunpack.c.l.s4 1966171168
        %v3378 = vunpack.c.0.s8 %v3377
        %v3379 = vlaneseq
        %v3380 = vshrl.u32 %v3379, 7
        %v3381 = vsub.s32 %v3378, %v3380
        %v3382 = vrot.slane %v3354, %v3381
        %v3383 = vcombine.low %v3361, %v3368
        %v3384 = vcombine.low %v3375, %v3382
        %v3386 = vunpack.c.l.s4 1966171168
        %v3387 = vunpack.c.0.s8 %v3386
        %v3388 = vlaneseq
        %v3389 = vshrl.u32 %v3388, 7
        %v3390 = vsub.s32 %v3387, %v3389
        %v3391 = vrot.slane %v3383, %v3390
        %v3393 = vunpack.c.l.s4 1966171168
        %v3394 = vunpack.c.0.s8 %v3393
        %v3395 = vlaneseq
        %v3396 = vshrl.u32 %v3395, 7
        %v3397 = vsub.s32 %v3394, %v3396
        %v3398 = vrot.slane %v3384, %v3397
        %v3399 = vcombine.low %v3391, %v3398
        %v3400 = vcombine.low %v1886, %v1890
        %v3401 = vcombine.low %v1894, %v1898
        %v3402 = vcombine.low %v1902, %v1906
        %v3403 = vcombine.low %v1910, %v1914
        %v3405 = vunpack.c.l.s4 1966171168
        %v3406 = vunpack.c.0.s8 %v3405
        %v3407 = vlaneseq
        %v3408 = vshrl.u32 %v3407, 7
        %v3409 = vsub.s32 %v3406, %v3408
        %v3410 = vrot.slane %v3400, %v3409
        %v3412 = vunpack.c.l.s4 1966171168
        %v3413 = vunpack.c.0.s8 %v3412
        %v3414 = vlaneseq
        %v3415 = vshrl.u32 %v3414, 7
        %v3416 = vsub.s32 %v3413, %v3415
        %v3417 = vrot.slane %v3401, %v3416
        %v3419 = vunpack.c.l.s4 1966171168
        %v3420 = vunpack.c.0.s8 %v3419
        %v3421 = vlaneseq
        %v3422 = vshrl.u32 %v3421, 7
        %v3423 = vsub.s32 %v3420, %v3422
        %v3424 = vrot.slane %v3402, %v3423
        %v3426 = vunpack.c.l.s4 1966171168
        %v3427 = vunpack.c.0.s8 %v3426
        %v3428 = vlaneseq
        %v3429 = vshrl.u32 %v3428, 7
        %v3430 = vsub.s32 %v3427, %v3429
        %v3431 = vrot.slane %v3403, %v3430
        %v3432 = vcombine.low %v3410, %v3417
        %v3433 = vcombine.low %v3424, %v3431
        %v3435 = vunpack.c.l.s4 1966171168
        %v3436 = vunpack.c.0.s8 %v3435
        %v3437 = vlaneseq
        %v3438 = vshrl.u32 %v3437, 7
        %v3439 = vsub.s32 %v3436, %v3438
        %v3440 = vrot.slane %v3432, %v3439
        %v3442 = vunpack.c.l.s4 1966171168
        %v3443 = vunpack.c.0.s8 %v3442
        %v3444 = vlaneseq
        %v3445 = vshrl.u32 %v3444, 7
        %v3446 = vsub.s32 %v3443, %v3445
        %v3447 = vrot.slane %v3433, %v3446
        %v3448 = vcombine.low %v3440, %v3447
        %v3449 = vcombine.low %v1918, %v1922
        %v3450 = vcombine.low %v1926, %v1930
        %v3451 = vcombine.low %v1934, %v1938
        %v3452 = vcombine.low %v1942, %v1946
        %v3454 = vunpack.c.l.s4 1966171168
        %v3455 = vunpack.c.0.s8 %v3454
        %v3456 = vlaneseq
        %v3457 = vshrl.u32 %v3456, 7
        %v3458 = vsub.s32 %v3455, %v3457
        %v3459 = vrot.slane %v3449, %v3458
        %v3461 = vunpack.c.l.s4 1966171168
        %v3462 = vunpack.c.0.s8 %v3461
        %v3463 = vlaneseq
        %v3464 = vshrl.u32 %v3463, 7
        %v3465 = vsub.s32 %v3462, %v3464
        %v3466 = vrot.slane %v3450, %v3465
        %v3468 = vunpack.c.l.s4 1966171168
        %v3469 = vunpack.c.0.s8 %v3468
        %v3470 = vlaneseq
        %v3471 = vshrl.u32 %v3470, 7
        %v3472 = vsub.s32 %v3469, %v3471
        %v3473 = vrot.slane %v3451, %v3472
        %v3475 = vunpack.c.l.s4 1966171168
        %v3476 = vunpack.c.0.s8 %v3475
        %v3477 = vlaneseq
        %v3478 = vshrl.u32 %v3477, 7
        %v3479 = vsub.s32 %v3476, %v3478
        %v3480 = vrot.slane %v3452, %v3479
        %v3481 = vcombine.low %v3459, %v3466
        %v3482 = vcombine.low %v3473, %v3480
        %v3484 = vunpack.c.l.s4 1966171168
        %v3485 = vunpack.c.0.s8 %v3484
        %v3486 = vlaneseq
        %v3487 = vshrl.u32 %v3486, 7
        %v3488 = vsub.s32 %v3485, %v3487
        %v3489 = vrot.slane %v3481, %v3488
        %v3491 = vunpack.c.l.s4 1966171168
        %v3492 = vunpack.c.0.s8 %v3491
        %v3493 = vlaneseq
        %v3494 = vshrl.u32 %v3493, 7
        %v3495 = vsub.s32 %v3492, %v3494
        %v3496 = vrot.slane %v3482, %v3495
        %v3497 = vcombine.low %v3489, %v3496
        %v3498 = vcombine.low %v1950, %v1954
        %v3499 = vcombine.low %v1958, %v1962
        %v3500 = vcombine.low %v1966, %v1970
        %v3501 = vcombine.low %v1974, %v1978
        %v3503 = vunpack.c.l.s4 1966171168
        %v3504 = vunpack.c.0.s8 %v3503
        %v3505 = vlaneseq
        %v3506 = vshrl.u32 %v3505, 7
        %v3507 = vsub.s32 %v3504, %v3506
        %v3508 = vrot.slane %v3498, %v3507
        %v3510 = vunpack.c.l.s4 1966171168
        %v3511 = vunpack.c.0.s8 %v3510
        %v3512 = vlaneseq
        %v3513 = vshrl.u32 %v3512, 7
        %v3514 = vsub.s32 %v3511, %v3513
        %v3515 = vrot.slane %v3499, %v3514
        %v3517 = vunpack.c.l.s4 1966171168
        %v3518 = vunpack.c.0.s8 %v3517
        %v3519 = vlaneseq
        %v3520 = vshrl.u32 %v3519, 7
        %v3521 = vsub.s32 %v3518, %v3520
        %v3522 = vrot.slane %v3500, %v3521
        %v3524 = vunpack.c.l.s4 1966171168
        %v3525 = vunpack.c.0.s8 %v3524
        %v3526 = vlaneseq
        %v3527 = vshrl.u32 %v3526, 7
        %v3528 = vsub.s32 %v3525, %v3527
        %v3529 = vrot.slane %v3501, %v3528
        %v3530 = vcombine.low %v3508, %v3515
        %v3531 = vcombine.low %v3522, %v3529
        %v3533 = vunpack.c.l.s4 1966171168
        %v3534 = vunpack.c.0.s8 %v3533
        %v3535 = vlaneseq
        %v3536 = vshrl.u32 %v3535, 7
        %v3537 = vsub.s32 %v3534, %v3536
        %v3538 = vrot.slane %v3530, %v3537
        %v3540 = vunpack.c.l.s4 1966171168
        %v3541 = vunpack.c.0.s8 %v3540
        %v3542 = vlaneseq
        %v3543 = vshrl.u32 %v3542, 7
        %v3544 = vsub.s32 %v3541, %v3543
        %v3545 = vrot.slane %v3531, %v3544
        %v3546 = vcombine.low %v3538, %v3545
        %3547 = vset.pattern.permute.xlu0 0
        %3548 = vperm.xlu0 %3547, %v2027
        %v3549 = vpop.permute.xlu0 %3548
        %3550 = vset.pattern.permute.xlu0 0
        %3551 = vperm.xlu0 %3550, %v2076
        %v3552 = vpop.permute.xlu0 %3551
        %3553 = vset.pattern.permute.xlu0 0
        %3554 = vperm.xlu0 %3553, %v2125
        %v3555 = vpop.permute.xlu0 %3554
        %3556 = vset.pattern.permute.xlu0 0
        %3557 = vperm.xlu0 %3556, %v2174
        %v3558 = vpop.permute.xlu0 %3557
        %3559 = vset.pattern.permute.xlu0 0
        %3560 = vperm.xlu0 %3559, %v2223
        %v3561 = vpop.permute.xlu0 %3560
        %3562 = vset.pattern.permute.xlu0 0
        %3563 = vperm.xlu0 %3562, %v2272
        %v3564 = vpop.permute.xlu0 %3563
        %3565 = vset.pattern.permute.xlu0 0
        %3566 = vperm.xlu0 %3565, %v2321
        %v3567 = vpop.permute.xlu0 %3566
        %3568 = vset.pattern.permute.xlu0 0
        %3569 = vperm.xlu0 %3568, %v2370
        %v3570 = vpop.permute.xlu0 %3569
        %3571 = vset.pattern.permute.xlu0 0
        %3572 = vperm.xlu0 %3571, %v2419
        %v3573 = vpop.permute.xlu0 %3572
        %3574 = vset.pattern.permute.xlu0 0
        %3575 = vperm.xlu0 %3574, %v2468
        %v3576 = vpop.permute.xlu0 %3575
        %3577 = vset.pattern.permute.xlu0 0
        %3578 = vperm.xlu0 %3577, %v2517
        %v3579 = vpop.permute.xlu0 %3578
        %3580 = vset.pattern.permute.xlu0 0
        %3581 = vperm.xlu0 %3580, %v2566
        %v3582 = vpop.permute.xlu0 %3581
        %3583 = vset.pattern.permute.xlu0 0
        %3584 = vperm.xlu0 %3583, %v2615
        %v3585 = vpop.permute.xlu0 %3584
        %3586 = vset.pattern.permute.xlu0 0
        %3587 = vperm.xlu0 %3586, %v2664
        %v3588 = vpop.permute.xlu0 %3587
        %3589 = vset.pattern.permute.xlu0 0
        %3590 = vperm.xlu0 %3589, %v2713
        %v3591 = vpop.permute.xlu0 %3590
        %3592 = vset.pattern.permute.xlu0 0
        %3593 = vperm.xlu0 %3592, %v2762
        %v3594 = vpop.permute.xlu0 %3593
        %3595 = vset.pattern.permute.xlu0 0
        %3596 = vperm.xlu0 %3595, %v2811
        %v3597 = vpop.permute.xlu0 %3596
        %3598 = vset.pattern.permute.xlu0 0
        %3599 = vperm.xlu0 %3598, %v2860
        %v3600 = vpop.permute.xlu0 %3599
        %3601 = vset.pattern.permute.xlu0 0
        %3602 = vperm.xlu0 %3601, %v2909
        %v3603 = vpop.permute.xlu0 %3602
        %3604 = vset.pattern.permute.xlu0 0
        %3605 = vperm.xlu0 %3604, %v2958
        %v3606 = vpop.permute.xlu0 %3605
        %3607 = vset.pattern.permute.xlu0 0
        %3608 = vperm.xlu0 %3607, %v3007
        %v3609 = vpop.permute.xlu0 %3608
        %3610 = vset.pattern.permute.xlu0 0
        %3611 = vperm.xlu0 %3610, %v3056
        %v3612 = vpop.permute.xlu0 %3611
        %3613 = vset.pattern.permute.xlu0 0
        %3614 = vperm.xlu0 %3613, %v3105
        %v3615 = vpop.permute.xlu0 %3614
        %3616 = vset.pattern.permute.xlu0 0
        %3617 = vperm.xlu0 %3616, %v3154
        %v3618 = vpop.permute.xlu0 %3617
        %3619 = vset.pattern.permute.xlu0 0
        %3620 = vperm.xlu0 %3619, %v3203
        %v3621 = vpop.permute.xlu0 %3620
        %3622 = vset.pattern.permute.xlu0 0
        %3623 = vperm.xlu0 %3622, %v3252
        %v3624 = vpop.permute.xlu0 %3623
        %3625 = vset.pattern.permute.xlu0 0
        %3626 = vperm.xlu0 %3625, %v3301
        %v3627 = vpop.permute.xlu0 %3626
        %3628 = vset.pattern.permute.xlu0 0
        %3629 = vperm.xlu0 %3628, %v3350
        %v3630 = vpop.permute.xlu0 %3629
        %3631 = vset.pattern.permute.xlu0 0
        %3632 = vperm.xlu0 %3631, %v3399
        %v3633 = vpop.permute.xlu0 %3632
        %3634 = vset.pattern.permute.xlu0 0
        %3635 = vperm.xlu0 %3634, %v3448
        %v3636 = vpop.permute.xlu0 %3635
        %3637 = vset.pattern.permute.xlu0 0
        %3638 = vperm.xlu0 %3637, %v3497
        %v3639 = vpop.permute.xlu0 %3638
        %3640 = vset.pattern.permute.xlu0 0
        %3641 = vperm.xlu0 %3640, %v3546
        %v3642 = vpop.permute.xlu0 %3641
        %v3643 = vlaneseq
        %v3644 = vand.u32 %v3643, 127
        %v3645 = vlaneseq
        %v3646 = vshrl.u32 %v3645, 7
        %v3647 = vsub.s32 %v3644, %v3646
        %v3648 = vrot.slane %v3549, %v3647
        %v3649 = vadd.s32 %v3644, 4294967288
        %v3650 = vlaneseq
        %v3651 = vshrl.u32 %v3650, 7
        %v3652 = vsub.s32 %v3649, %v3651
        %v3653 = vrot.slane %v3552, %v3652
        %vm3654 = vcmask 130112
        %v3655 = vsel %vm3654, %v3653, %v3648
        %v3656 = vadd.s32 %v3644, 4294967280
        %v3657 = vlaneseq
        %v3658 = vshrl.u32 %v3657, 7
        %v3659 = vsub.s32 %v3656, %v3658
        %v3660 = vrot.slane %v3555, %v3659
        %vm3661 = vcmask 195712
        %v3662 = vsel %vm3661, %v3660, %v3655
        %v3663 = vadd.s32 %v3644, 4294967272
        %v3664 = vlaneseq
        %v3665 = vshrl.u32 %v3664, 7
        %v3666 = vsub.s32 %v3663, %v3665
        %v3667 = vrot.slane %v3558, %v3666
        %vm3668 = vcmask 261312
        %v3669 = vsel %vm3668, %v3667, %v3662
        %v3670 = vadd.s32 %v3644, 4294967264
        %v3671 = vlaneseq
        %v3672 = vshrl.u32 %v3671, 7
        %v3673 = vsub.s32 %v3670, %v3672
        %v3674 = vrot.slane %v3561, %v3673
        %vm3675 = vcmask 326912
        %v3676 = vsel %vm3675, %v3674, %v3669
        %v3677 = vadd.s32 %v3644, 4294967256
        %v3678 = vlaneseq
        %v3679 = vshrl.u32 %v3678, 7
        %v3680 = vsub.s32 %v3677, %v3679
        %v3681 = vrot.slane %v3564, %v3680
        %vm3682 = vcmask 392512
        %v3683 = vsel %vm3682, %v3681, %v3676
        %v3684 = vadd.s32 %v3644, 4294967248
        %v3685 = vlaneseq
        %v3686 = vshrl.u32 %v3685, 7
        %v3687 = vsub.s32 %v3684, %v3686
        %v3688 = vrot.slane %v3567, %v3687
        %vm3689 = vcmask 458112
        %v3690 = vsel %vm3689, %v3688, %v3683
        %v3691 = vadd.s32 %v3644, 4294967240
        %v3692 = vlaneseq
        %v3693 = vshrl.u32 %v3692, 7
        %v3694 = vsub.s32 %v3691, %v3693
        %v3695 = vrot.slane %v3570, %v3694
        %vm3696 = vcmask 523712
        %v3697 = vsel %vm3696, %v3695, %v3690
        %v3698 = vadd.s32 %v3644, 4294967232
        %v3699 = vlaneseq
        %v3700 = vshrl.u32 %v3699, 7
        %v3701 = vsub.s32 %v3698, %v3700
        %v3702 = vrot.slane %v3573, %v3701
        %vm3703 = vcmask 589312
        %v3704 = vsel %vm3703, %v3702, %v3697
        %v3705 = vadd.s32 %v3644, 4294967224
        %v3706 = vlaneseq
        %v3707 = vshrl.u32 %v3706, 7
        %v3708 = vsub.s32 %v3705, %v3707
        %v3709 = vrot.slane %v3576, %v3708
        %vm3710 = vcmask 654912
        %v3711 = vsel %vm3710, %v3709, %v3704
        %v3712 = vadd.s32 %v3644, 4294967216
        %v3713 = vlaneseq
        %v3714 = vshrl.u32 %v3713, 7
        %v3715 = vsub.s32 %v3712, %v3714
        %v3716 = vrot.slane %v3579, %v3715
        %vm3717 = vcmask 720512
        %v3718 = vsel %vm3717, %v3716, %v3711
        %v3719 = vadd.s32 %v3644, 4294967208
        %v3720 = vlaneseq
        %v3721 = vshrl.u32 %v3720, 7
        %v3722 = vsub.s32 %v3719, %v3721
        %v3723 = vrot.slane %v3582, %v3722
        %vm3724 = vcmask 786112
        %v3725 = vsel %vm3724, %v3723, %v3718
        %v3726 = vadd.s32 %v3644, 4294967200
        %v3727 = vlaneseq
        %v3728 = vshrl.u32 %v3727, 7
        %v3729 = vsub.s32 %v3726, %v3728
        %v3730 = vrot.slane %v3585, %v3729
        %vm3731 = vcmask 851712
        %v3732 = vsel %vm3731, %v3730, %v3725
        %v3733 = vadd.s32 %v3644, 4294967192
        %v3734 = vlaneseq
        %v3735 = vshrl.u32 %v3734, 7
        %v3736 = vsub.s32 %v3733, %v3735
        %v3737 = vrot.slane %v3588, %v3736
        %vm3738 = vcmask 917312
        %v3739 = vsel %vm3738, %v3737, %v3732
        %v3740 = vadd.s32 %v3644, 4294967184
        %v3741 = vlaneseq
        %v3742 = vshrl.u32 %v3741, 7
        %v3743 = vsub.s32 %v3740, %v3742
        %v3744 = vrot.slane %v3591, %v3743
        %vm3745 = vcmask 982912
        %v3746 = vsel %vm3745, %v3744, %v3739
        %v3747 = vadd.s32 %v3644, 4294967176
        %v3748 = vlaneseq
        %v3749 = vshrl.u32 %v3748, 7
        %v3750 = vsub.s32 %v3747, %v3749
        %v3751 = vrot.slane %v3594, %v3750
        %vm3752 = vcmask 1048512
        %v3753 = vsel %vm3752, %v3751, %v3746
        %v3754 = vlaneseq
        %v3755 = vshrl.u32 %v3754, 7
        %v3756 = vsub.s32 %v3644, %v3755
        %v3757 = vrot.slane %v3597, %v3756
        %v3758 = vlaneseq
        %v3759 = vshrl.u32 %v3758, 7
        %v3760 = vsub.s32 %v3649, %v3759
        %v3761 = vrot.slane %v3600, %v3760
        %v3762 = vsel %vm3654, %v3761, %v3757
        %v3763 = vlaneseq
        %v3764 = vshrl.u32 %v3763, 7
        %v3765 = vsub.s32 %v3656, %v3764
        %v3766 = vrot.slane %v3603, %v3765
        %v3767 = vsel %vm3661, %v3766, %v3762
        %v3768 = vlaneseq
        %v3769 = vshrl.u32 %v3768, 7
        %v3770 = vsub.s32 %v3663, %v3769
        %v3771 = vrot.slane %v3606, %v3770
        %v3772 = vsel %vm3668, %v3771, %v3767
        %v3773 = vlaneseq
        %v3774 = vshrl.u32 %v3773, 7
        %v3775 = vsub.s32 %v3670, %v3774
        %v3776 = vrot.slane %v3609, %v3775
        %v3777 = vsel %vm3675, %v3776, %v3772
        %v3778 = vlaneseq
        %v3779 = vshrl.u32 %v3778, 7
        %v3780 = vsub.s32 %v3677, %v3779
        %v3781 = vrot.slane %v3612, %v3780
        %v3782 = vsel %vm3682, %v3781, %v3777
        %v3783 = vlaneseq
        %v3784 = vshrl.u32 %v3783, 7
        %v3785 = vsub.s32 %v3684, %v3784
        %v3786 = vrot.slane %v3615, %v3785
        %v3787 = vsel %vm3689, %v3786, %v3782
        %v3788 = vlaneseq
        %v3789 = vshrl.u32 %v3788, 7
        %v3790 = vsub.s32 %v3691, %v3789
        %v3791 = vrot.slane %v3618, %v3790
        %v3792 = vsel %vm3696, %v3791, %v3787
        %v3793 = vlaneseq
        %v3794 = vshrl.u32 %v3793, 7
        %v3795 = vsub.s32 %v3698, %v3794
        %v3796 = vrot.slane %v3621, %v3795
        %v3797 = vsel %vm3703, %v3796, %v3792
        %v3798 = vlaneseq
        %v3799 = vshrl.u32 %v3798, 7
        %v3800 = vsub.s32 %v3705, %v3799
        %v3801 = vrot.slane %v3624, %v3800
        %v3802 = vsel %vm3710, %v3801, %v3797
        %v3803 = vlaneseq
        %v3804 = vshrl.u32 %v3803, 7
        %v3805 = vsub.s32 %v3712, %v3804
        %v3806 = vrot.slane %v3627, %v3805
        %v3807 = vsel %vm3717, %v3806, %v3802
        %v3808 = vlaneseq
        %v3809 = vshrl.u32 %v3808, 7
        %v3810 = vsub.s32 %v3719, %v3809
        %v3811 = vrot.slane %v3630, %v3810
        %v3812 = vsel %vm3724, %v3811, %v3807
        %v3813 = vlaneseq
        %v3814 = vshrl.u32 %v3813, 7
        %v3815 = vsub.s32 %v3726, %v3814
        %v3816 = vrot.slane %v3633, %v3815
        %v3817 = vsel %vm3731, %v3816, %v3812
        %v3818 = vlaneseq
        %v3819 = vshrl.u32 %v3818, 7
        %v3820 = vsub.s32 %v3733, %v3819
        %v3821 = vrot.slane %v3636, %v3820
        %v3822 = vsel %vm3738, %v3821, %v3817
        %v3823 = vlaneseq
        %v3824 = vshrl.u32 %v3823, 7
        %v3825 = vsub.s32 %v3740, %v3824
        %v3826 = vrot.slane %v3639, %v3825
        %v3827 = vsel %vm3745, %v3826, %v3822
        %v3828 = vlaneseq
        %v3829 = vshrl.u32 %v3828, 7
        %v3830 = vsub.s32 %v3747, %v3829
        %v3831 = vrot.slane %v3642, %v3830
        %v3832 = vsel %vm3752, %v3831, %v3827
        %v3833 = vcombine.low %v3753, %v3832
        %v3835 = vunpack.c.l.s4 1966171168
        %v3836 = vunpack.c.0.s8 %v3835
        %v3837 = vlaneseq
        %v3838 = vshrl.u32 %v3837, 7
        %v3839 = vsub.s32 %v3836, %v3838
        %v3840 = vrot.slane %v3833, %v3839
        %v3842 = vunpack.c.l.s4 1966171168
        %v3843 = vunpack.c.0.s8 %v3842
        %v3844 = vlaneseq
        %v3845 = vshrl.u32 %v3844, 7
        %v3846 = vsub.s32 %v3843, %v3845
        %v3847 = vrot.slane %v3840, %v3846
        %v3849 = vlaneseq
        %vm3850 = vcmp.ge.s32.totalorder %v3849, 0
        %vm3851 = vcmp.lt.s32.totalorder %v3849, 256
        %vm3852 = vmand %vm3850, %vm3851
        %3853 = vst.msk [vmem:[%s231] sm:$0x3] %vm3852, %v3847
        %s3854 = sand.u32 %s138, 1
        %s3855 = scalar_lea.sflag [#allocation4], %s3854
        %s3856 = sand.u32 %s138, 1
        %s3857 = smul.addr %s3856, 2
        %s3858 = scalar_lea.vmem [#allocation3], %s3857
        // Predicated region
        $region41: #{tpu_custom_call.1} parent=39 // pred_check
          %p3859 = pneg %p148
        $region42: #{tpu_custom_call.1} parent=39 // pred_check_branch
          %3861 = sbr.rel (%p3859) target = $region44
        $region43: #{tpu_custom_call.1} parent=39 // pred_region
          %s3862 = smul.u32 2, %s20
          %s3864 = ssub.s32 32, 32
          %3865 = vsyncadd %s3855, %s3864
          %s3866 = smul.addr %s3862, 16
          %s3867 = scalar_lea.hbm %s5, %s3866
          %s3869 = sshll.u32 %s3858, 4
          %s3870 = int_to_ptr.vmem [resolvable:$true] %s3869
          %3872 = dma.vmem_to_hbm [thread:$0]  %s3870, 32, %s3867, %s3855
        $region44: #{tpu_custom_call.1} parent=39 // pred_fallthru
          _
      $region40: #{tpu_custom_call.1} parent=5 // pred_fallthru
        _
      %p3873 = scmp.le.s32.totalorder 2, %s15
      // Predicated region
      $region45: #{tpu_custom_call.1} parent=5 // pred_check
        %p3874 = pneg %p3873
      $region46: #{tpu_custom_call.1} parent=5 // pred_check_branch
        %3876 = sbr.rel (%p3874) target = $region48
      $region47: #{tpu_custom_call.1} parent=5 // pred_region
        %s3877 = ssub.s32 %s15, 2
        // Predicated region
        $region49: #{tpu_custom_call.1} parent=47 // pred_check
          %p3878 = pneg %p154
        $region50: #{tpu_custom_call.1} parent=47 // pred_check_branch
          %3880 = sbr.rel (%p3878) target = $region52
        $region51: #{tpu_custom_call.1} parent=47 // pred_region
          %s3881 = sand.u32 %s139, 1
          %s3882 = scalar_lea.sflag [#allocation4], %s3881
          %s3883 = sand.u32 %s139, 1
          %s3884 = smul.addr %s3883, 2
          %s3885 = scalar_lea.vmem [#allocation3], %s3884
          %3886 = dma.done %s3882, 32
        $region52: #{tpu_custom_call.1} parent=47 // pred_fallthru
          _
      $region48: #{tpu_custom_call.1} parent=5 // pred_fallthru
        _
    $region6: #{tpu_custom_call.1} parent=1 // loop_footer
      %s19 = sadd.s32 1, %s15
    $region7: #{tpu_custom_call.1} parent=1 // loop_footer_branch
      %14 = sbr.rel target = $region3
    $region8: #{tpu_custom_call.1} parent=1 // loop_exit
      _
    %3887 = vsyncpa [#allocation4], 1
    %s3888 = scalar_lea.sflag [#allocation4], 1
    %3889 = vsyncpa %s3888, 1

</llo_original>
